<compile_context>
chip_gen: v5e
topology: v5e:2x2
jax: 0.10.0
libtpu: 0.0.40
codegen_flags: <defaults>
</compile_context>

<pallas_src>
import functools

import jax
import jax.numpy as jnp
from jax import lax
from jax.experimental import pallas as pl
from jax.experimental.pallas import tpu as pltpu

# ---- model constants (globals in the original file; chosen small here) ----
CATALIST_ATOMS = 10
SUP_ID = 5
FEATURE_EMBED = 16
INPUT_CHANNEL = 7          # inflow has 7 features (fc1 takes 7 + FEATURE_EMBED)

_SELU_ALPHA = 1.6732632423543772
_SELU_SCALE = 1.0507009873554805


def _selu(v):
    return _SELU_SCALE * jnp.where(v > 0, v, _SELU_ALPHA * (jnp.exp(v) - 1.0))


def _ocm_kernel(x_ref, cidx_ref, cmol_ref, temp_ref, sup_ref,
                wcat_ref, wsup_ref, wteff_ref, bgeff_ref,
                w1g_ref, b1_ref, w1x_ref,
                w2_ref, b2_ref, w3_ref, b3_ref,
                w4_ref, b4_ref, sign_ref,
                out_ref, *, time):
    f32 = jnp.float32
    bt = x_ref.shape[1]          # batch tile (lane axis)
    H = w2_ref.shape[0]          # hidden width (64)
    C = w4_ref.shape[0]          # output channels (7)

    def dot(a, b):
        return jnp.dot(a, b, preferred_element_type=f32)

    # ---- fused glue: catalyst / support one-hot gathers + temperature ----
    cidx = cidx_ref[...]                                          # [3, Bt] i32
    cmol = cmol_ref[...]                                          # [3, Bt] f32
    atom_iota = lax.broadcasted_iota(jnp.int32, (CATALIST_ATOMS, bt), 0)
    sT = jnp.zeros((CATALIST_ATOMS, bt), f32)
    for j in range(3):            # static, tiny unroll over catalyst slots
        hit = (cidx[j:j + 1, :] == atom_iota).astype(f32)         # [10, Bt]
        sT = sT + hit * cmol[j:j + 1, :]
    sup_iota = lax.broadcasted_iota(jnp.int32, (SUP_ID, bt), 0)
    sup_oh = (sup_ref[...] == sup_iota).astype(f32)               # [5, Bt]

    # globFC over [catEmb, tempEmb, supEmb] with the embedding tables already
    # folded into the weights in the wrapper.
    glob_embT = (dot(wcat_ref[...], sT) + dot(wsup_ref[...], sup_oh)
                 + wteff_ref[...] * temp_ref[...] + bgeff_ref[...])   # [E, Bt]

    # Loop-invariant fc1 contribution of globEmb, fused with b1.
    gb1 = dot(w1g_ref[...], glob_embT) + jnp.broadcast_to(b1_ref[...], (H, bt))

    # Hoist all loop-invariant loads and pre-broadcast biases/sign once.
    w1x = w1x_ref[...]
    w2 = w2_ref[...]
    w3 = w3_ref[...]
    w4 = w4_ref[...]
    b2 = jnp.broadcast_to(b2_ref[...], (H, bt))
    b3 = jnp.broadcast_to(b3_ref[...], (H, bt))
    b4 = jnp.broadcast_to(b4_ref[...], (C, bt))
    sign = jnp.broadcast_to(sign_ref[...], (C, bt))

    def body(_, xT):
        a1 = _selu(dot(w1x, xT) + gb1)        # fc1 + selu   [H, Bt]
        a2 = _selu(dot(w2, a1) + b2)          # fc2 + selu
        a3 = _selu(dot(w3, a2) + b3)          # fc3 + selu
        delta = dot(w4, a3) + b4              # fc4          [C, Bt]
        return xT + sign * jnp.abs(delta)

    # `time` is static -> fully unroll so the LLO scheduler sees the chain.
    out_ref[...] = lax.fori_loop(0, time, body, x_ref[...], unroll=True)


def init_params(key, embed_dim=FEATURE_EMBED):
    E = embed_dim
    ks = jax.random.split(key, 16)
    n = lambda k, s: (0.1 * jax.random.normal(k, s, dtype=jnp.float32))
    p = {
        "W_catAtom": n(ks[0], (CATALIST_ATOMS, E)),   # catalystAtomEmbedding.weight
        "W_sup":     n(ks[1], (SUP_ID, E)),           # supportEmbedding.weight
        "Wt":        n(ks[2], (1, E)),                # temperatureEmbedding  [in,out]
        "bt":        n(ks[3], (1, E)),
        "Wg":        n(ks[4], (3 * E, E)),            # globFC                [in,out]
        "bg":        n(ks[5], (1, E)),
        "W1":        n(ks[6], (7 + E, 64)),           # OCMmodule.fc1         [in,out]
        "b1":        n(ks[7], (1, 64)),
        "W2":        n(ks[8], (64, 64)),
        "b2":        n(ks[9], (1, 64)),
        "W3":        n(ks[10], (64, 64)),
        "b3":        n(ks[11], (1, 64)),
        "W4":        n(ks[12], (64, 7)),
        "b4":        n(ks[13], (1, 7)),
        "sign":      jnp.array([[0.0, -1.0, -1.0, 1.0, 1.0, 1.0, 1.0]],
                               dtype=jnp.float32),
    }
    return p


def _round_up(n, m):
    return ((n + m - 1) // m) * m


def _cdiv(a, b):
    return (a + b - 1) // b


def _batch_blocks_for_device():
    """2 blocks on v7x (2 TCs/chip), 1 block on single-TC chips (v5e/v6e)."""
    try:
        kind = jax.devices()[0].device_kind.lower()
    except Exception:
        return 1
    return 2 if ("v7" in kind or "7x" in kind) else 1


def ocm_forward(params, inflow, xCatalistAtom, xCatalistMol, xTEMP, xSupport,
                time, *, block_b=None):
    """Pallas-backed OCMmodel.forward (fully fused, batch-on-lanes layout)."""
    E = FEATURE_EMBED
    B = inflow.shape[0]

    # ---- parameter folding (batch-independent, tiny) ----
    Wg = params["Wg"]                                   # [3E, E]
    Wg_cat, Wg_tmp, Wg_sup = Wg[:E], Wg[E:2 * E], Wg[2 * E:]
    wcat_eff = (params["W_catAtom"] @ Wg_cat).T         # [E, 10]
    wsup_eff = (params["W_sup"] @ Wg_sup).T             # [E, 5]
    wt_eff = (params["Wt"] @ Wg_tmp).T                  # [E, 1]
    bg_eff = (params["bg"] + params["bt"] @ Wg_tmp).T   # [E, 1]

    W1 = params["W1"]
    w1xT = W1[:7].T                                     # [64, 7]
    w1gT = W1[7:].T                                     # [64, E]
    b1T = params["b1"].T                                # [64, 1]
    w2T, b2T = params["W2"].T, params["b2"].T
    w3T, b3T = params["W3"].T, params["b3"].T
    w4T, b4T = params["W4"].T, params["b4"].T           # [7, 64], [7, 1]
    signT = params["sign"].T                            # [7, 1]

    # ---- transposed (batch-on-lanes) activations ----
    xT = inflow.T.astype(jnp.float32)                   # [7, B]
    cidxT = xCatalistAtom.T.astype(jnp.int32)           # [3, B]
    cmolT = xCatalistMol.T.astype(jnp.float32)          # [3, B]
    tempT = xTEMP.T.astype(jnp.float32)                 # [1, B]
    supT = xSupport.reshape(1, -1).astype(jnp.int32)    # [1, B]

    # ---- per-generation batch tiling ----
    if block_b is None:
        nb = _batch_blocks_for_device()
        if nb > 1 and B > 128:
            bt = 128 * _cdiv(_cdiv(B, nb), 128)         # lane-aligned blocks
        else:
            bt = B                                      # whole batch, 1 grid step
    else:
        bt = min(int(block_b), B)
        if bt < B:
            bt = 128 * max(1, _cdiv(bt, 128))           # keep lane dim 128-aligned
    bt = max(bt, 1)

    B_pad = _round_up(B, bt)
    if B_pad != B:
        pads = ((0, 0), (0, B_pad - B))
        xT = jnp.pad(xT, pads)
        cidxT = jnp.pad(cidxT, pads)                    # index 0 is valid -> safe
        cmolT = jnp.pad(cmolT, pads)
        tempT = jnp.pad(tempT, pads)
        supT = jnp.pad(supT, pads)

    grid = (B_pad // bt,)

    def batch_spec(feat):
        return pl.BlockSpec((feat, bt), lambda i: (0, i))

    def const_spec(arr):
        # whole-array block, same block every grid step -> stays resident
        return pl.BlockSpec(arr.shape, lambda i: (0, 0))

    batch_ins = (xT, cidxT, cmolT, tempT, supT)
    const_ins = (wcat_eff, wsup_eff, wt_eff, bg_eff,
                 w1gT, b1T, w1xT, w2T, b2T, w3T, b3T, w4T, b4T, signT)

    in_specs = ([batch_spec(a.shape[0]) for a in batch_ins]
                + [const_spec(a) for a in const_ins])

    kernel = functools.partial(_ocm_kernel, time=int(time))
    outT = pl.pallas_call(
        kernel,
        out_shape=jax.ShapeDtypeStruct((7, B_pad), jnp.float32),
        grid=grid,
        in_specs=in_specs,
        out_specs=batch_spec(7),
        compiler_params=pltpu.CompilerParams(
            dimension_semantics=("parallel",)),
    )(*batch_ins, *const_ins)

    return outT[:, :B].T


def ocm_forward_ref(params, inflow, xCatalistAtom, xCatalistMol, xTEMP, xSupport, time):
    """Pure-JAX reference mirroring the PyTorch forward."""
    E = FEATURE_EMBED
    B = inflow.shape[0]
    cat_rows = params["W_catAtom"][xCatalistAtom.reshape(-1)]
    cat_emb = (cat_rows * xCatalistMol.reshape(-1, 1)).reshape(B, 3, E).sum(axis=1)
    temp_emb = xTEMP @ params["Wt"] + params["bt"]
    sup_emb = params["W_sup"][xSupport]
    glob = jnp.concatenate([cat_emb, temp_emb, sup_emb], axis=1)
    glob_emb = glob @ params["Wg"] + params["bg"]

    def selu(v):
        return _SELU_SCALE * jnp.where(v > 0, v, _SELU_ALPHA * (jnp.exp(v) - 1.0))

    x = inflow
    for _ in range(time):
        h = jnp.concatenate([x, glob_emb], axis=1)
        a1 = selu(h @ params["W1"] + params["b1"])
        a2 = selu(a1 @ params["W2"] + params["b2"])
        a3 = selu(a2 @ params["W3"] + params["b3"])
        delta = a3 @ params["W4"] + params["b4"]
        x = x + params["sign"] * jnp.abs(delta)
    return x


if __name__ == "__main__":
    key = jax.random.PRNGKey(0)
    kp, k1, k2, k3, k4, k5 = jax.random.split(key, 6)

    B = 256        # 2 full lane groups; 2 blocks of 128 on v7x, 1 block elsewhere
    TIME = 6

    params = init_params(kp)

    inflow = jax.random.uniform(k1, (B, 7), dtype=jnp.float32)
    xCatalistAtom = jax.random.randint(k2, (B, 3), 0, CATALIST_ATOMS, dtype=jnp.int32)
    xCatalistMol = jax.random.uniform(k3, (B, 3), dtype=jnp.float32)
    xTEMP = jax.random.uniform(k4, (B, 1), dtype=jnp.float32)
    xSupport = jax.random.randint(k5, (B,), 0, SUP_ID, dtype=jnp.int32)

    out = ocm_forward(params, inflow, xCatalistAtom, xCatalistMol, xTEMP,
                      xSupport, TIME)
    out = jax.block_until_ready(out)

    ref = ocm_forward_ref(params, inflow, xCatalistAtom, xCatalistMol, xTEMP,
                          xSupport, TIME)
    assert out.shape == (B, 7)
    assert jnp.allclose(out, ref, atol=1e-3, rtol=1e-3), "mismatch vs reference"

    print("KERNEL_OK")
</pallas_src>

<mosaic_0001>
module attributes {stable_mosaic.version = 11 : i64} {
  func.func @_ocm_kernel(%arg0: i32, %arg1: memref<7x256xf32, #tpu.memory_space<vmem>>, %arg2: memref<3x256xi32, #tpu.memory_space<vmem>>, %arg3: memref<3x256xf32, #tpu.memory_space<vmem>>, %arg4: memref<1x256xf32, #tpu.memory_space<vmem>>, %arg5: memref<1x256xi32, #tpu.memory_space<vmem>>, %arg6: memref<16x10xf32, #tpu.memory_space<vmem>>, %arg7: memref<16x5xf32, #tpu.memory_space<vmem>>, %arg8: memref<16x1xf32, #tpu.memory_space<vmem>>, %arg9: memref<16x1xf32, #tpu.memory_space<vmem>>, %arg10: memref<64x16xf32, #tpu.memory_space<vmem>>, %arg11: memref<64x1xf32, #tpu.memory_space<vmem>>, %arg12: memref<64x7xf32, #tpu.memory_space<vmem>>, %arg13: memref<64x64xf32, #tpu.memory_space<vmem>>, %arg14: memref<64x1xf32, #tpu.memory_space<vmem>>, %arg15: memref<64x64xf32, #tpu.memory_space<vmem>>, %arg16: memref<64x1xf32, #tpu.memory_space<vmem>>, %arg17: memref<7x64xf32, #tpu.memory_space<vmem>>, %arg18: memref<7x1xf32, #tpu.memory_space<vmem>>, %arg19: memref<7x1xf32, #tpu.memory_space<vmem>>, %arg20: memref<7x256xf32, #tpu.memory_space<vmem>>) attributes {dimension_semantics = [#tpu.dimension_semantics<parallel>], iteration_bounds = array<i64: 1>, scalar_prefetch = 0 : i64, scratch_operands = 0 : i64, tpu.core_type = #tpu.core_type<tc>, window_params = [{transform_indices = @transform_0, window_bounds = array<i64: 7, 256>}, {transform_indices = @transform_1, window_bounds = array<i64: 3, 256>}, {transform_indices = @transform_2, window_bounds = array<i64: 3, 256>}, {transform_indices = @transform_3, window_bounds = array<i64: 1, 256>}, {transform_indices = @transform_4, window_bounds = array<i64: 1, 256>}, {pipeline_mode = #tpu.pipeline_mode<synchronous>, transform_indices = @transform_5, window_bounds = array<i64: 16, 10>}, {pipeline_mode = #tpu.pipeline_mode<synchronous>, transform_indices = @transform_6, window_bounds = array<i64: 16, 5>}, {pipeline_mode = #tpu.pipeline_mode<synchronous>, transform_indices = @transform_7, window_bounds = array<i64: 16, 1>}, {pipeline_mode = #tpu.pipeline_mode<synchronous>, transform_indices = @transform_8, window_bounds = array<i64: 16, 1>}, {pipeline_mode = #tpu.pipeline_mode<synchronous>, transform_indices = @transform_9, window_bounds = array<i64: 64, 16>}, {pipeline_mode = #tpu.pipeline_mode<synchronous>, transform_indices = @transform_10, window_bounds = array<i64: 64, 1>}, {pipeline_mode = #tpu.pipeline_mode<synchronous>, transform_indices = @transform_11, window_bounds = array<i64: 64, 7>}, {pipeline_mode = #tpu.pipeline_mode<synchronous>, transform_indices = @transform_12, window_bounds = array<i64: 64, 64>}, {pipeline_mode = #tpu.pipeline_mode<synchronous>, transform_indices = @transform_13, window_bounds = array<i64: 64, 1>}, {pipeline_mode = #tpu.pipeline_mode<synchronous>, transform_indices = @transform_14, window_bounds = array<i64: 64, 64>}, {pipeline_mode = #tpu.pipeline_mode<synchronous>, transform_indices = @transform_15, window_bounds = array<i64: 64, 1>}, {pipeline_mode = #tpu.pipeline_mode<synchronous>, transform_indices = @transform_16, window_bounds = array<i64: 7, 64>}, {pipeline_mode = #tpu.pipeline_mode<synchronous>, transform_indices = @transform_17, window_bounds = array<i64: 7, 1>}, {pipeline_mode = #tpu.pipeline_mode<synchronous>, transform_indices = @transform_18, window_bounds = array<i64: 7, 1>}, {transform_indices = @transform_19, window_bounds = array<i64: 7, 256>}]} {
    %c0 = arith.constant 0 : index
    %c0_0 = arith.constant 0 : index
    %0 = vector.load %arg2[%c0, %c0_0] : memref<3x256xi32, #tpu.memory_space<vmem>>, vector<3x256xi32>
    %c0_1 = arith.constant 0 : index
    %c0_2 = arith.constant 0 : index
    %1 = vector.load %arg3[%c0_1, %c0_2] : memref<3x256xf32, #tpu.memory_space<vmem>>, vector<3x256xf32>
    %2 = tpu.iota {dimensions = array<i32: 0>} : vector<10x256xi32>
    %cst = arith.constant 0.000000e+00 : f32
    %3 = vector.broadcast %cst : f32 to vector<10x256xf32>
    %4 = vector.extract_strided_slice %0 {offsets = [0, 0], sizes = [1, 256], strides = [1, 1]} : vector<3x256xi32> to vector<1x256xi32>
    %5 = vector.broadcast %4 : vector<1x256xi32> to vector<10x256xi32>
    %6 = arith.cmpi eq, %5, %2 : vector<10x256xi32>
    %7 = arith.extui %6 : vector<10x256xi1> to vector<10x256xi32>
    %8 = arith.sitofp %7 : vector<10x256xi32> to vector<10x256xf32>
    %9 = vector.extract_strided_slice %1 {offsets = [0, 0], sizes = [1, 256], strides = [1, 1]} : vector<3x256xf32> to vector<1x256xf32>
    %10 = vector.broadcast %9 : vector<1x256xf32> to vector<10x256xf32>
    %11 = arith.mulf %8, %10 : vector<10x256xf32>
    %12 = arith.addf %3, %11 : vector<10x256xf32>
    %13 = vector.extract_strided_slice %0 {offsets = [1, 0], sizes = [1, 256], strides = [1, 1]} : vector<3x256xi32> to vector<1x256xi32>
    %14 = vector.broadcast %13 : vector<1x256xi32> to vector<10x256xi32>
    %15 = arith.cmpi eq, %14, %2 : vector<10x256xi32>
    %16 = arith.extui %15 : vector<10x256xi1> to vector<10x256xi32>
    %17 = arith.sitofp %16 : vector<10x256xi32> to vector<10x256xf32>
    %18 = vector.extract_strided_slice %1 {offsets = [1, 0], sizes = [1, 256], strides = [1, 1]} : vector<3x256xf32> to vector<1x256xf32>
    %19 = vector.broadcast %18 : vector<1x256xf32> to vector<10x256xf32>
    %20 = arith.mulf %17, %19 : vector<10x256xf32>
    %21 = arith.addf %12, %20 : vector<10x256xf32>
    %22 = vector.extract_strided_slice %0 {offsets = [2, 0], sizes = [1, 256], strides = [1, 1]} : vector<3x256xi32> to vector<1x256xi32>
    %23 = vector.broadcast %22 : vector<1x256xi32> to vector<10x256xi32>
    %24 = arith.cmpi eq, %23, %2 : vector<10x256xi32>
    %25 = arith.extui %24 : vector<10x256xi1> to vector<10x256xi32>
    %26 = arith.sitofp %25 : vector<10x256xi32> to vector<10x256xf32>
    %27 = vector.extract_strided_slice %1 {offsets = [2, 0], sizes = [1, 256], strides = [1, 1]} : vector<3x256xf32> to vector<1x256xf32>
    %28 = vector.broadcast %27 : vector<1x256xf32> to vector<10x256xf32>
    %29 = arith.mulf %26, %28 : vector<10x256xf32>
    %30 = arith.addf %21, %29 : vector<10x256xf32>
    %31 = tpu.iota {dimensions = array<i32: 0>} : vector<5x256xi32>
    %c0_3 = arith.constant 0 : index
    %c0_4 = arith.constant 0 : index
    %32 = vector.load %arg5[%c0_3, %c0_4] : memref<1x256xi32, #tpu.memory_space<vmem>>, vector<1x256xi32>
    %33 = vector.broadcast %32 : vector<1x256xi32> to vector<5x256xi32>
    %34 = arith.cmpi eq, %33, %31 : vector<5x256xi32>
    %35 = arith.extui %34 : vector<5x256xi1> to vector<5x256xi32>
    %36 = arith.sitofp %35 : vector<5x256xi32> to vector<5x256xf32>
    %c0_5 = arith.constant 0 : index
    %c0_6 = arith.constant 0 : index
    %37 = vector.load %arg6[%c0_5, %c0_6] : memref<16x10xf32, #tpu.memory_space<vmem>>, vector<16x10xf32>
    %cst_7 = arith.constant dense<0.000000e+00> : vector<16x256xf32>
    %38 = tpu.matmul %37, %30, %cst_7 {dimension_numbers = #tpu.dot_dimension_numbers<[1], [0], [0], [1], [0, 0, 1, 1], [], []>} : vector<16x10xf32>, vector<10x256xf32>, vector<16x256xf32> -> vector<16x256xf32>
    %c0_8 = arith.constant 0 : index
    %c0_9 = arith.constant 0 : index
    %39 = vector.load %arg7[%c0_8, %c0_9] : memref<16x5xf32, #tpu.memory_space<vmem>>, vector<16x5xf32>
    %cst_10 = arith.constant dense<0.000000e+00> : vector<16x256xf32>
    %40 = tpu.matmul %39, %36, %cst_10 {dimension_numbers = #tpu.dot_dimension_numbers<[1], [0], [0], [1], [0, 0, 1, 1], [], []>} : vector<16x5xf32>, vector<5x256xf32>, vector<16x256xf32> -> vector<16x256xf32>
    %41 = arith.addf %38, %40 : vector<16x256xf32>
    %c0_11 = arith.constant 0 : index
    %c0_12 = arith.constant 0 : index
    %42 = vector.load %arg8[%c0_11, %c0_12] : memref<16x1xf32, #tpu.memory_space<vmem>>, vector<16x1xf32>
    %c0_13 = arith.constant 0 : index
    %c0_14 = arith.constant 0 : index
    %43 = vector.load %arg4[%c0_13, %c0_14] : memref<1x256xf32, #tpu.memory_space<vmem>>, vector<1x256xf32>
    %44 = vector.broadcast %42 : vector<16x1xf32> to vector<16x256xf32>
    %45 = vector.broadcast %43 : vector<1x256xf32> to vector<16x256xf32>
    %46 = arith.mulf %44, %45 : vector<16x256xf32>
    %47 = arith.addf %41, %46 : vector<16x256xf32>
    %c0_15 = arith.constant 0 : index
    %c0_16 = arith.constant 0 : index
    %48 = vector.load %arg9[%c0_15, %c0_16] : memref<16x1xf32, #tpu.memory_space<vmem>>, vector<16x1xf32>
    %49 = vector.broadcast %48 : vector<16x1xf32> to vector<16x256xf32>
    %50 = arith.addf %47, %49 : vector<16x256xf32>
    %c0_17 = arith.constant 0 : index
    %c0_18 = arith.constant 0 : index
    %51 = vector.load %arg10[%c0_17, %c0_18] : memref<64x16xf32, #tpu.memory_space<vmem>>, vector<64x16xf32>
    %cst_19 = arith.constant dense<0.000000e+00> : vector<64x256xf32>
    %52 = tpu.matmul %51, %50, %cst_19 {dimension_numbers = #tpu.dot_dimension_numbers<[1], [0], [0], [1], [0, 0, 1, 1], [], []>} : vector<64x16xf32>, vector<16x256xf32>, vector<64x256xf32> -> vector<64x256xf32>
    %c0_20 = arith.constant 0 : index
    %c0_21 = arith.constant 0 : index
    %53 = vector.load %arg11[%c0_20, %c0_21] : memref<64x1xf32, #tpu.memory_space<vmem>>, vector<64x1xf32>
    %54 = vector.shape_cast %53 : vector<64x1xf32> to vector<64x1xf32>
    %55 = vector.broadcast %54 : vector<64x1xf32> to vector<64x256xf32>
    %56 = arith.addf %52, %55 : vector<64x256xf32>
    %c0_22 = arith.constant 0 : index
    %c0_23 = arith.constant 0 : index
    %57 = vector.load %arg12[%c0_22, %c0_23] : memref<64x7xf32, #tpu.memory_space<vmem>>, vector<64x7xf32>
    %c0_24 = arith.constant 0 : index
    %c0_25 = arith.constant 0 : index
    %58 = vector.load %arg13[%c0_24, %c0_25] : memref<64x64xf32, #tpu.memory_space<vmem>>, vector<64x64xf32>
    %c0_26 = arith.constant 0 : index
    %c0_27 = arith.constant 0 : index
    %59 = vector.load %arg15[%c0_26, %c0_27] : memref<64x64xf32, #tpu.memory_space<vmem>>, vector<64x64xf32>
    %c0_28 = arith.constant 0 : index
    %c0_29 = arith.constant 0 : index
    %60 = vector.load %arg17[%c0_28, %c0_29] : memref<7x64xf32, #tpu.memory_space<vmem>>, vector<7x64xf32>
    %c0_30 = arith.constant 0 : index
    %c0_31 = arith.constant 0 : index
    %61 = vector.load %arg14[%c0_30, %c0_31] : memref<64x1xf32, #tpu.memory_space<vmem>>, vector<64x1xf32>
    %62 = vector.shape_cast %61 : vector<64x1xf32> to vector<64x1xf32>
    %63 = vector.broadcast %62 : vector<64x1xf32> to vector<64x256xf32>
    %c0_32 = arith.constant 0 : index
    %c0_33 = arith.constant 0 : index
    %64 = vector.load %arg16[%c0_32, %c0_33] : memref<64x1xf32, #tpu.memory_space<vmem>>, vector<64x1xf32>
    %65 = vector.shape_cast %64 : vector<64x1xf32> to vector<64x1xf32>
    %66 = vector.broadcast %65 : vector<64x1xf32> to vector<64x256xf32>
    %c0_34 = arith.constant 0 : index
    %c0_35 = arith.constant 0 : index
    %67 = vector.load %arg18[%c0_34, %c0_35] : memref<7x1xf32, #tpu.memory_space<vmem>>, vector<7x1xf32>
    %68 = vector.shape_cast %67 : vector<7x1xf32> to vector<7x1xf32>
    %69 = vector.broadcast %68 : vector<7x1xf32> to vector<7x256xf32>
    %c0_36 = arith.constant 0 : index
    %c0_37 = arith.constant 0 : index
    %70 = vector.load %arg19[%c0_36, %c0_37] : memref<7x1xf32, #tpu.memory_space<vmem>>, vector<7x1xf32>
    %71 = vector.shape_cast %70 : vector<7x1xf32> to vector<7x1xf32>
    %72 = vector.broadcast %71 : vector<7x1xf32> to vector<7x256xf32>
    %c0_38 = arith.constant 0 : index
    %c0_39 = arith.constant 0 : index
    %73 = vector.load %arg1[%c0_38, %c0_39] : memref<7x256xf32, #tpu.memory_space<vmem>>, vector<7x256xf32>
    %c0_i32 = arith.constant 0 : i32
    %cst_40 = arith.constant dense<0.000000e+00> : vector<64x256xf32>
    %74 = tpu.matmul %57, %73, %cst_40 {dimension_numbers = #tpu.dot_dimension_numbers<[1], [0], [0], [1], [0, 0, 1, 1], [], []>} : vector<64x7xf32>, vector<7x256xf32>, vector<64x256xf32> -> vector<64x256xf32>
    %75 = arith.addf %74, %56 : vector<64x256xf32>
    %cst_41 = arith.constant 0.000000e+00 : f32
    %76 = vector.broadcast %cst_41 : f32 to vector<64x256xf32>
    %77 = arith.cmpf ogt, %75, %76 : vector<64x256xf32>
    %78 = math.exp %75 : vector<64x256xf32>
    %cst_42 = arith.constant 1.000000e+00 : f32
    %79 = vector.broadcast %cst_42 : f32 to vector<64x256xf32>
    %80 = arith.subf %78, %79 : vector<64x256xf32>
    %cst_43 = arith.constant 1.67326319 : f32
    %81 = vector.broadcast %cst_43 : f32 to vector<64x256xf32>
    %82 = arith.mulf %81, %80 : vector<64x256xf32>
    %83 = arith.select %77, %75, %82 : vector<64x256xi1>, vector<64x256xf32>
    %cst_44 = arith.constant 1.05070102 : f32
    %84 = vector.broadcast %cst_44 : f32 to vector<64x256xf32>
    %85 = arith.mulf %84, %83 : vector<64x256xf32>
    %cst_45 = arith.constant dense<0.000000e+00> : vector<64x256xf32>
    %86 = tpu.matmul %58, %85, %cst_45 {dimension_numbers = #tpu.dot_dimension_numbers<[1], [0], [0], [1], [0, 0, 1, 1], [], []>} : vector<64x64xf32>, vector<64x256xf32>, vector<64x256xf32> -> vector<64x256xf32>
    %87 = arith.addf %86, %63 : vector<64x256xf32>
    %cst_46 = arith.constant 0.000000e+00 : f32
    %88 = vector.broadcast %cst_46 : f32 to vector<64x256xf32>
    %89 = arith.cmpf ogt, %87, %88 : vector<64x256xf32>
    %90 = math.exp %87 : vector<64x256xf32>
    %cst_47 = arith.constant 1.000000e+00 : f32
    %91 = vector.broadcast %cst_47 : f32 to vector<64x256xf32>
    %92 = arith.subf %90, %91 : vector<64x256xf32>
    %cst_48 = arith.constant 1.67326319 : f32
    %93 = vector.broadcast %cst_48 : f32 to vector<64x256xf32>
    %94 = arith.mulf %93, %92 : vector<64x256xf32>
    %95 = arith.select %89, %87, %94 : vector<64x256xi1>, vector<64x256xf32>
    %cst_49 = arith.constant 1.05070102 : f32
    %96 = vector.broadcast %cst_49 : f32 to vector<64x256xf32>
    %97 = arith.mulf %96, %95 : vector<64x256xf32>
    %cst_50 = arith.constant dense<0.000000e+00> : vector<64x256xf32>
    %98 = tpu.matmul %59, %97, %cst_50 {dimension_numbers = #tpu.dot_dimension_numbers<[1], [0], [0], [1], [0, 0, 1, 1], [], []>} : vector<64x64xf32>, vector<64x256xf32>, vector<64x256xf32> -> vector<64x256xf32>
    %99 = arith.addf %98, %66 : vector<64x256xf32>
    %cst_51 = arith.constant 0.000000e+00 : f32
    %100 = vector.broadcast %cst_51 : f32 to vector<64x256xf32>
    %101 = arith.cmpf ogt, %99, %100 : vector<64x256xf32>
    %102 = math.exp %99 : vector<64x256xf32>
    %cst_52 = arith.constant 1.000000e+00 : f32
    %103 = vector.broadcast %cst_52 : f32 to vector<64x256xf32>
    %104 = arith.subf %102, %103 : vector<64x256xf32>
    %cst_53 = arith.constant 1.67326319 : f32
    %105 = vector.broadcast %cst_53 : f32 to vector<64x256xf32>
    %106 = arith.mulf %105, %104 : vector<64x256xf32>
    %107 = arith.select %101, %99, %106 : vector<64x256xi1>, vector<64x256xf32>
    %cst_54 = arith.constant 1.05070102 : f32
    %108 = vector.broadcast %cst_54 : f32 to vector<64x256xf32>
    %109 = arith.mulf %108, %107 : vector<64x256xf32>
    %cst_55 = arith.constant dense<0.000000e+00> : vector<7x256xf32>
    %110 = tpu.matmul %60, %109, %cst_55 {dimension_numbers = #tpu.dot_dimension_numbers<[1], [0], [0], [1], [0, 0, 1, 1], [], []>} : vector<7x64xf32>, vector<64x256xf32>, vector<7x256xf32> -> vector<7x256xf32>
    %111 = arith.addf %110, %69 : vector<7x256xf32>
    %112 = math.absf %111 : vector<7x256xf32>
    %113 = arith.mulf %72, %112 : vector<7x256xf32>
    %114 = arith.addf %73, %113 : vector<7x256xf32>
    %c1_i32 = arith.constant 1 : i32
    %cst_56 = arith.constant dense<0.000000e+00> : vector<64x256xf32>
    %115 = tpu.matmul %57, %114, %cst_56 {dimension_numbers = #tpu.dot_dimension_numbers<[1], [0], [0], [1], [0, 0, 1, 1], [], []>} : vector<64x7xf32>, vector<7x256xf32>, vector<64x256xf32> -> vector<64x256xf32>
    %116 = arith.addf %115, %56 : vector<64x256xf32>
    %cst_57 = arith.constant 0.000000e+00 : f32
    %117 = vector.broadcast %cst_57 : f32 to vector<64x256xf32>
    %118 = arith.cmpf ogt, %116, %117 : vector<64x256xf32>
    %119 = math.exp %116 : vector<64x256xf32>
    %cst_58 = arith.constant 1.000000e+00 : f32
    %120 = vector.broadcast %cst_58 : f32 to vector<64x256xf32>
    %121 = arith.subf %119, %120 : vector<64x256xf32>
    %cst_59 = arith.constant 1.67326319 : f32
    %122 = vector.broadcast %cst_59 : f32 to vector<64x256xf32>
    %123 = arith.mulf %122, %121 : vector<64x256xf32>
    %124 = arith.select %118, %116, %123 : vector<64x256xi1>, vector<64x256xf32>
    %cst_60 = arith.constant 1.05070102 : f32
    %125 = vector.broadcast %cst_60 : f32 to vector<64x256xf32>
    %126 = arith.mulf %125, %124 : vector<64x256xf32>
    %cst_61 = arith.constant dense<0.000000e+00> : vector<64x256xf32>
    %127 = tpu.matmul %58, %126, %cst_61 {dimension_numbers = #tpu.dot_dimension_numbers<[1], [0], [0], [1], [0, 0, 1, 1], [], []>} : vector<64x64xf32>, vector<64x256xf32>, vector<64x256xf32> -> vector<64x256xf32>
    %128 = arith.addf %127, %63 : vector<64x256xf32>
    %cst_62 = arith.constant 0.000000e+00 : f32
    %129 = vector.broadcast %cst_62 : f32 to vector<64x256xf32>
    %130 = arith.cmpf ogt, %128, %129 : vector<64x256xf32>
    %131 = math.exp %128 : vector<64x256xf32>
    %cst_63 = arith.constant 1.000000e+00 : f32
    %132 = vector.broadcast %cst_63 : f32 to vector<64x256xf32>
    %133 = arith.subf %131, %132 : vector<64x256xf32>
    %cst_64 = arith.constant 1.67326319 : f32
    %134 = vector.broadcast %cst_64 : f32 to vector<64x256xf32>
    %135 = arith.mulf %134, %133 : vector<64x256xf32>
    %136 = arith.select %130, %128, %135 : vector<64x256xi1>, vector<64x256xf32>
    %cst_65 = arith.constant 1.05070102 : f32
    %137 = vector.broadcast %cst_65 : f32 to vector<64x256xf32>
    %138 = arith.mulf %137, %136 : vector<64x256xf32>
    %cst_66 = arith.constant dense<0.000000e+00> : vector<64x256xf32>
    %139 = tpu.matmul %59, %138, %cst_66 {dimension_numbers = #tpu.dot_dimension_numbers<[1], [0], [0], [1], [0, 0, 1, 1], [], []>} : vector<64x64xf32>, vector<64x256xf32>, vector<64x256xf32> -> vector<64x256xf32>
    %140 = arith.addf %139, %66 : vector<64x256xf32>
    %cst_67 = arith.constant 0.000000e+00 : f32
    %141 = vector.broadcast %cst_67 : f32 to vector<64x256xf32>
    %142 = arith.cmpf ogt, %140, %141 : vector<64x256xf32>
    %143 = math.exp %140 : vector<64x256xf32>
    %cst_68 = arith.constant 1.000000e+00 : f32
    %144 = vector.broadcast %cst_68 : f32 to vector<64x256xf32>
    %145 = arith.subf %143, %144 : vector<64x256xf32>
    %cst_69 = arith.constant 1.67326319 : f32
    %146 = vector.broadcast %cst_69 : f32 to vector<64x256xf32>
    %147 = arith.mulf %146, %145 : vector<64x256xf32>
    %148 = arith.select %142, %140, %147 : vector<64x256xi1>, vector<64x256xf32>
    %cst_70 = arith.constant 1.05070102 : f32
    %149 = vector.broadcast %cst_70 : f32 to vector<64x256xf32>
    %150 = arith.mulf %149, %148 : vector<64x256xf32>
    %cst_71 = arith.constant dense<0.000000e+00> : vector<7x256xf32>
    %151 = tpu.matmul %60, %150, %cst_71 {dimension_numbers = #tpu.dot_dimension_numbers<[1], [0], [0], [1], [0, 0, 1, 1], [], []>} : vector<7x64xf32>, vector<64x256xf32>, vector<7x256xf32> -> vector<7x256xf32>
    %152 = arith.addf %151, %69 : vector<7x256xf32>
    %153 = math.absf %152 : vector<7x256xf32>
    %154 = arith.mulf %72, %153 : vector<7x256xf32>
    %155 = arith.addf %114, %154 : vector<7x256xf32>
    %c2_i32 = arith.constant 2 : i32
    %cst_72 = arith.constant dense<0.000000e+00> : vector<64x256xf32>
    %156 = tpu.matmul %57, %155, %cst_72 {dimension_numbers = #tpu.dot_dimension_numbers<[1], [0], [0], [1], [0, 0, 1, 1], [], []>} : vector<64x7xf32>, vector<7x256xf32>, vector<64x256xf32> -> vector<64x256xf32>
    %157 = arith.addf %156, %56 : vector<64x256xf32>
    %cst_73 = arith.constant 0.000000e+00 : f32
    %158 = vector.broadcast %cst_73 : f32 to vector<64x256xf32>
    %159 = arith.cmpf ogt, %157, %158 : vector<64x256xf32>
    %160 = math.exp %157 : vector<64x256xf32>
    %cst_74 = arith.constant 1.000000e+00 : f32
    %161 = vector.broadcast %cst_74 : f32 to vector<64x256xf32>
    %162 = arith.subf %160, %161 : vector<64x256xf32>
    %cst_75 = arith.constant 1.67326319 : f32
    %163 = vector.broadcast %cst_75 : f32 to vector<64x256xf32>
    %164 = arith.mulf %163, %162 : vector<64x256xf32>
    %165 = arith.select %159, %157, %164 : vector<64x256xi1>, vector<64x256xf32>
    %cst_76 = arith.constant 1.05070102 : f32
    %166 = vector.broadcast %cst_76 : f32 to vector<64x256xf32>
    %167 = arith.mulf %166, %165 : vector<64x256xf32>
    %cst_77 = arith.constant dense<0.000000e+00> : vector<64x256xf32>
    %168 = tpu.matmul %58, %167, %cst_77 {dimension_numbers = #tpu.dot_dimension_numbers<[1], [0], [0], [1], [0, 0, 1, 1], [], []>} : vector<64x64xf32>, vector<64x256xf32>, vector<64x256xf32> -> vector<64x256xf32>
    %169 = arith.addf %168, %63 : vector<64x256xf32>
    %cst_78 = arith.constant 0.000000e+00 : f32
    %170 = vector.broadcast %cst_78 : f32 to vector<64x256xf32>
    %171 = arith.cmpf ogt, %169, %170 : vector<64x256xf32>
    %172 = math.exp %169 : vector<64x256xf32>
    %cst_79 = arith.constant 1.000000e+00 : f32
    %173 = vector.broadcast %cst_79 : f32 to vector<64x256xf32>
    %174 = arith.subf %172, %173 : vector<64x256xf32>
    %cst_80 = arith.constant 1.67326319 : f32
    %175 = vector.broadcast %cst_80 : f32 to vector<64x256xf32>
    %176 = arith.mulf %175, %174 : vector<64x256xf32>
    %177 = arith.select %171, %169, %176 : vector<64x256xi1>, vector<64x256xf32>
    %cst_81 = arith.constant 1.05070102 : f32
    %178 = vector.broadcast %cst_81 : f32 to vector<64x256xf32>
    %179 = arith.mulf %178, %177 : vector<64x256xf32>
    %cst_82 = arith.constant dense<0.000000e+00> : vector<64x256xf32>
    %180 = tpu.matmul %59, %179, %cst_82 {dimension_numbers = #tpu.dot_dimension_numbers<[1], [0], [0], [1], [0, 0, 1, 1], [], []>} : vector<64x64xf32>, vector<64x256xf32>, vector<64x256xf32> -> vector<64x256xf32>
    %181 = arith.addf %180, %66 : vector<64x256xf32>
    %cst_83 = arith.constant 0.000000e+00 : f32
    %182 = vector.broadcast %cst_83 : f32 to vector<64x256xf32>
    %183 = arith.cmpf ogt, %181, %182 : vector<64x256xf32>
    %184 = math.exp %181 : vector<64x256xf32>
    %cst_84 = arith.constant 1.000000e+00 : f32
    %185 = vector.broadcast %cst_84 : f32 to vector<64x256xf32>
    %186 = arith.subf %184, %185 : vector<64x256xf32>
    %cst_85 = arith.constant 1.67326319 : f32
    %187 = vector.broadcast %cst_85 : f32 to vector<64x256xf32>
    %188 = arith.mulf %187, %186 : vector<64x256xf32>
    %189 = arith.select %183, %181, %188 : vector<64x256xi1>, vector<64x256xf32>
    %cst_86 = arith.constant 1.05070102 : f32
    %190 = vector.broadcast %cst_86 : f32 to vector<64x256xf32>
    %191 = arith.mulf %190, %189 : vector<64x256xf32>
    %cst_87 = arith.constant dense<0.000000e+00> : vector<7x256xf32>
    %192 = tpu.matmul %60, %191, %cst_87 {dimension_numbers = #tpu.dot_dimension_numbers<[1], [0], [0], [1], [0, 0, 1, 1], [], []>} : vector<7x64xf32>, vector<64x256xf32>, vector<7x256xf32> -> vector<7x256xf32>
    %193 = arith.addf %192, %69 : vector<7x256xf32>
    %194 = math.absf %193 : vector<7x256xf32>
    %195 = arith.mulf %72, %194 : vector<7x256xf32>
    %196 = arith.addf %155, %195 : vector<7x256xf32>
    %c3_i32 = arith.constant 3 : i32
    %cst_88 = arith.constant dense<0.000000e+00> : vector<64x256xf32>
    %197 = tpu.matmul %57, %196, %cst_88 {dimension_numbers = #tpu.dot_dimension_numbers<[1], [0], [0], [1], [0, 0, 1, 1], [], []>} : vector<64x7xf32>, vector<7x256xf32>, vector<64x256xf32> -> vector<64x256xf32>
    %198 = arith.addf %197, %56 : vector<64x256xf32>
    %cst_89 = arith.constant 0.000000e+00 : f32
    %199 = vector.broadcast %cst_89 : f32 to vector<64x256xf32>
    %200 = arith.cmpf ogt, %198, %199 : vector<64x256xf32>
    %201 = math.exp %198 : vector<64x256xf32>
    %cst_90 = arith.constant 1.000000e+00 : f32
    %202 = vector.broadcast %cst_90 : f32 to vector<64x256xf32>
    %203 = arith.subf %201, %202 : vector<64x256xf32>
    %cst_91 = arith.constant 1.67326319 : f32
    %204 = vector.broadcast %cst_91 : f32 to vector<64x256xf32>
    %205 = arith.mulf %204, %203 : vector<64x256xf32>
    %206 = arith.select %200, %198, %205 : vector<64x256xi1>, vector<64x256xf32>
    %cst_92 = arith.constant 1.05070102 : f32
    %207 = vector.broadcast %cst_92 : f32 to vector<64x256xf32>
    %208 = arith.mulf %207, %206 : vector<64x256xf32>
    %cst_93 = arith.constant dense<0.000000e+00> : vector<64x256xf32>
    %209 = tpu.matmul %58, %208, %cst_93 {dimension_numbers = #tpu.dot_dimension_numbers<[1], [0], [0], [1], [0, 0, 1, 1], [], []>} : vector<64x64xf32>, vector<64x256xf32>, vector<64x256xf32> -> vector<64x256xf32>
    %210 = arith.addf %209, %63 : vector<64x256xf32>
    %cst_94 = arith.constant 0.000000e+00 : f32
    %211 = vector.broadcast %cst_94 : f32 to vector<64x256xf32>
    %212 = arith.cmpf ogt, %210, %211 : vector<64x256xf32>
    %213 = math.exp %210 : vector<64x256xf32>
    %cst_95 = arith.constant 1.000000e+00 : f32
    %214 = vector.broadcast %cst_95 : f32 to vector<64x256xf32>
    %215 = arith.subf %213, %214 : vector<64x256xf32>
    %cst_96 = arith.constant 1.67326319 : f32
    %216 = vector.broadcast %cst_96 : f32 to vector<64x256xf32>
    %217 = arith.mulf %216, %215 : vector<64x256xf32>
    %218 = arith.select %212, %210, %217 : vector<64x256xi1>, vector<64x256xf32>
    %cst_97 = arith.constant 1.05070102 : f32
    %219 = vector.broadcast %cst_97 : f32 to vector<64x256xf32>
    %220 = arith.mulf %219, %218 : vector<64x256xf32>
    %cst_98 = arith.constant dense<0.000000e+00> : vector<64x256xf32>
    %221 = tpu.matmul %59, %220, %cst_98 {dimension_numbers = #tpu.dot_dimension_numbers<[1], [0], [0], [1], [0, 0, 1, 1], [], []>} : vector<64x64xf32>, vector<64x256xf32>, vector<64x256xf32> -> vector<64x256xf32>
    %222 = arith.addf %221, %66 : vector<64x256xf32>
    %cst_99 = arith.constant 0.000000e+00 : f32
    %223 = vector.broadcast %cst_99 : f32 to vector<64x256xf32>
    %224 = arith.cmpf ogt, %222, %223 : vector<64x256xf32>
    %225 = math.exp %222 : vector<64x256xf32>
    %cst_100 = arith.constant 1.000000e+00 : f32
    %226 = vector.broadcast %cst_100 : f32 to vector<64x256xf32>
    %227 = arith.subf %225, %226 : vector<64x256xf32>
    %cst_101 = arith.constant 1.67326319 : f32
    %228 = vector.broadcast %cst_101 : f32 to vector<64x256xf32>
    %229 = arith.mulf %228, %227 : vector<64x256xf32>
    %230 = arith.select %224, %222, %229 : vector<64x256xi1>, vector<64x256xf32>
    %cst_102 = arith.constant 1.05070102 : f32
    %231 = vector.broadcast %cst_102 : f32 to vector<64x256xf32>
    %232 = arith.mulf %231, %230 : vector<64x256xf32>
    %cst_103 = arith.constant dense<0.000000e+00> : vector<7x256xf32>
    %233 = tpu.matmul %60, %232, %cst_103 {dimension_numbers = #tpu.dot_dimension_numbers<[1], [0], [0], [1], [0, 0, 1, 1], [], []>} : vector<7x64xf32>, vector<64x256xf32>, vector<7x256xf32> -> vector<7x256xf32>
    %234 = arith.addf %233, %69 : vector<7x256xf32>
    %235 = math.absf %234 : vector<7x256xf32>
    %236 = arith.mulf %72, %235 : vector<7x256xf32>
    %237 = arith.addf %196, %236 : vector<7x256xf32>
    %c4_i32 = arith.constant 4 : i32
    %cst_104 = arith.constant dense<0.000000e+00> : vector<64x256xf32>
    %238 = tpu.matmul %57, %237, %cst_104 {dimension_numbers = #tpu.dot_dimension_numbers<[1], [0], [0], [1], [0, 0, 1, 1], [], []>} : vector<64x7xf32>, vector<7x256xf32>, vector<64x256xf32> -> vector<64x256xf32>
    %239 = arith.addf %238, %56 : vector<64x256xf32>
    %cst_105 = arith.constant 0.000000e+00 : f32
    %240 = vector.broadcast %cst_105 : f32 to vector<64x256xf32>
    %241 = arith.cmpf ogt, %239, %240 : vector<64x256xf32>
    %242 = math.exp %239 : vector<64x256xf32>
    %cst_106 = arith.constant 1.000000e+00 : f32
    %243 = vector.broadcast %cst_106 : f32 to vector<64x256xf32>
    %244 = arith.subf %242, %243 : vector<64x256xf32>
    %cst_107 = arith.constant 1.67326319 : f32
    %245 = vector.broadcast %cst_107 : f32 to vector<64x256xf32>
    %246 = arith.mulf %245, %244 : vector<64x256xf32>
    %247 = arith.select %241, %239, %246 : vector<64x256xi1>, vector<64x256xf32>
    %cst_108 = arith.constant 1.05070102 : f32
    %248 = vector.broadcast %cst_108 : f32 to vector<64x256xf32>
    %249 = arith.mulf %248, %247 : vector<64x256xf32>
    %cst_109 = arith.constant dense<0.000000e+00> : vector<64x256xf32>
    %250 = tpu.matmul %58, %249, %cst_109 {dimension_numbers = #tpu.dot_dimension_numbers<[1], [0], [0], [1], [0, 0, 1, 1], [], []>} : vector<64x64xf32>, vector<64x256xf32>, vector<64x256xf32> -> vector<64x256xf32>
    %251 = arith.addf %250, %63 : vector<64x256xf32>
    %cst_110 = arith.constant 0.000000e+00 : f32
    %252 = vector.broadcast %cst_110 : f32 to vector<64x256xf32>
    %253 = arith.cmpf ogt, %251, %252 : vector<64x256xf32>
    %254 = math.exp %251 : vector<64x256xf32>
    %cst_111 = arith.constant 1.000000e+00 : f32
    %255 = vector.broadcast %cst_111 : f32 to vector<64x256xf32>
    %256 = arith.subf %254, %255 : vector<64x256xf32>
    %cst_112 = arith.constant 1.67326319 : f32
    %257 = vector.broadcast %cst_112 : f32 to vector<64x256xf32>
    %258 = arith.mulf %257, %256 : vector<64x256xf32>
    %259 = arith.select %253, %251, %258 : vector<64x256xi1>, vector<64x256xf32>
    %cst_113 = arith.constant 1.05070102 : f32
    %260 = vector.broadcast %cst_113 : f32 to vector<64x256xf32>
    %261 = arith.mulf %260, %259 : vector<64x256xf32>
    %cst_114 = arith.constant dense<0.000000e+00> : vector<64x256xf32>
    %262 = tpu.matmul %59, %261, %cst_114 {dimension_numbers = #tpu.dot_dimension_numbers<[1], [0], [0], [1], [0, 0, 1, 1], [], []>} : vector<64x64xf32>, vector<64x256xf32>, vector<64x256xf32> -> vector<64x256xf32>
    %263 = arith.addf %262, %66 : vector<64x256xf32>
    %cst_115 = arith.constant 0.000000e+00 : f32
    %264 = vector.broadcast %cst_115 : f32 to vector<64x256xf32>
    %265 = arith.cmpf ogt, %263, %264 : vector<64x256xf32>
    %266 = math.exp %263 : vector<64x256xf32>
    %cst_116 = arith.constant 1.000000e+00 : f32
    %267 = vector.broadcast %cst_116 : f32 to vector<64x256xf32>
    %268 = arith.subf %266, %267 : vector<64x256xf32>
    %cst_117 = arith.constant 1.67326319 : f32
    %269 = vector.broadcast %cst_117 : f32 to vector<64x256xf32>
    %270 = arith.mulf %269, %268 : vector<64x256xf32>
    %271 = arith.select %265, %263, %270 : vector<64x256xi1>, vector<64x256xf32>
    %cst_118 = arith.constant 1.05070102 : f32
    %272 = vector.broadcast %cst_118 : f32 to vector<64x256xf32>
    %273 = arith.mulf %272, %271 : vector<64x256xf32>
    %cst_119 = arith.constant dense<0.000000e+00> : vector<7x256xf32>
    %274 = tpu.matmul %60, %273, %cst_119 {dimension_numbers = #tpu.dot_dimension_numbers<[1], [0], [0], [1], [0, 0, 1, 1], [], []>} : vector<7x64xf32>, vector<64x256xf32>, vector<7x256xf32> -> vector<7x256xf32>
    %275 = arith.addf %274, %69 : vector<7x256xf32>
    %276 = math.absf %275 : vector<7x256xf32>
    %277 = arith.mulf %72, %276 : vector<7x256xf32>
    %278 = arith.addf %237, %277 : vector<7x256xf32>
    %c5_i32 = arith.constant 5 : i32
    %cst_120 = arith.constant dense<0.000000e+00> : vector<64x256xf32>
    %279 = tpu.matmul %57, %278, %cst_120 {dimension_numbers = #tpu.dot_dimension_numbers<[1], [0], [0], [1], [0, 0, 1, 1], [], []>} : vector<64x7xf32>, vector<7x256xf32>, vector<64x256xf32> -> vector<64x256xf32>
    %280 = arith.addf %279, %56 : vector<64x256xf32>
    %cst_121 = arith.constant 0.000000e+00 : f32
    %281 = vector.broadcast %cst_121 : f32 to vector<64x256xf32>
    %282 = arith.cmpf ogt, %280, %281 : vector<64x256xf32>
    %283 = math.exp %280 : vector<64x256xf32>
    %cst_122 = arith.constant 1.000000e+00 : f32
    %284 = vector.broadcast %cst_122 : f32 to vector<64x256xf32>
    %285 = arith.subf %283, %284 : vector<64x256xf32>
    %cst_123 = arith.constant 1.67326319 : f32
    %286 = vector.broadcast %cst_123 : f32 to vector<64x256xf32>
    %287 = arith.mulf %286, %285 : vector<64x256xf32>
    %288 = arith.select %282, %280, %287 : vector<64x256xi1>, vector<64x256xf32>
    %cst_124 = arith.constant 1.05070102 : f32
    %289 = vector.broadcast %cst_124 : f32 to vector<64x256xf32>
    %290 = arith.mulf %289, %288 : vector<64x256xf32>
    %cst_125 = arith.constant dense<0.000000e+00> : vector<64x256xf32>
    %291 = tpu.matmul %58, %290, %cst_125 {dimension_numbers = #tpu.dot_dimension_numbers<[1], [0], [0], [1], [0, 0, 1, 1], [], []>} : vector<64x64xf32>, vector<64x256xf32>, vector<64x256xf32> -> vector<64x256xf32>
    %292 = arith.addf %291, %63 : vector<64x256xf32>
    %cst_126 = arith.constant 0.000000e+00 : f32
    %293 = vector.broadcast %cst_126 : f32 to vector<64x256xf32>
    %294 = arith.cmpf ogt, %292, %293 : vector<64x256xf32>
    %295 = math.exp %292 : vector<64x256xf32>
    %cst_127 = arith.constant 1.000000e+00 : f32
    %296 = vector.broadcast %cst_127 : f32 to vector<64x256xf32>
    %297 = arith.subf %295, %296 : vector<64x256xf32>
    %cst_128 = arith.constant 1.67326319 : f32
    %298 = vector.broadcast %cst_128 : f32 to vector<64x256xf32>
    %299 = arith.mulf %298, %297 : vector<64x256xf32>
    %300 = arith.select %294, %292, %299 : vector<64x256xi1>, vector<64x256xf32>
    %cst_129 = arith.constant 1.05070102 : f32
    %301 = vector.broadcast %cst_129 : f32 to vector<64x256xf32>
    %302 = arith.mulf %301, %300 : vector<64x256xf32>
    %cst_130 = arith.constant dense<0.000000e+00> : vector<64x256xf32>
    %303 = tpu.matmul %59, %302, %cst_130 {dimension_numbers = #tpu.dot_dimension_numbers<[1], [0], [0], [1], [0, 0, 1, 1], [], []>} : vector<64x64xf32>, vector<64x256xf32>, vector<64x256xf32> -> vector<64x256xf32>
    %304 = arith.addf %303, %66 : vector<64x256xf32>
    %cst_131 = arith.constant 0.000000e+00 : f32
    %305 = vector.broadcast %cst_131 : f32 to vector<64x256xf32>
    %306 = arith.cmpf ogt, %304, %305 : vector<64x256xf32>
    %307 = math.exp %304 : vector<64x256xf32>
    %cst_132 = arith.constant 1.000000e+00 : f32
    %308 = vector.broadcast %cst_132 : f32 to vector<64x256xf32>
    %309 = arith.subf %307, %308 : vector<64x256xf32>
    %cst_133 = arith.constant 1.67326319 : f32
    %310 = vector.broadcast %cst_133 : f32 to vector<64x256xf32>
    %311 = arith.mulf %310, %309 : vector<64x256xf32>
    %312 = arith.select %306, %304, %311 : vector<64x256xi1>, vector<64x256xf32>
    %cst_134 = arith.constant 1.05070102 : f32
    %313 = vector.broadcast %cst_134 : f32 to vector<64x256xf32>
    %314 = arith.mulf %313, %312 : vector<64x256xf32>
    %cst_135 = arith.constant dense<0.000000e+00> : vector<7x256xf32>
    %315 = tpu.matmul %60, %314, %cst_135 {dimension_numbers = #tpu.dot_dimension_numbers<[1], [0], [0], [1], [0, 0, 1, 1], [], []>} : vector<7x64xf32>, vector<64x256xf32>, vector<7x256xf32> -> vector<7x256xf32>
    %316 = arith.addf %315, %69 : vector<7x256xf32>
    %317 = math.absf %316 : vector<7x256xf32>
    %318 = arith.mulf %72, %317 : vector<7x256xf32>
    %319 = arith.addf %278, %318 : vector<7x256xf32>
    %c0_136 = arith.constant 0 : index
    %c0_137 = arith.constant 0 : index
    %320 = vector.load %arg20[%c0_136, %c0_137] : memref<7x256xf32, #tpu.memory_space<vmem>>, vector<7x256xf32>
    tpu.vector_store %arg20[%c0_136, %c0_137], %319 {strides = array<i32>} : memref<7x256xf32, #tpu.memory_space<vmem>>, vector<7x256xf32>,
    return
  }
  func.func @transform_0(%arg0: i32) -> (i32, i32) {
    %c0_i32 = arith.constant 0 : i32
    %c0_i32_0 = arith.constant 0 : i32
    return %c0_i32, %arg0 : i32, i32
  }
  func.func @transform_1(%arg0: i32) -> (i32, i32) {
    %c0_i32 = arith.constant 0 : i32
    %c0_i32_0 = arith.constant 0 : i32
    return %c0_i32, %arg0 : i32, i32
  }
  func.func @transform_2(%arg0: i32) -> (i32, i32) {
    %c0_i32 = arith.constant 0 : i32
    %c0_i32_0 = arith.constant 0 : i32
    return %c0_i32, %arg0 : i32, i32
  }
  func.func @transform_3(%arg0: i32) -> (i32, i32) {
    %c0_i32 = arith.constant 0 : i32
    %c0_i32_0 = arith.constant 0 : i32
    return %c0_i32, %arg0 : i32, i32
  }
  func.func @transform_4(%arg0: i32) -> (i32, i32) {
    %c0_i32 = arith.constant 0 : i32
    %c0_i32_0 = arith.constant 0 : i32
    return %c0_i32, %arg0 : i32, i32
  }
  func.func @transform_5(%arg0: i32) -> (i32, i32) {
    %c0_i32 = arith.constant 0 : i32
    %c0_i32_0 = arith.constant 0 : i32
    %c0_i32_1 = arith.constant 0 : i32
    return %c0_i32, %c0_i32_0 : i32, i32
  }
  func.func @transform_6(%arg0: i32) -> (i32, i32) {
    %c0_i32 = arith.constant 0 : i32
    %c0_i32_0 = arith.constant 0 : i32
    %c0_i32_1 = arith.constant 0 : i32
    return %c0_i32, %c0_i32_0 : i32, i32
  }
  func.func @transform_7(%arg0: i32) -> (i32, i32) {
    %c0_i32 = arith.constant 0 : i32
    %c0_i32_0 = arith.constant 0 : i32
    %c0_i32_1 = arith.constant 0 : i32
    return %c0_i32, %c0_i32_0 : i32, i32
  }
  func.func @transform_8(%arg0: i32) -> (i32, i32) {
    %c0_i32 = arith.constant 0 : i32
    %c0_i32_0 = arith.constant 0 : i32
    %c0_i32_1 = arith.constant 0 : i32
    return %c0_i32, %c0_i32_0 : i32, i32
  }
  func.func @transform_9(%arg0: i32) -> (i32, i32) {
    %c0_i32 = arith.constant 0 : i32
    %c0_i32_0 = arith.constant 0 : i32
    %c0_i32_1 = arith.constant 0 : i32
    return %c0_i32, %c0_i32_0 : i32, i32
  }
  func.func @transform_10(%arg0: i32) -> (i32, i32) {
    %c0_i32 = arith.constant 0 : i32
    %c0_i32_0 = arith.constant 0 : i32
    %c0_i32_1 = arith.constant 0 : i32
    return %c0_i32, %c0_i32_0 : i32, i32
  }
  func.func @transform_11(%arg0: i32) -> (i32, i32) {
    %c0_i32 = arith.constant 0 : i32
    %c0_i32_0 = arith.constant 0 : i32
    %c0_i32_1 = arith.constant 0 : i32
    return %c0_i32, %c0_i32_0 : i32, i32
  }
  func.func @transform_12(%arg0: i32) -> (i32, i32) {
    %c0_i32 = arith.constant 0 : i32
    %c0_i32_0 = arith.constant 0 : i32
    %c0_i32_1 = arith.constant 0 : i32
    return %c0_i32, %c0_i32_0 : i32, i32
  }
  func.func @transform_13(%arg0: i32) -> (i32, i32) {
    %c0_i32 = arith.constant 0 : i32
    %c0_i32_0 = arith.constant 0 : i32
    %c0_i32_1 = arith.constant 0 : i32
    return %c0_i32, %c0_i32_0 : i32, i32
  }
  func.func @transform_14(%arg0: i32) -> (i32, i32) {
    %c0_i32 = arith.constant 0 : i32
    %c0_i32_0 = arith.constant 0 : i32
    %c0_i32_1 = arith.constant 0 : i32
    return %c0_i32, %c0_i32_0 : i32, i32
  }
  func.func @transform_15(%arg0: i32) -> (i32, i32) {
    %c0_i32 = arith.constant 0 : i32
    %c0_i32_0 = arith.constant 0 : i32
    %c0_i32_1 = arith.constant 0 : i32
    return %c0_i32, %c0_i32_0 : i32, i32
  }
  func.func @transform_16(%arg0: i32) -> (i32, i32) {
    %c0_i32 = arith.constant 0 : i32
    %c0_i32_0 = arith.constant 0 : i32
    %c0_i32_1 = arith.constant 0 : i32
    return %c0_i32, %c0_i32_0 : i32, i32
  }
  func.func @transform_17(%arg0: i32) -> (i32, i32) {
    %c0_i32 = arith.constant 0 : i32
    %c0_i32_0 = arith.constant 0 : i32
    %c0_i32_1 = arith.constant 0 : i32
    return %c0_i32, %c0_i32_0 : i32, i32
  }
  func.func @transform_18(%arg0: i32) -> (i32, i32) {
    %c0_i32 = arith.constant 0 : i32
    %c0_i32_0 = arith.constant 0 : i32
    %c0_i32_1 = arith.constant 0 : i32
    return %c0_i32, %c0_i32_0 : i32, i32
  }
  func.func @transform_19(%arg0: i32) -> (i32, i32) {
    %c0_i32 = arith.constant 0 : i32
    %c0_i32_0 = arith.constant 0 : i32
    return %c0_i32, %arg0 : i32, i32
  }
}

</mosaic_0001>

<llo_original>
// kernel: tpu_custom_call.1
$region0: #{tpu_custom_call.1}
  #allocation0 [shape = 'u32[]', space=smem, size = 0x4, offset = 0x4, fixed_abs, tag = 'smem constant byte address 0x4 - core index']
  #allocation1 [shape = 'u32[72,128]{1,0:T(1,128)}', space=vmem, size = 0x9000, scoped, tag = 'internal scratch']
  %s0 = inlined_call_operand.vmem [shape: f32[7,256], index: 0, kind: input, shape index: {}]
  %s1 = inlined_call_operand.vmem [shape: s32[3,256], index: 1, kind: input, shape index: {}]
  %s2 = inlined_call_operand.vmem [shape: f32[3,256], index: 2, kind: input, shape index: {}]
  %s3 = inlined_call_operand.vmem [shape: f32[1,256], index: 3, kind: input, shape index: {}]
  %s4 = inlined_call_operand.vmem [shape: s32[1,256], index: 4, kind: input, shape index: {}]
  %s5 = inlined_call_operand.vmem [shape: f32[16,10], index: 5, kind: input, shape index: {}]
  %s6 = inlined_call_operand.vmem [shape: f32[16,5], index: 6, kind: input, shape index: {}]
  %s7 = inlined_call_operand.vmem [shape: f32[16,1], index: 7, kind: input, shape index: {}]
  %s8 = inlined_call_operand.vmem [shape: f32[16,1], index: 8, kind: input, shape index: {}]
  %s9 = inlined_call_operand.vmem [shape: f32[64,16], index: 9, kind: input, shape index: {}]
  %s10 = inlined_call_operand.vmem [shape: f32[64,1], index: 10, kind: input, shape index: {}]
  %s11 = inlined_call_operand.vmem [shape: f32[64,7], index: 11, kind: input, shape index: {}]
  %s12 = inlined_call_operand.vmem [shape: f32[64,64], index: 12, kind: input, shape index: {}]
  %s13 = inlined_call_operand.vmem [shape: f32[64,1], index: 13, kind: input, shape index: {}]
  %s14 = inlined_call_operand.vmem [shape: f32[64,64], index: 14, kind: input, shape index: {}]
  %s15 = inlined_call_operand.vmem [shape: f32[64,1], index: 15, kind: input, shape index: {}]
  %s16 = inlined_call_operand.vmem [shape: f32[7,64], index: 16, kind: input, shape index: {}]
  %s17 = inlined_call_operand.vmem [shape: f32[7,1], index: 17, kind: input, shape index: {}]
  %s18 = inlined_call_operand.vmem [shape: f32[7,1], index: 18, kind: input, shape index: {}]
  %s19 = inlined_call_operand.hbm [shape: f32[7,256], index: 19, kind: output, shape index: {}]
  %s20 = sld [smem:[#allocation0]]
  $region86: #{tpu_custom_call.1} parent=0
    _
  %s22 = ssub.s32 1, %s20
  %s23 = scalar_select 0, %s22, %s20
  $region1: #{tpu_custom_call.1} parent=0
    #allocation2 [shape = 'u8[8192]{0}', space=vmem, size = 0x2000, scoped, tag = 'output window, operand 0, single buffered']
    #allocation3 [shape = 's32[1]{0}', space=sflag, size = 0x4, scoped, tag = 'scoped memory for tpu_custom_call.1']
    %24 = vsyncpa [#allocation3], 0
    // Predicated region
    $region2: #{tpu_custom_call.1} parent=1 // pred_check
      _
    $region3: #{tpu_custom_call.1} parent=1 // pred_check_branch
      %26 = sbr.rel (0) target = $region5
    $region4: #{tpu_custom_call.1} parent=1 // pred_region
      _
    $region5: #{tpu_custom_call.1} parent=1 // pred_fallthru
      _
    // Predicated region
    $region6: #{tpu_custom_call.1} parent=1 // pred_check
      _
    $region7: #{tpu_custom_call.1} parent=1 // pred_check_branch
      %28 = sbr.rel (0) target = $region9
    $region8: #{tpu_custom_call.1} parent=1 // pred_region
      _
    $region9: #{tpu_custom_call.1} parent=1 // pred_fallthru
      _
    // Predicated region
    $region10: #{tpu_custom_call.1} parent=1 // pred_check
      _
    $region11: #{tpu_custom_call.1} parent=1 // pred_check_branch
      %30 = sbr.rel (0) target = $region13
    $region12: #{tpu_custom_call.1} parent=1 // pred_region
      _
    $region13: #{tpu_custom_call.1} parent=1 // pred_fallthru
      _
    // Predicated region
    $region14: #{tpu_custom_call.1} parent=1 // pred_check
      _
    $region15: #{tpu_custom_call.1} parent=1 // pred_check_branch
      %32 = sbr.rel (0) target = $region17
    $region16: #{tpu_custom_call.1} parent=1 // pred_region
      _
    $region17: #{tpu_custom_call.1} parent=1 // pred_fallthru
      _
    // Predicated region
    $region18: #{tpu_custom_call.1} parent=1 // pred_check
      _
    $region19: #{tpu_custom_call.1} parent=1 // pred_check_branch
      %34 = sbr.rel (0) target = $region21
    $region20: #{tpu_custom_call.1} parent=1 // pred_region
      _
    $region21: #{tpu_custom_call.1} parent=1 // pred_fallthru
      _
    // Predicated region
    $region22: #{tpu_custom_call.1} parent=1 // pred_check
      _
    $region23: #{tpu_custom_call.1} parent=1 // pred_check_branch
      %36 = sbr.rel (0) target = $region25
    $region24: #{tpu_custom_call.1} parent=1 // pred_region
      _
    $region25: #{tpu_custom_call.1} parent=1 // pred_fallthru
      _
    // Predicated region
    $region26: #{tpu_custom_call.1} parent=1 // pred_check
      _
    $region27: #{tpu_custom_call.1} parent=1 // pred_check_branch
      %38 = sbr.rel (0) target = $region29
    $region28: #{tpu_custom_call.1} parent=1 // pred_region
      _
    $region29: #{tpu_custom_call.1} parent=1 // pred_fallthru
      _
    // Predicated region
    $region30: #{tpu_custom_call.1} parent=1 // pred_check
      _
    $region31: #{tpu_custom_call.1} parent=1 // pred_check_branch
      %40 = sbr.rel (0) target = $region33
    $region32: #{tpu_custom_call.1} parent=1 // pred_region
      _
    $region33: #{tpu_custom_call.1} parent=1 // pred_fallthru
      _
    // Predicated region
    $region34: #{tpu_custom_call.1} parent=1 // pred_check
      _
    $region35: #{tpu_custom_call.1} parent=1 // pred_check_branch
      %42 = sbr.rel (0) target = $region37
    $region36: #{tpu_custom_call.1} parent=1 // pred_region
      _
    $region37: #{tpu_custom_call.1} parent=1 // pred_fallthru
      _
    // Predicated region
    $region38: #{tpu_custom_call.1} parent=1 // pred_check
      _
    $region39: #{tpu_custom_call.1} parent=1 // pred_check_branch
      %44 = sbr.rel (0) target = $region41
    $region40: #{tpu_custom_call.1} parent=1 // pred_region
      _
    $region41: #{tpu_custom_call.1} parent=1 // pred_fallthru
      _
    // Predicated region
    $region42: #{tpu_custom_call.1} parent=1 // pred_check
      _
    $region43: #{tpu_custom_call.1} parent=1 // pred_check_branch
      %46 = sbr.rel (0) target = $region45
    $region44: #{tpu_custom_call.1} parent=1 // pred_region
      _
    $region45: #{tpu_custom_call.1} parent=1 // pred_fallthru
      _
    // Predicated region
    $region46: #{tpu_custom_call.1} parent=1 // pred_check
      _
    $region47: #{tpu_custom_call.1} parent=1 // pred_check_branch
      %48 = sbr.rel (0) target = $region49
    $region48: #{tpu_custom_call.1} parent=1 // pred_region
      _
    $region49: #{tpu_custom_call.1} parent=1 // pred_fallthru
      _
    // Predicated region
    $region50: #{tpu_custom_call.1} parent=1 // pred_check
      _
    $region51: #{tpu_custom_call.1} parent=1 // pred_check_branch
      %50 = sbr.rel (0) target = $region53
    $region52: #{tpu_custom_call.1} parent=1 // pred_region
      _
    $region53: #{tpu_custom_call.1} parent=1 // pred_fallthru
      _
    // Predicated region
    $region54: #{tpu_custom_call.1} parent=1 // pred_check
      _
    $region55: #{tpu_custom_call.1} parent=1 // pred_check_branch
      %52 = sbr.rel (0) target = $region57
    $region56: #{tpu_custom_call.1} parent=1 // pred_region
      _
    $region57: #{tpu_custom_call.1} parent=1 // pred_fallthru
      _
    // Predicated region
    $region58: #{tpu_custom_call.1} parent=1 // pred_check
      _
    $region59: #{tpu_custom_call.1} parent=1 // pred_check_branch
      %54 = sbr.rel (0) target = $region61
    $region60: #{tpu_custom_call.1} parent=1 // pred_region
      _
    $region61: #{tpu_custom_call.1} parent=1 // pred_fallthru
      _
    // Predicated region
    $region62: #{tpu_custom_call.1} parent=1 // pred_check
      _
    $region63: #{tpu_custom_call.1} parent=1 // pred_check_branch
      %56 = sbr.rel (0) target = $region65
    $region64: #{tpu_custom_call.1} parent=1 // pred_region
      _
    $region65: #{tpu_custom_call.1} parent=1 // pred_fallthru
      _
    // Predicated region
    $region66: #{tpu_custom_call.1} parent=1 // pred_check
      _
    $region67: #{tpu_custom_call.1} parent=1 // pred_check_branch
      %58 = sbr.rel (0) target = $region69
    $region68: #{tpu_custom_call.1} parent=1 // pred_region
      _
    $region69: #{tpu_custom_call.1} parent=1 // pred_fallthru
      _
    // Predicated region
    $region70: #{tpu_custom_call.1} parent=1 // pred_check
      _
    $region71: #{tpu_custom_call.1} parent=1 // pred_check_branch
      %60 = sbr.rel (0) target = $region73
    $region72: #{tpu_custom_call.1} parent=1 // pred_region
      _
    $region73: #{tpu_custom_call.1} parent=1 // pred_fallthru
      _
    // Predicated region
    $region74: #{tpu_custom_call.1} parent=1 // pred_check
      _
    $region75: #{tpu_custom_call.1} parent=1 // pred_check_branch
      %62 = sbr.rel (0) target = $region77
    $region76: #{tpu_custom_call.1} parent=1 // pred_region
      _
    $region77: #{tpu_custom_call.1} parent=1 // pred_fallthru
      _
    %v63 = vld [vmem:[%s1] sm:$0x77]
    %v64 = vld [vmem:[%s2] sm:$0x77]
    %v65 = vlaneseq
    %v66 = vshrl.u32 %v65, 7
    %v67 = vadd.s32 %v66, 8
    %v68 = vperm.slane %v63, 0
    %v69 = vperm.slane %v63, 4
    %v70 = vperm.slane %v68, 0
    %v71 = vperm.slane %v69, 0
    %vm72 = vcmp.eq.s32.totalorder %v70, %v66
    %vm73 = vcmp.eq.s32.totalorder %v71, %v66
    %vm74 = vcmp.eq.s32.totalorder %v70, %v67
    %vm75 = vcmp.eq.s32.totalorder %v71, %v67
    %v76 = vsel %vm72, 1, 0
    %v77 = vsel %vm73, 1, 0
    %v78 = vsel %vm74, 1, 0
    %v79 = vsel %vm75, 1, 0
    %v80 = vcvt.s32.f32 %v76
    %v81 = vcvt.s32.f32 %v77
    %v82 = vcvt.s32.f32 %v78
    %v83 = vcvt.s32.f32 %v79
    %v85 = vperm.slane %v64, 0
    %v86 = vperm.slane %v64, 4
    %v89 = vperm.slane %v85, 0
    %v90 = vperm.slane %v86, 0
    %v91 = vmul.f32 %v80, %v89
    %v92 = vmul.f32 %v81, %v90
    %v93 = vmul.f32 %v82, %v89
    %v94 = vmul.f32 %v83, %v90
    %v95 = vadd.f32 %v91, 0.0
    %v96 = vadd.f32 %v92, 0.0
    %v97 = vadd.f32 %v93, 0.0
    %v98 = vadd.f32 %v94, 0.0
    %v99 = vperm.slane %v63, 1
    %v100 = vperm.slane %v63, 5
    %v101 = vperm.slane %v99, 1
    %v102 = vperm.slane %v100, 1
    %vm103 = vcmp.eq.s32.totalorder %v101, %v66
    %vm104 = vcmp.eq.s32.totalorder %v102, %v66
    %vm105 = vcmp.eq.s32.totalorder %v101, %v67
    %vm106 = vcmp.eq.s32.totalorder %v102, %v67
    %v107 = vsel %vm103, 1, 0
    %v108 = vsel %vm104, 1, 0
    %v109 = vsel %vm105, 1, 0
    %v110 = vsel %vm106, 1, 0
    %v111 = vcvt.s32.f32 %v107
    %v112 = vcvt.s32.f32 %v108
    %v113 = vcvt.s32.f32 %v109
    %v114 = vcvt.s32.f32 %v110
    %v115 = vperm.slane %v64, 1
    %v116 = vperm.slane %v64, 5
    %v119 = vperm.slane %v115, 1
    %v120 = vperm.slane %v116, 1
    %v121 = vmul.f32 %v111, %v119
    %v122 = vmul.f32 %v112, %v120
    %v123 = vmul.f32 %v113, %v119
    %v124 = vmul.f32 %v114, %v120
    %v125 = vadd.f32 %v95, %v121
    %v126 = vadd.f32 %v96, %v122
    %v127 = vadd.f32 %v97, %v123
    %v128 = vadd.f32 %v98, %v124
    %v129 = vperm.slane %v63, 2
    %v130 = vperm.slane %v63, 6
    %v131 = vperm.slane %v129, 2
    %v132 = vperm.slane %v130, 2
    %vm133 = vcmp.eq.s32.totalorder %v131, %v66
    %vm134 = vcmp.eq.s32.totalorder %v132, %v66
    %vm135 = vcmp.eq.s32.totalorder %v131, %v67
    %vm136 = vcmp.eq.s32.totalorder %v132, %v67
    %v137 = vsel %vm133, 1, 0
    %v138 = vsel %vm134, 1, 0
    %v139 = vsel %vm135, 1, 0
    %v140 = vsel %vm136, 1, 0
    %v141 = vcvt.s32.f32 %v137
    %v142 = vcvt.s32.f32 %v138
    %v143 = vcvt.s32.f32 %v139
    %v144 = vcvt.s32.f32 %v140
    %v145 = vperm.slane %v64, 2
    %v146 = vperm.slane %v64, 6
    %v149 = vperm.slane %v145, 2
    %v150 = vperm.slane %v146, 2
    %v151 = vmul.f32 %v141, %v149
    %v152 = vmul.f32 %v142, %v150
    %v153 = vmul.f32 %v143, %v149
    %v154 = vmul.f32 %v144, %v150
    %v155 = vadd.f32 %v125, %v151
    %v156 = vadd.f32 %v126, %v152
    %v157 = vadd.f32 %v127, %v153
    %v158 = vadd.f32 %v128, %v154
    %v159 = vld [vmem:[%s4] sm:$0x3]
    %v160 = vperm.slane %v159, 0
    %v161 = vperm.slane %v159, 1
    %vm162 = vcmp.eq.s32.totalorder %v160, %v66
    %vm163 = vcmp.eq.s32.totalorder %v161, %v66
    %v164 = vsel %vm162, 1, 0
    %v165 = vsel %vm163, 1, 0
    %v166 = vcvt.s32.f32 %v164
    %v167 = vcvt.s32.f32 %v165
    %v168 = vld [vmem:[%s5] sm:$0xff]
    %v169 = vld [vmem:[%s5 + $0x8] sm:$0xff]
    %v170 = vld [vmem:[%s6] sm:$0xff]
    %v171 = vld [vmem:[%s6 + $0x8] sm:$0xff]
    %vm172 = vcmask 39936
    %v174 = vsel %vm172, %v170, 0
    %v177 = vsel %vm172, %v171, 0
    %vm179 = vcmask 1044480
    %v181 = vsel %vm179, %v166, 0
    %v184 = vsel %vm179, %v167, 0
    %186 = vmatpush.msra.mxu0 0.0
    %187 = vmatpush.msra.mxu0 0.0
    %188 = vmatpush.msra.mxu0 0.0
    %189 = vmatpush.msra.mxu0 0.0
    %190 = vmatpush.msra.mxu0 0.0
    %191 = vmatpush.msra.mxu0 0.0
    %192 = vmatpush.msra.mxu0 0.0
    %193 = vmatpush.msra.mxu0 0.0
    %194 = vmatpush.msra.mxu0 0.0
    %195 = vmatpush.msra.mxu0 0.0
    %196 = vmatpush.msra.mxu0 0.0
    %197 = vmatpush.msra.mxu0 0.0
    %198 = vmatpush.msra.mxu0 0.0
    %199 = vmatpush.msra.mxu0 0.0
    %200 = vmatpush.msra.mxu0 0.0
    %201 = vmatpush.msra.mxu0 %v181
    %202 = vmatmul.f32.gmra.mxu0 %v174
    %v203 = vpop.f32.mrf.mxu0
    %v204 = vadd.f32 0.0, %v203
    %205 = vmatmul.f32.gmra.mxu0 %v177
    %v206 = vpop.f32.mrf.mxu0
    %v207 = vadd.f32 0.0, %v206
    %208 = vdwg.mxu0
    %209 = vmatpush.msra.mxu0 0.0
    %210 = vmatpush.msra.mxu0 0.0
    %211 = vmatpush.msra.mxu0 0.0
    %212 = vmatpush.msra.mxu0 0.0
    %213 = vmatpush.msra.mxu0 0.0
    %214 = vmatpush.msra.mxu0 0.0
    %215 = vmatpush.msra.mxu0 0.0
    %216 = vmatpush.msra.mxu0 0.0
    %217 = vmatpush.msra.mxu0 0.0
    %218 = vmatpush.msra.mxu0 0.0
    %219 = vmatpush.msra.mxu0 0.0
    %220 = vmatpush.msra.mxu0 0.0
    %221 = vmatpush.msra.mxu0 0.0
    %222 = vmatpush.msra.mxu0 0.0
    %223 = vmatpush.msra.mxu0 0.0
    %224 = vmatpush.msra.mxu0 %v184
    %225 = vmatmul.f32.gmra.mxu0 %v174
    %v226 = vpop.f32.mrf.mxu0
    %v227 = vadd.f32 0.0, %v226
    %228 = vmatmul.f32.gmra.mxu0 %v177
    %v229 = vpop.f32.mrf.mxu0
    %v230 = vadd.f32 0.0, %v229
    %231 = vdwg.mxu0
    %vm232 = vcmask 80896
    %v234 = vsel %vm232, %v168, 0
    %v237 = vsel %vm232, %v169, 0
    %vm239 = vcmask 1041408
    %v241 = vsel %vm239, %v157, 0
    %v244 = vsel %vm239, %v158, 0
    %246 = vmatpush.msra.mxu0 0.0
    %247 = vmatpush.msra.mxu0 0.0
    %248 = vmatpush.msra.mxu0 0.0
    %249 = vmatpush.msra.mxu0 0.0
    %250 = vmatpush.msra.mxu0 0.0
    %251 = vmatpush.msra.mxu0 0.0
    %252 = vmatpush.msra.mxu0 0.0
    %253 = vmatpush.msra.mxu0 0.0
    %254 = vmatpush.msra.mxu0 0.0
    %255 = vmatpush.msra.mxu0 0.0
    %256 = vmatpush.msra.mxu0 0.0
    %257 = vmatpush.msra.mxu0 0.0
    %258 = vmatpush.msra.mxu0 0.0
    %259 = vmatpush.msra.mxu0 0.0
    %260 = vmatpush.msra.mxu0 %v241
    %261 = vmatpush.msra.mxu0 %v155
    %262 = vmatmul.f32.gmra.mxu0 %v234
    %v263 = vpop.f32.mrf.mxu0
    %v264 = vadd.f32 %v204, %v263
    %265 = vmatmul.f32.gmra.mxu0 %v237
    %v266 = vpop.f32.mrf.mxu0
    %v267 = vadd.f32 %v207, %v266
    %268 = vdwg.mxu0
    %269 = vmatpush.msra.mxu0 0.0
    %270 = vmatpush.msra.mxu0 0.0
    %271 = vmatpush.msra.mxu0 0.0
    %272 = vmatpush.msra.mxu0 0.0
    %273 = vmatpush.msra.mxu0 0.0
    %274 = vmatpush.msra.mxu0 0.0
    %275 = vmatpush.msra.mxu0 0.0
    %276 = vmatpush.msra.mxu0 0.0
    %277 = vmatpush.msra.mxu0 0.0
    %278 = vmatpush.msra.mxu0 0.0
    %279 = vmatpush.msra.mxu0 0.0
    %280 = vmatpush.msra.mxu0 0.0
    %281 = vmatpush.msra.mxu0 0.0
    %282 = vmatpush.msra.mxu0 0.0
    %283 = vmatpush.msra.mxu0 %v244
    %284 = vmatpush.msra.mxu0 %v156
    %285 = vmatmul.f32.gmra.mxu0 %v234
    %v286 = vpop.f32.mrf.mxu0
    %v287 = vadd.f32 %v227, %v286
    %288 = vmatmul.f32.gmra.mxu0 %v237
    %v289 = vpop.f32.mrf.mxu0
    %v290 = vadd.f32 %v230, %v289
    %291 = vdwg.mxu0
    %v292 = vld [vmem:[%s7] sm:$0xff]
    %v293 = vld [vmem:[%s7 + $0x8] sm:$0xff]
    %v294 = vld [vmem:[%s3] sm:$0x3]
    %296 = vset.pattern.permute.xlu0 0
    %297 = vperm.xlu0 %296, %v292
    %v298 = vpop.permute.xlu0 %297
    %301 = vset.pattern.permute.xlu0 0
    %302 = vperm.xlu0 %301, %v293
    %v303 = vpop.permute.xlu0 %302
    %v306 = vperm.slane %v294, 0
    %v307 = vperm.slane %v294, 1
    %v310 = vmul.f32 %v298, %v306
    %v311 = vmul.f32 %v298, %v307
    %v312 = vmul.f32 %v303, %v306
    %v313 = vmul.f32 %v303, %v307
    %v314 = vadd.f32 %v264, %v310
    %v315 = vadd.f32 %v287, %v311
    %v316 = vadd.f32 %v267, %v312
    %v317 = vadd.f32 %v290, %v313
    %v318 = vld [vmem:[%s8] sm:$0xff]
    %v319 = vld [vmem:[%s8 + $0x8] sm:$0xff]
    %321 = vset.pattern.permute.xlu0 0
    %322 = vperm.xlu0 %321, %v318
    %v323 = vpop.permute.xlu0 %322
    %326 = vset.pattern.permute.xlu0 0
    %327 = vperm.xlu0 %326, %v319
    %v328 = vpop.permute.xlu0 %327
    %v330 = vadd.f32 %v314, %v323
    %v331 = vadd.f32 %v315, %v323
    %v332 = vadd.f32 %v316, %v328
    %v333 = vadd.f32 %v317, %v328
    %v334 = vld [vmem:[%s9] sm:$0xff]
    %v335 = vld [vmem:[%s9 + $0x8] sm:$0xff]
    %v336 = vld [vmem:[%s9 + $0x10] sm:$0xff]
    %v337 = vld [vmem:[%s9 + $0x18] sm:$0xff]
    %v338 = vld [vmem:[%s9 + $0x20] sm:$0xff]
    %v339 = vld [vmem:[%s9 + $0x28] sm:$0xff]
    %v340 = vld [vmem:[%s9 + $0x30] sm:$0xff]
    %v341 = vld [vmem:[%s9 + $0x38] sm:$0xff]
    %v342 = vld [vmem:[%s10] sm:$0xff]
    %v343 = vld [vmem:[%s10 + $0x8] sm:$0xff]
    %v344 = vld [vmem:[%s10 + $0x10] sm:$0xff]
    %v345 = vld [vmem:[%s10 + $0x18] sm:$0xff]
    %v346 = vld [vmem:[%s10 + $0x20] sm:$0xff]
    %v347 = vld [vmem:[%s10 + $0x28] sm:$0xff]
    %v348 = vld [vmem:[%s10 + $0x30] sm:$0xff]
    %v349 = vld [vmem:[%s10 + $0x38] sm:$0xff]
    %351 = vset.pattern.permute.xlu0 0
    %352 = vperm.xlu0 %351, %v342
    %v353 = vpop.permute.xlu0 %352
    %356 = vset.pattern.permute.xlu0 0
    %357 = vperm.xlu0 %356, %v343
    %v358 = vpop.permute.xlu0 %357
    %361 = vset.pattern.permute.xlu0 0
    %362 = vperm.xlu0 %361, %v344
    %v363 = vpop.permute.xlu0 %362
    %366 = vset.pattern.permute.xlu0 0
    %367 = vperm.xlu0 %366, %v345
    %v368 = vpop.permute.xlu0 %367
    %371 = vset.pattern.permute.xlu0 0
    %372 = vperm.xlu0 %371, %v346
    %v373 = vpop.permute.xlu0 %372
    %376 = vset.pattern.permute.xlu0 0
    %377 = vperm.xlu0 %376, %v347
    %v378 = vpop.permute.xlu0 %377
    %381 = vset.pattern.permute.xlu0 0
    %382 = vperm.xlu0 %381, %v348
    %v383 = vpop.permute.xlu0 %382
    %386 = vset.pattern.permute.xlu0 0
    %387 = vperm.xlu0 %386, %v349
    %v388 = vpop.permute.xlu0 %387
    %vm390 = vcmask 130048
    %v392 = vsel %vm390, %v334, 0
    %v395 = vsel %vm390, %v335, 0
    %v398 = vsel %vm390, %v336, 0
    %v401 = vsel %vm390, %v337, 0
    %v404 = vsel %vm390, %v338, 0
    %v407 = vsel %vm390, %v339, 0
    %v410 = vsel %vm390, %v340, 0
    %v413 = vsel %vm390, %v341, 0
    %415 = vmatpush.msra.mxu0 0.0
    %416 = vmatpush.msra.mxu0 0.0
    %417 = vmatpush.msra.mxu0 0.0
    %418 = vmatpush.msra.mxu0 0.0
    %419 = vmatpush.msra.mxu0 0.0
    %420 = vmatpush.msra.mxu0 0.0
    %421 = vmatpush.msra.mxu0 0.0
    %422 = vmatpush.msra.mxu0 0.0
    %423 = vmatpush.msra.mxu0 0.0
    %424 = vmatpush.msra.mxu0 0.0
    %425 = vmatpush.msra.mxu0 0.0
    %426 = vmatpush.msra.mxu0 0.0
    %427 = vmatpush.msra.mxu0 0.0
    %428 = vmatpush.msra.mxu0 0.0
    %429 = vmatpush.msra.mxu0 %v332
    %430 = vmatpush.msra.mxu0 %v330
    %431 = vmatmul.f32.gmra.mxu0 %v392
    %v432 = vpop.f32.mrf.mxu0
    %v433 = vadd.f32 %v353, %v432
    %434 = vmatmul.f32.gmra.mxu0 %v395
    %v435 = vpop.f32.mrf.mxu0
    %v436 = vadd.f32 %v358, %v435
    %437 = vmatmul.f32.gmra.mxu0 %v398
    %v438 = vpop.f32.mrf.mxu0
    %v439 = vadd.f32 %v363, %v438
    %440 = vmatmul.f32.gmra.mxu0 %v401
    %v441 = vpop.f32.mrf.mxu0
    %v442 = vadd.f32 %v368, %v441
    %443 = vmatmul.f32.gmra.mxu0 %v404
    %v444 = vpop.f32.mrf.mxu0
    %v445 = vadd.f32 %v373, %v444
    %446 = vmatmul.f32.gmra.mxu0 %v407
    %v447 = vpop.f32.mrf.mxu0
    %v448 = vadd.f32 %v378, %v447
    %449 = vmatmul.f32.gmra.mxu0 %v410
    %v450 = vpop.f32.mrf.mxu0
    %v451 = vadd.f32 %v383, %v450
    %452 = vmatmul.f32.gmra.mxu0 %v413
    %v453 = vpop.f32.mrf.mxu0
    %v454 = vadd.f32 %v388, %v453
    %455 = vdwg.mxu0
    %456 = vmatpush.msra.mxu0 0.0
    %457 = vmatpush.msra.mxu0 0.0
    %458 = vmatpush.msra.mxu0 0.0
    %459 = vmatpush.msra.mxu0 0.0
    %460 = vmatpush.msra.mxu0 0.0
    %461 = vmatpush.msra.mxu0 0.0
    %462 = vmatpush.msra.mxu0 0.0
    %463 = vmatpush.msra.mxu0 0.0
    %464 = vmatpush.msra.mxu0 0.0
    %465 = vmatpush.msra.mxu0 0.0
    %466 = vmatpush.msra.mxu0 0.0
    %467 = vmatpush.msra.mxu0 0.0
    %468 = vmatpush.msra.mxu0 0.0
    %469 = vmatpush.msra.mxu0 0.0
    %470 = vmatpush.msra.mxu0 %v333
    %471 = vmatpush.msra.mxu0 %v331
    %472 = vmatmul.f32.gmra.mxu0 %v392
    %v473 = vpop.f32.mrf.mxu0
    %v474 = vadd.f32 %v353, %v473
    %475 = vmatmul.f32.gmra.mxu0 %v395
    %v476 = vpop.f32.mrf.mxu0
    %v477 = vadd.f32 %v358, %v476
    %478 = vmatmul.f32.gmra.mxu0 %v398
    %v479 = vpop.f32.mrf.mxu0
    %v480 = vadd.f32 %v363, %v479
    %481 = vmatmul.f32.gmra.mxu0 %v401
    %v482 = vpop.f32.mrf.mxu0
    %v483 = vadd.f32 %v368, %v482
    %484 = vmatmul.f32.gmra.mxu0 %v404
    %v485 = vpop.f32.mrf.mxu0
    %v486 = vadd.f32 %v373, %v485
    %487 = vmatmul.f32.gmra.mxu0 %v407
    %v488 = vpop.f32.mrf.mxu0
    %v489 = vadd.f32 %v378, %v488
    %490 = vmatmul.f32.gmra.mxu0 %v410
    %v491 = vpop.f32.mrf.mxu0
    %v492 = vadd.f32 %v383, %v491
    %493 = vmatmul.f32.gmra.mxu0 %v413
    %v494 = vpop.f32.mrf.mxu0
    %v495 = vadd.f32 %v388, %v494
    %496 = vdwg.mxu0
    %v497 = vld [vmem:[%s11] sm:$0xff]
    %v498 = vld [vmem:[%s11 + $0x8] sm:$0xff]
    %v499 = vld [vmem:[%s11 + $0x10] sm:$0xff]
    %v500 = vld [vmem:[%s11 + $0x18] sm:$0xff]
    %v501 = vld [vmem:[%s11 + $0x20] sm:$0xff]
    %v502 = vld [vmem:[%s11 + $0x28] sm:$0xff]
    %v503 = vld [vmem:[%s11 + $0x30] sm:$0xff]
    %v504 = vld [vmem:[%s11 + $0x38] sm:$0xff]
    %v505 = vld [vmem:[%s12] sm:$0xff]
    %v506 = vld [vmem:[%s12 + $0x8] sm:$0xff]
    %v507 = vld [vmem:[%s12 + $0x10] sm:$0xff]
    %v508 = vld [vmem:[%s12 + $0x18] sm:$0xff]
    %v509 = vld [vmem:[%s12 + $0x20] sm:$0xff]
    %v510 = vld [vmem:[%s12 + $0x28] sm:$0xff]
    %v511 = vld [vmem:[%s12 + $0x30] sm:$0xff]
    %v512 = vld [vmem:[%s12 + $0x38] sm:$0xff]
    %v513 = vld [vmem:[%s14] sm:$0xff]
    %v514 = vld [vmem:[%s14 + $0x8] sm:$0xff]
    %v515 = vld [vmem:[%s14 + $0x10] sm:$0xff]
    %v516 = vld [vmem:[%s14 + $0x18] sm:$0xff]
    %v517 = vld [vmem:[%s14 + $0x20] sm:$0xff]
    %v518 = vld [vmem:[%s14 + $0x28] sm:$0xff]
    %v519 = vld [vmem:[%s14 + $0x30] sm:$0xff]
    %v520 = vld [vmem:[%s14 + $0x38] sm:$0xff]
    %v521 = vld [vmem:[%s16] sm:$0x7f]
    %v522 = vld [vmem:[%s13] sm:$0xff]
    %v523 = vld [vmem:[%s13 + $0x8] sm:$0xff]
    %v524 = vld [vmem:[%s13 + $0x10] sm:$0xff]
    %v525 = vld [vmem:[%s13 + $0x18] sm:$0xff]
    %v526 = vld [vmem:[%s13 + $0x20] sm:$0xff]
    %v527 = vld [vmem:[%s13 + $0x28] sm:$0xff]
    %v528 = vld [vmem:[%s13 + $0x30] sm:$0xff]
    %v529 = vld [vmem:[%s13 + $0x38] sm:$0xff]
    %531 = vset.pattern.permute.xlu0 0
    %532 = vperm.xlu0 %531, %v522
    %v533 = vpop.permute.xlu0 %532
    %536 = vset.pattern.permute.xlu0 0
    %537 = vperm.xlu0 %536, %v523
    %v538 = vpop.permute.xlu0 %537
    %541 = vset.pattern.permute.xlu0 0
    %542 = vperm.xlu0 %541, %v524
    %v543 = vpop.permute.xlu0 %542
    %546 = vset.pattern.permute.xlu0 0
    %547 = vperm.xlu0 %546, %v525
    %v548 = vpop.permute.xlu0 %547
    %551 = vset.pattern.permute.xlu0 0
    %552 = vperm.xlu0 %551, %v526
    %v553 = vpop.permute.xlu0 %552
    %556 = vset.pattern.permute.xlu0 0
    %557 = vperm.xlu0 %556, %v527
    %v558 = vpop.permute.xlu0 %557
    %561 = vset.pattern.permute.xlu0 0
    %562 = vperm.xlu0 %561, %v528
    %v563 = vpop.permute.xlu0 %562
    %566 = vset.pattern.permute.xlu0 0
    %567 = vperm.xlu0 %566, %v529
    %v568 = vpop.permute.xlu0 %567
    %v570 = vld [vmem:[%s15] sm:$0xff]
    %v571 = vld [vmem:[%s15 + $0x8] sm:$0xff]
    %v572 = vld [vmem:[%s15 + $0x10] sm:$0xff]
    %v573 = vld [vmem:[%s15 + $0x18] sm:$0xff]
    %v574 = vld [vmem:[%s15 + $0x20] sm:$0xff]
    %v575 = vld [vmem:[%s15 + $0x28] sm:$0xff]
    %v576 = vld [vmem:[%s15 + $0x30] sm:$0xff]
    %v577 = vld [vmem:[%s15 + $0x38] sm:$0xff]
    %579 = vset.pattern.permute.xlu0 0
    %580 = vperm.xlu0 %579, %v570
    %v581 = vpop.permute.xlu0 %580
    %584 = vset.pattern.permute.xlu0 0
    %585 = vperm.xlu0 %584, %v571
    %v586 = vpop.permute.xlu0 %585
    %589 = vset.pattern.permute.xlu0 0
    %590 = vperm.xlu0 %589, %v572
    %v591 = vpop.permute.xlu0 %590
    %594 = vset.pattern.permute.xlu0 0
    %595 = vperm.xlu0 %594, %v573
    %v596 = vpop.permute.xlu0 %595
    %599 = vset.pattern.permute.xlu0 0
    %600 = vperm.xlu0 %599, %v574
    %v601 = vpop.permute.xlu0 %600
    %604 = vset.pattern.permute.xlu0 0
    %605 = vperm.xlu0 %604, %v575
    %v606 = vpop.permute.xlu0 %605
    %609 = vset.pattern.permute.xlu0 0
    %610 = vperm.xlu0 %609, %v576
    %v611 = vpop.permute.xlu0 %610
    %614 = vset.pattern.permute.xlu0 0
    %615 = vperm.xlu0 %614, %v577
    %v616 = vpop.permute.xlu0 %615
    %v618 = vld [vmem:[%s17] sm:$0x7f]
    %620 = vset.pattern.permute.xlu0 0
    %621 = vperm.xlu0 %620, %v618
    %v622 = vpop.permute.xlu0 %621
    %v624 = vld [vmem:[%s18] sm:$0x7f]
    %626 = vset.pattern.permute.xlu0 0
    %627 = vperm.xlu0 %626, %v624
    %v628 = vpop.permute.xlu0 %627
    %v630 = vld [vmem:[%s0] sm:$0x7f]
    %v631 = vld [vmem:[%s0 + $0x8] sm:$0x7f]
    %vm632 = vcmask 56320
    %v634 = vsel %vm632, %v497, 0
    %v637 = vsel %vm632, %v498, 0
    %v640 = vsel %vm632, %v499, 0
    %v643 = vsel %vm632, %v500, 0
    %v646 = vsel %vm632, %v501, 0
    %v649 = vsel %vm632, %v502, 0
    %v652 = vsel %vm632, %v503, 0
    %v655 = vsel %vm632, %v504, 0
    %vm657 = vcmask 1046528
    %v659 = vsel %vm657, %v630, 0
    %v662 = vsel %vm657, %v631, 0
    %664 = vmatpush.msra.mxu0 0.0
    %665 = vmatpush.msra.mxu0 0.0
    %666 = vmatpush.msra.mxu0 0.0
    %667 = vmatpush.msra.mxu0 0.0
    %668 = vmatpush.msra.mxu0 0.0
    %669 = vmatpush.msra.mxu0 0.0
    %670 = vmatpush.msra.mxu0 0.0
    %671 = vmatpush.msra.mxu0 0.0
    %672 = vmatpush.msra.mxu0 0.0
    %673 = vmatpush.msra.mxu0 0.0
    %674 = vmatpush.msra.mxu0 0.0
    %675 = vmatpush.msra.mxu0 0.0
    %676 = vmatpush.msra.mxu0 0.0
    %677 = vmatpush.msra.mxu0 0.0
    %678 = vmatpush.msra.mxu0 0.0
    %679 = vmatpush.msra.mxu0 %v659
    %680 = vmatmul.f32.gmra.mxu0 %v634
    %v681 = vpop.f32.mrf.mxu0
    %v682 = vadd.f32 %v433, %v681
    %683 = vmatmul.f32.gmra.mxu0 %v637
    %v684 = vpop.f32.mrf.mxu0
    %v685 = vadd.f32 %v436, %v684
    %686 = vmatmul.f32.gmra.mxu0 %v640
    %v687 = vpop.f32.mrf.mxu0
    %v688 = vadd.f32 %v439, %v687
    %689 = vmatmul.f32.gmra.mxu0 %v643
    %v690 = vpop.f32.mrf.mxu0
    %v691 = vadd.f32 %v442, %v690
    %692 = vmatmul.f32.gmra.mxu0 %v646
    %v693 = vpop.f32.mrf.mxu0
    %v694 = vadd.f32 %v445, %v693
    %695 = vmatmul.f32.gmra.mxu0 %v649
    %v696 = vpop.f32.mrf.mxu0
    %v697 = vadd.f32 %v448, %v696
    %698 = vmatmul.f32.gmra.mxu0 %v652
    %v699 = vpop.f32.mrf.mxu0
    %v700 = vadd.f32 %v451, %v699
    %701 = vmatmul.f32.gmra.mxu0 %v655
    %v702 = vpop.f32.mrf.mxu0
    %v703 = vadd.f32 %v454, %v702
    %704 = vdwg.mxu0
    %705 = vmatpush.msra.mxu0 0.0
    %706 = vmatpush.msra.mxu0 0.0
    %707 = vmatpush.msra.mxu0 0.0
    %708 = vmatpush.msra.mxu0 0.0
    %709 = vmatpush.msra.mxu0 0.0
    %710 = vmatpush.msra.mxu0 0.0
    %711 = vmatpush.msra.mxu0 0.0
    %712 = vmatpush.msra.mxu0 0.0
    %713 = vmatpush.msra.mxu0 0.0
    %714 = vmatpush.msra.mxu0 0.0
    %715 = vmatpush.msra.mxu0 0.0
    %716 = vmatpush.msra.mxu0 0.0
    %717 = vmatpush.msra.mxu0 0.0
    %718 = vmatpush.msra.mxu0 0.0
    %719 = vmatpush.msra.mxu0 0.0
    %720 = vmatpush.msra.mxu0 %v662
    %721 = vmatmul.f32.gmra.mxu0 %v634
    %v722 = vpop.f32.mrf.mxu0
    %v723 = vadd.f32 %v474, %v722
    %724 = vmatmul.f32.gmra.mxu0 %v637
    %v725 = vpop.f32.mrf.mxu0
    %v726 = vadd.f32 %v477, %v725
    %727 = vmatmul.f32.gmra.mxu0 %v640
    %v728 = vpop.f32.mrf.mxu0
    %v729 = vadd.f32 %v480, %v728
    %730 = vmatmul.f32.gmra.mxu0 %v643
    %v731 = vpop.f32.mrf.mxu0
    %v732 = vadd.f32 %v483, %v731
    %733 = vmatmul.f32.gmra.mxu0 %v646
    %v734 = vpop.f32.mrf.mxu0
    %v735 = vadd.f32 %v486, %v734
    %736 = vmatmul.f32.gmra.mxu0 %v649
    %v737 = vpop.f32.mrf.mxu0
    %v738 = vadd.f32 %v489, %v737
    %739 = vmatmul.f32.gmra.mxu0 %v652
    %v740 = vpop.f32.mrf.mxu0
    %v741 = vadd.f32 %v492, %v740
    %742 = vmatmul.f32.gmra.mxu0 %v655
    %v743 = vpop.f32.mrf.mxu0
    %v744 = vadd.f32 %v495, %v743
    %745 = vdwg.mxu0
    %vm746 = vcmp.gt.f32.partialorder %v682, 0.0
    %vm747 = vcmp.gt.f32.partialorder %v723, 0.0
    %vm748 = vcmp.gt.f32.partialorder %v685, 0.0
    %vm749 = vcmp.gt.f32.partialorder %v726, 0.0
    %vm750 = vcmp.gt.f32.partialorder %v688, 0.0
    %vm751 = vcmp.gt.f32.partialorder %v729, 0.0
    %vm752 = vcmp.gt.f32.partialorder %v691, 0.0
    %vm753 = vcmp.gt.f32.partialorder %v732, 0.0
    %vm754 = vcmp.gt.f32.partialorder %v694, 0.0
    %vm755 = vcmp.gt.f32.partialorder %v735, 0.0
    %vm756 = vcmp.gt.f32.partialorder %v697, 0.0
    %vm757 = vcmp.gt.f32.partialorder %v738, 0.0
    %vm758 = vcmp.gt.f32.partialorder %v700, 0.0
    %vm759 = vcmp.gt.f32.partialorder %v741, 0.0
    %vm760 = vcmp.gt.f32.partialorder %v703, 0.0
    %vm761 = vcmp.gt.f32.partialorder %v744, 0.0
    %v762 = vmul.f32 %v682, 1.442695
    %v763 = vpow.pop %v762
    %v764 = vmul.f32 %v723, 1.442695
    %v765 = vpow.pop %v764
    %v766 = vmul.f32 %v685, 1.442695
    %v767 = vpow.pop %v766
    %v768 = vmul.f32 %v726, 1.442695
    %v769 = vpow.pop %v768
    %v770 = vmul.f32 %v688, 1.442695
    %v771 = vpow.pop %v770
    %v772 = vmul.f32 %v729, 1.442695
    %v773 = vpow.pop %v772
    %v774 = vmul.f32 %v691, 1.442695
    %v775 = vpow.pop %v774
    %v776 = vmul.f32 %v732, 1.442695
    %v777 = vpow.pop %v776
    %v778 = vmul.f32 %v694, 1.442695
    %v779 = vpow.pop %v778
    %v780 = vmul.f32 %v735, 1.442695
    %v781 = vpow.pop %v780
    %v782 = vmul.f32 %v697, 1.442695
    %v783 = vpow.pop %v782
    %v784 = vmul.f32 %v738, 1.442695
    %v785 = vpow.pop %v784
    %v786 = vmul.f32 %v700, 1.442695
    %v787 = vpow.pop %v786
    %v788 = vmul.f32 %v741, 1.442695
    %v789 = vpow.pop %v788
    %v790 = vmul.f32 %v703, 1.442695
    %v791 = vpow.pop %v790
    %v792 = vmul.f32 %v744, 1.442695
    %v793 = vpow.pop %v792
    %v794 = vsub.f32 %v763, 1.0
    %v795 = vsub.f32 %v765, 1.0
    %v796 = vsub.f32 %v767, 1.0
    %v797 = vsub.f32 %v769, 1.0
    %v798 = vsub.f32 %v771, 1.0
    %v799 = vsub.f32 %v773, 1.0
    %v800 = vsub.f32 %v775, 1.0
    %v801 = vsub.f32 %v777, 1.0
    %v802 = vsub.f32 %v779, 1.0
    %v803 = vsub.f32 %v781, 1.0
    %v804 = vsub.f32 %v783, 1.0
    %v805 = vsub.f32 %v785, 1.0
    %v806 = vsub.f32 %v787, 1.0
    %v807 = vsub.f32 %v789, 1.0
    %v808 = vsub.f32 %v791, 1.0
    %v809 = vsub.f32 %v793, 1.0
    %v810 = vmul.f32 %v794, 1.6732632
    %v811 = vmul.f32 %v795, 1.6732632
    %v812 = vmul.f32 %v796, 1.6732632
    %v813 = vmul.f32 %v797, 1.6732632
    %v814 = vmul.f32 %v798, 1.6732632
    %v815 = vmul.f32 %v799, 1.6732632
    %v816 = vmul.f32 %v800, 1.6732632
    %v817 = vmul.f32 %v801, 1.6732632
    %v818 = vmul.f32 %v802, 1.6732632
    %v819 = vmul.f32 %v803, 1.6732632
    %v820 = vmul.f32 %v804, 1.6732632
    %v821 = vmul.f32 %v805, 1.6732632
    %v822 = vmul.f32 %v806, 1.6732632
    %v823 = vmul.f32 %v807, 1.6732632
    %v824 = vmul.f32 %v808, 1.6732632
    %v825 = vmul.f32 %v809, 1.6732632
    %v826 = vsel %vm746, %v682, %v810
    %v827 = vsel %vm747, %v723, %v811
    %v828 = vsel %vm748, %v685, %v812
    %v829 = vsel %vm749, %v726, %v813
    %v830 = vsel %vm750, %v688, %v814
    %v831 = vsel %vm751, %v729, %v815
    %v832 = vsel %vm752, %v691, %v816
    %v833 = vsel %vm753, %v732, %v817
    %v834 = vsel %vm754, %v694, %v818
    %v835 = vsel %vm755, %v735, %v819
    %v836 = vsel %vm756, %v697, %v820
    %v837 = vsel %vm757, %v738, %v821
    %v838 = vsel %vm758, %v700, %v822
    %v839 = vsel %vm759, %v741, %v823
    %v840 = vsel %vm760, %v703, %v824
    %v841 = vsel %vm761, %v744, %v825
    %v842 = vmul.f32 %v826, 1.050701
    %v843 = vmul.f32 %v827, 1.050701
    %v844 = vmul.f32 %v828, 1.050701
    %v845 = vmul.f32 %v829, 1.050701
    %v846 = vmul.f32 %v830, 1.050701
    %v847 = vmul.f32 %v831, 1.050701
    %v848 = vmul.f32 %v832, 1.050701
    %v849 = vmul.f32 %v833, 1.050701
    %v850 = vmul.f32 %v834, 1.050701
    %v851 = vmul.f32 %v835, 1.050701
    %v852 = vmul.f32 %v836, 1.050701
    %v853 = vmul.f32 %v837, 1.050701
    %v854 = vmul.f32 %v838, 1.050701
    %v855 = vmul.f32 %v839, 1.050701
    %v856 = vmul.f32 %v840, 1.050701
    %v857 = vmul.f32 %v841, 1.050701
    %vm858 = vcmask 523264
    %v860 = vsel %vm858, %v505, 0
    %v863 = vsel %vm858, %v506, 0
    %v866 = vsel %vm858, %v507, 0
    %v869 = vsel %vm858, %v508, 0
    %v872 = vsel %vm858, %v509, 0
    %v875 = vsel %vm858, %v510, 0
    %v878 = vsel %vm858, %v511, 0
    %v881 = vsel %vm858, %v512, 0
    %883 = vmatpush.msra.mxu0 0.0
    %884 = vmatpush.msra.mxu0 0.0
    %885 = vmatpush.msra.mxu0 0.0
    %886 = vmatpush.msra.mxu0 0.0
    %887 = vmatpush.msra.mxu0 0.0
    %888 = vmatpush.msra.mxu0 0.0
    %889 = vmatpush.msra.mxu0 0.0
    %890 = vmatpush.msra.mxu0 0.0
    %891 = vmatpush.msra.mxu0 %v856
    %892 = vmatpush.msra.mxu0 %v854
    %893 = vmatpush.msra.mxu0 %v852
    %894 = vmatpush.msra.mxu0 %v850
    %895 = vmatpush.msra.mxu0 %v848
    %896 = vmatpush.msra.mxu0 %v846
    %897 = vmatpush.msra.mxu0 %v844
    %898 = vmatpush.msra.mxu0 %v842
    %899 = vmatmul.f32.gmra.mxu0 %v860
    %v900 = vpop.f32.mrf.mxu0
    %v901 = vadd.f32 %v533, %v900
    %902 = vmatmul.f32.gmra.mxu0 %v863
    %v903 = vpop.f32.mrf.mxu0
    %v904 = vadd.f32 %v538, %v903
    %905 = vmatmul.f32.gmra.mxu0 %v866
    %v906 = vpop.f32.mrf.mxu0
    %v907 = vadd.f32 %v543, %v906
    %908 = vmatmul.f32.gmra.mxu0 %v869
    %v909 = vpop.f32.mrf.mxu0
    %v910 = vadd.f32 %v548, %v909
    %911 = vmatmul.f32.gmra.mxu0 %v872
    %v912 = vpop.f32.mrf.mxu0
    %v913 = vadd.f32 %v553, %v912
    %914 = vmatmul.f32.gmra.mxu0 %v875
    %v915 = vpop.f32.mrf.mxu0
    %v916 = vadd.f32 %v558, %v915
    %917 = vmatmul.f32.gmra.mxu0 %v878
    %v918 = vpop.f32.mrf.mxu0
    %v919 = vadd.f32 %v563, %v918
    %920 = vmatmul.f32.gmra.mxu0 %v881
    %v921 = vpop.f32.mrf.mxu0
    %v922 = vadd.f32 %v568, %v921
    %923 = vdwg.mxu0
    %924 = vmatpush.msra.mxu0 0.0
    %925 = vmatpush.msra.mxu0 0.0
    %926 = vmatpush.msra.mxu0 0.0
    %927 = vmatpush.msra.mxu0 0.0
    %928 = vmatpush.msra.mxu0 0.0
    %929 = vmatpush.msra.mxu0 0.0
    %930 = vmatpush.msra.mxu0 0.0
    %931 = vmatpush.msra.mxu0 0.0
    %932 = vmatpush.msra.mxu0 %v857
    %933 = vmatpush.msra.mxu0 %v855
    %934 = vmatpush.msra.mxu0 %v853
    %935 = vmatpush.msra.mxu0 %v851
    %936 = vmatpush.msra.mxu0 %v849
    %937 = vmatpush.msra.mxu0 %v847
    %938 = vmatpush.msra.mxu0 %v845
    %939 = vmatpush.msra.mxu0 %v843
    %940 = vmatmul.f32.gmra.mxu0 %v860
    %v941 = vpop.f32.mrf.mxu0
    %v942 = vadd.f32 %v533, %v941
    %943 = vmatmul.f32.gmra.mxu0 %v863
    %v944 = vpop.f32.mrf.mxu0
    %v945 = vadd.f32 %v538, %v944
    %946 = vmatmul.f32.gmra.mxu0 %v866
    %v947 = vpop.f32.mrf.mxu0
    %v948 = vadd.f32 %v543, %v947
    %949 = vmatmul.f32.gmra.mxu0 %v869
    %v950 = vpop.f32.mrf.mxu0
    %v951 = vadd.f32 %v548, %v950
    %952 = vmatmul.f32.gmra.mxu0 %v872
    %v953 = vpop.f32.mrf.mxu0
    %v954 = vadd.f32 %v553, %v953
    %955 = vmatmul.f32.gmra.mxu0 %v875
    %v956 = vpop.f32.mrf.mxu0
    %v957 = vadd.f32 %v558, %v956
    %958 = vmatmul.f32.gmra.mxu0 %v878
    %v959 = vpop.f32.mrf.mxu0
    %v960 = vadd.f32 %v563, %v959
    %961 = vmatmul.f32.gmra.mxu0 %v881
    %v962 = vpop.f32.mrf.mxu0
    %v963 = vadd.f32 %v568, %v962
    %964 = vdwg.mxu0
    %vm965 = vcmp.gt.f32.partialorder %v901, 0.0
    %vm966 = vcmp.gt.f32.partialorder %v942, 0.0
    %vm967 = vcmp.gt.f32.partialorder %v904, 0.0
    %vm968 = vcmp.gt.f32.partialorder %v945, 0.0
    %vm969 = vcmp.gt.f32.partialorder %v907, 0.0
    %vm970 = vcmp.gt.f32.partialorder %v948, 0.0
    %vm971 = vcmp.gt.f32.partialorder %v910, 0.0
    %vm972 = vcmp.gt.f32.partialorder %v951, 0.0
    %vm973 = vcmp.gt.f32.partialorder %v913, 0.0
    %vm974 = vcmp.gt.f32.partialorder %v954, 0.0
    %vm975 = vcmp.gt.f32.partialorder %v916, 0.0
    %vm976 = vcmp.gt.f32.partialorder %v957, 0.0
    %vm977 = vcmp.gt.f32.partialorder %v919, 0.0
    %vm978 = vcmp.gt.f32.partialorder %v960, 0.0
    %vm979 = vcmp.gt.f32.partialorder %v922, 0.0
    %vm980 = vcmp.gt.f32.partialorder %v963, 0.0
    %v981 = vmul.f32 %v901, 1.442695
    %v982 = vpow.pop %v981
    %v983 = vmul.f32 %v942, 1.442695
    %v984 = vpow.pop %v983
    %v985 = vmul.f32 %v904, 1.442695
    %v986 = vpow.pop %v985
    %v987 = vmul.f32 %v945, 1.442695
    %v988 = vpow.pop %v987
    %v989 = vmul.f32 %v907, 1.442695
    %v990 = vpow.pop %v989
    %v991 = vmul.f32 %v948, 1.442695
    %v992 = vpow.pop %v991
    %v993 = vmul.f32 %v910, 1.442695
    %v994 = vpow.pop %v993
    %v995 = vmul.f32 %v951, 1.442695
    %v996 = vpow.pop %v995
    %v997 = vmul.f32 %v913, 1.442695
    %v998 = vpow.pop %v997
    %v999 = vmul.f32 %v954, 1.442695
    %v1000 = vpow.pop %v999
    %v1001 = vmul.f32 %v916, 1.442695
    %v1002 = vpow.pop %v1001
    %v1003 = vmul.f32 %v957, 1.442695
    %v1004 = vpow.pop %v1003
    %v1005 = vmul.f32 %v919, 1.442695
    %v1006 = vpow.pop %v1005
    %v1007 = vmul.f32 %v960, 1.442695
    %v1008 = vpow.pop %v1007
    %v1009 = vmul.f32 %v922, 1.442695
    %v1010 = vpow.pop %v1009
    %v1011 = vmul.f32 %v963, 1.442695
    %v1012 = vpow.pop %v1011
    %v1013 = vsub.f32 %v982, 1.0
    %v1014 = vsub.f32 %v984, 1.0
    %v1015 = vsub.f32 %v986, 1.0
    %v1016 = vsub.f32 %v988, 1.0
    %v1017 = vsub.f32 %v990, 1.0
    %v1018 = vsub.f32 %v992, 1.0
    %v1019 = vsub.f32 %v994, 1.0
    %v1020 = vsub.f32 %v996, 1.0
    %v1021 = vsub.f32 %v998, 1.0
    %v1022 = vsub.f32 %v1000, 1.0
    %v1023 = vsub.f32 %v1002, 1.0
    %v1024 = vsub.f32 %v1004, 1.0
    %v1025 = vsub.f32 %v1006, 1.0
    %v1026 = vsub.f32 %v1008, 1.0
    %v1027 = vsub.f32 %v1010, 1.0
    %v1028 = vsub.f32 %v1012, 1.0
    %v1029 = vmul.f32 %v1013, 1.6732632
    %v1030 = vmul.f32 %v1014, 1.6732632
    %v1031 = vmul.f32 %v1015, 1.6732632
    %v1032 = vmul.f32 %v1016, 1.6732632
    %v1033 = vmul.f32 %v1017, 1.6732632
    %v1034 = vmul.f32 %v1018, 1.6732632
    %v1035 = vmul.f32 %v1019, 1.6732632
    %v1036 = vmul.f32 %v1020, 1.6732632
    %v1037 = vmul.f32 %v1021, 1.6732632
    %v1038 = vmul.f32 %v1022, 1.6732632
    %v1039 = vmul.f32 %v1023, 1.6732632
    %v1040 = vmul.f32 %v1024, 1.6732632
    %v1041 = vmul.f32 %v1025, 1.6732632
    %v1042 = vmul.f32 %v1026, 1.6732632
    %v1043 = vmul.f32 %v1027, 1.6732632
    %v1044 = vmul.f32 %v1028, 1.6732632
    %v1045 = vsel %vm965, %v901, %v1029
    %v1046 = vsel %vm966, %v942, %v1030
    %v1047 = vsel %vm967, %v904, %v1031
    %v1048 = vsel %vm968, %v945, %v1032
    %v1049 = vsel %vm969, %v907, %v1033
    %v1050 = vsel %vm970, %v948, %v1034
    %v1051 = vsel %vm971, %v910, %v1035
    %v1052 = vsel %vm972, %v951, %v1036
    %v1053 = vsel %vm973, %v913, %v1037
    %v1054 = vsel %vm974, %v954, %v1038
    %v1055 = vsel %vm975, %v916, %v1039
    %v1056 = vsel %vm976, %v957, %v1040
    %v1057 = vsel %vm977, %v919, %v1041
    %v1058 = vsel %vm978, %v960, %v1042
    %v1059 = vsel %vm979, %v922, %v1043
    %v1060 = vsel %vm980, %v963, %v1044
    %v1061 = vmul.f32 %v1045, 1.050701
    %v1062 = vmul.f32 %v1046, 1.050701
    %v1063 = vmul.f32 %v1047, 1.050701
    %v1064 = vmul.f32 %v1048, 1.050701
    %v1065 = vmul.f32 %v1049, 1.050701
    %v1066 = vmul.f32 %v1050, 1.050701
    %v1067 = vmul.f32 %v1051, 1.050701
    %v1068 = vmul.f32 %v1052, 1.050701
    %v1069 = vmul.f32 %v1053, 1.050701
    %v1070 = vmul.f32 %v1054, 1.050701
    %v1071 = vmul.f32 %v1055, 1.050701
    %v1072 = vmul.f32 %v1056, 1.050701
    %v1073 = vmul.f32 %v1057, 1.050701
    %v1074 = vmul.f32 %v1058, 1.050701
    %v1075 = vmul.f32 %v1059, 1.050701
    %v1076 = vmul.f32 %v1060, 1.050701
    %v1078 = vsel %vm858, %v513, 0
    %v1081 = vsel %vm858, %v514, 0
    %v1084 = vsel %vm858, %v515, 0
    %v1087 = vsel %vm858, %v516, 0
    %v1090 = vsel %vm858, %v517, 0
    %v1093 = vsel %vm858, %v518, 0
    %v1096 = vsel %vm858, %v519, 0
    %v1099 = vsel %vm858, %v520, 0
    %1101 = vmatpush.msra.mxu0 0.0
    %1102 = vmatpush.msra.mxu0 0.0
    %1103 = vmatpush.msra.mxu0 0.0
    %1104 = vmatpush.msra.mxu0 0.0
    %1105 = vmatpush.msra.mxu0 0.0
    %1106 = vmatpush.msra.mxu0 0.0
    %1107 = vmatpush.msra.mxu0 0.0
    %1108 = vmatpush.msra.mxu0 0.0
    %1109 = vmatpush.msra.mxu0 %v1075
    %1110 = vmatpush.msra.mxu0 %v1073
    %1111 = vmatpush.msra.mxu0 %v1071
    %1112 = vmatpush.msra.mxu0 %v1069
    %1113 = vmatpush.msra.mxu0 %v1067
    %1114 = vmatpush.msra.mxu0 %v1065
    %1115 = vmatpush.msra.mxu0 %v1063
    %1116 = vmatpush.msra.mxu0 %v1061
    %1117 = vmatmul.f32.gmra.mxu0 %v1078
    %v1118 = vpop.f32.mrf.mxu0
    %v1119 = vadd.f32 %v581, %v1118
    %1120 = vmatmul.f32.gmra.mxu0 %v1081
    %v1121 = vpop.f32.mrf.mxu0
    %v1122 = vadd.f32 %v586, %v1121
    %1123 = vmatmul.f32.gmra.mxu0 %v1084
    %v1124 = vpop.f32.mrf.mxu0
    %v1125 = vadd.f32 %v591, %v1124
    %1126 = vmatmul.f32.gmra.mxu0 %v1087
    %v1127 = vpop.f32.mrf.mxu0
    %v1128 = vadd.f32 %v596, %v1127
    %1129 = vmatmul.f32.gmra.mxu0 %v1090
    %v1130 = vpop.f32.mrf.mxu0
    %v1131 = vadd.f32 %v601, %v1130
    %1132 = vmatmul.f32.gmra.mxu0 %v1093
    %v1133 = vpop.f32.mrf.mxu0
    %v1134 = vadd.f32 %v606, %v1133
    %1135 = vmatmul.f32.gmra.mxu0 %v1096
    %v1136 = vpop.f32.mrf.mxu0
    %v1137 = vadd.f32 %v611, %v1136
    %1138 = vmatmul.f32.gmra.mxu0 %v1099
    %v1139 = vpop.f32.mrf.mxu0
    %v1140 = vadd.f32 %v616, %v1139
    %1141 = vdwg.mxu0
    %1142 = vmatpush.msra.mxu0 0.0
    %1143 = vmatpush.msra.mxu0 0.0
    %1144 = vmatpush.msra.mxu0 0.0
    %1145 = vmatpush.msra.mxu0 0.0
    %1146 = vmatpush.msra.mxu0 0.0
    %1147 = vmatpush.msra.mxu0 0.0
    %1148 = vmatpush.msra.mxu0 0.0
    %1149 = vmatpush.msra.mxu0 0.0
    %1150 = vmatpush.msra.mxu0 %v1076
    %1151 = vmatpush.msra.mxu0 %v1074
    %1152 = vmatpush.msra.mxu0 %v1072
    %1153 = vmatpush.msra.mxu0 %v1070
    %1154 = vmatpush.msra.mxu0 %v1068
    %1155 = vmatpush.msra.mxu0 %v1066
    %1156 = vmatpush.msra.mxu0 %v1064
    %1157 = vmatpush.msra.mxu0 %v1062
    %1158 = vmatmul.f32.gmra.mxu0 %v1078
    %v1159 = vpop.f32.mrf.mxu0
    %v1160 = vadd.f32 %v581, %v1159
    %1161 = vmatmul.f32.gmra.mxu0 %v1081
    %v1162 = vpop.f32.mrf.mxu0
    %v1163 = vadd.f32 %v586, %v1162
    %1164 = vmatmul.f32.gmra.mxu0 %v1084
    %v1165 = vpop.f32.mrf.mxu0
    %v1166 = vadd.f32 %v591, %v1165
    %1167 = vmatmul.f32.gmra.mxu0 %v1087
    %v1168 = vpop.f32.mrf.mxu0
    %v1169 = vadd.f32 %v596, %v1168
    %1170 = vmatmul.f32.gmra.mxu0 %v1090
    %v1171 = vpop.f32.mrf.mxu0
    %v1172 = vadd.f32 %v601, %v1171
    %1173 = vmatmul.f32.gmra.mxu0 %v1093
    %v1174 = vpop.f32.mrf.mxu0
    %v1175 = vadd.f32 %v606, %v1174
    %1176 = vmatmul.f32.gmra.mxu0 %v1096
    %v1177 = vpop.f32.mrf.mxu0
    %v1178 = vadd.f32 %v611, %v1177
    %1179 = vmatmul.f32.gmra.mxu0 %v1099
    %v1180 = vpop.f32.mrf.mxu0
    %v1181 = vadd.f32 %v616, %v1180
    %1182 = vdwg.mxu0
    %vm1183 = vcmp.gt.f32.partialorder %v1119, 0.0
    %vm1184 = vcmp.gt.f32.partialorder %v1160, 0.0
    %vm1185 = vcmp.gt.f32.partialorder %v1122, 0.0
    %vm1186 = vcmp.gt.f32.partialorder %v1163, 0.0
    %vm1187 = vcmp.gt.f32.partialorder %v1125, 0.0
    %vm1188 = vcmp.gt.f32.partialorder %v1166, 0.0
    %vm1189 = vcmp.gt.f32.partialorder %v1128, 0.0
    %vm1190 = vcmp.gt.f32.partialorder %v1169, 0.0
    %vm1191 = vcmp.gt.f32.partialorder %v1131, 0.0
    %vm1192 = vcmp.gt.f32.partialorder %v1172, 0.0
    %vm1193 = vcmp.gt.f32.partialorder %v1134, 0.0
    %vm1194 = vcmp.gt.f32.partialorder %v1175, 0.0
    %vm1195 = vcmp.gt.f32.partialorder %v1137, 0.0
    %vm1196 = vcmp.gt.f32.partialorder %v1178, 0.0
    %vm1197 = vcmp.gt.f32.partialorder %v1140, 0.0
    %vm1198 = vcmp.gt.f32.partialorder %v1181, 0.0
    %v1199 = vmul.f32 %v1119, 1.442695
    %v1200 = vpow.pop %v1199
    %v1201 = vmul.f32 %v1160, 1.442695
    %v1202 = vpow.pop %v1201
    %v1203 = vmul.f32 %v1122, 1.442695
    %v1204 = vpow.pop %v1203
    %v1205 = vmul.f32 %v1163, 1.442695
    %v1206 = vpow.pop %v1205
    %v1207 = vmul.f32 %v1125, 1.442695
    %v1208 = vpow.pop %v1207
    %v1209 = vmul.f32 %v1166, 1.442695
    %v1210 = vpow.pop %v1209
    %v1211 = vmul.f32 %v1128, 1.442695
    %v1212 = vpow.pop %v1211
    %v1213 = vmul.f32 %v1169, 1.442695
    %v1214 = vpow.pop %v1213
    %v1215 = vmul.f32 %v1131, 1.442695
    %v1216 = vpow.pop %v1215
    %v1217 = vmul.f32 %v1172, 1.442695
    %v1218 = vpow.pop %v1217
    %v1219 = vmul.f32 %v1134, 1.442695
    %v1220 = vpow.pop %v1219
    %v1221 = vmul.f32 %v1175, 1.442695
    %v1222 = vpow.pop %v1221
    %v1223 = vmul.f32 %v1137, 1.442695
    %v1224 = vpow.pop %v1223
    %v1225 = vmul.f32 %v1178, 1.442695
    %v1226 = vpow.pop %v1225
    %v1227 = vmul.f32 %v1140, 1.442695
    %v1228 = vpow.pop %v1227
    %v1229 = vmul.f32 %v1181, 1.442695
    %v1230 = vpow.pop %v1229
    %v1231 = vsub.f32 %v1200, 1.0
    %v1232 = vsub.f32 %v1202, 1.0
    %v1233 = vsub.f32 %v1204, 1.0
    %v1234 = vsub.f32 %v1206, 1.0
    %v1235 = vsub.f32 %v1208, 1.0
    %v1236 = vsub.f32 %v1210, 1.0
    %v1237 = vsub.f32 %v1212, 1.0
    %v1238 = vsub.f32 %v1214, 1.0
    %v1239 = vsub.f32 %v1216, 1.0
    %v1240 = vsub.f32 %v1218, 1.0
    %v1241 = vsub.f32 %v1220, 1.0
    %v1242 = vsub.f32 %v1222, 1.0
    %v1243 = vsub.f32 %v1224, 1.0
    %v1244 = vsub.f32 %v1226, 1.0
    %v1245 = vsub.f32 %v1228, 1.0
    %v1246 = vsub.f32 %v1230, 1.0
    %v1247 = vmul.f32 %v1231, 1.6732632
    %v1248 = vmul.f32 %v1232, 1.6732632
    %v1249 = vmul.f32 %v1233, 1.6732632
    %v1250 = vmul.f32 %v1234, 1.6732632
    %v1251 = vmul.f32 %v1235, 1.6732632
    %v1252 = vmul.f32 %v1236, 1.6732632
    %v1253 = vmul.f32 %v1237, 1.6732632
    %v1254 = vmul.f32 %v1238, 1.6732632
    %v1255 = vmul.f32 %v1239, 1.6732632
    %v1256 = vmul.f32 %v1240, 1.6732632
    %v1257 = vmul.f32 %v1241, 1.6732632
    %v1258 = vmul.f32 %v1242, 1.6732632
    %v1259 = vmul.f32 %v1243, 1.6732632
    %v1260 = vmul.f32 %v1244, 1.6732632
    %v1261 = vmul.f32 %v1245, 1.6732632
    %v1262 = vmul.f32 %v1246, 1.6732632
    %v1263 = vsel %vm1183, %v1119, %v1247
    %v1264 = vsel %vm1184, %v1160, %v1248
    %v1265 = vsel %vm1185, %v1122, %v1249
    %v1266 = vsel %vm1186, %v1163, %v1250
    %v1267 = vsel %vm1187, %v1125, %v1251
    %v1268 = vsel %vm1188, %v1166, %v1252
    %v1269 = vsel %vm1189, %v1128, %v1253
    %v1270 = vsel %vm1190, %v1169, %v1254
    %v1271 = vsel %vm1191, %v1131, %v1255
    %v1272 = vsel %vm1192, %v1172, %v1256
    %v1273 = vsel %vm1193, %v1134, %v1257
    %v1274 = vsel %vm1194, %v1175, %v1258
    %v1275 = vsel %vm1195, %v1137, %v1259
    %v1276 = vsel %vm1196, %v1178, %v1260
    %v1277 = vsel %vm1197, %v1140, %v1261
    %v1278 = vsel %vm1198, %v1181, %v1262
    %v1279 = vmul.f32 %v1263, 1.050701
    %v1280 = vmul.f32 %v1264, 1.050701
    %v1281 = vmul.f32 %v1265, 1.050701
    %v1282 = vmul.f32 %v1266, 1.050701
    %v1283 = vmul.f32 %v1267, 1.050701
    %v1284 = vmul.f32 %v1268, 1.050701
    %v1285 = vmul.f32 %v1269, 1.050701
    %v1286 = vmul.f32 %v1270, 1.050701
    %v1287 = vmul.f32 %v1271, 1.050701
    %v1288 = vmul.f32 %v1272, 1.050701
    %v1289 = vmul.f32 %v1273, 1.050701
    %v1290 = vmul.f32 %v1274, 1.050701
    %v1291 = vmul.f32 %v1275, 1.050701
    %v1292 = vmul.f32 %v1276, 1.050701
    %v1293 = vmul.f32 %v1277, 1.050701
    %v1294 = vmul.f32 %v1278, 1.050701
    %v1296 = vsel %vm858, %v521, 0
    %1298 = vmatpush.msra.mxu0 0.0
    %1299 = vmatpush.msra.mxu0 0.0
    %1300 = vmatpush.msra.mxu0 0.0
    %1301 = vmatpush.msra.mxu0 0.0
    %1302 = vmatpush.msra.mxu0 0.0
    %1303 = vmatpush.msra.mxu0 0.0
    %1304 = vmatpush.msra.mxu0 0.0
    %1305 = vmatpush.msra.mxu0 0.0
    %1306 = vmatpush.msra.mxu0 %v1293
    %1307 = vmatpush.msra.mxu0 %v1291
    %1308 = vmatpush.msra.mxu0 %v1289
    %1309 = vmatpush.msra.mxu0 %v1287
    %1310 = vmatpush.msra.mxu0 %v1285
    %1311 = vmatpush.msra.mxu0 %v1283
    %1312 = vmatpush.msra.mxu0 %v1281
    %1313 = vmatpush.msra.mxu0 %v1279
    %1314 = vmatmul.f32.gmra.mxu0 %v1296
    %v1315 = vpop.f32.mrf.mxu0
    %v1316 = vadd.f32 %v622, %v1315
    %1317 = vdwg.mxu0
    %1318 = vmatpush.msra.mxu0 0.0
    %1319 = vmatpush.msra.mxu0 0.0
    %1320 = vmatpush.msra.mxu0 0.0
    %1321 = vmatpush.msra.mxu0 0.0
    %1322 = vmatpush.msra.mxu0 0.0
    %1323 = vmatpush.msra.mxu0 0.0
    %1324 = vmatpush.msra.mxu0 0.0
    %1325 = vmatpush.msra.mxu0 0.0
    %1326 = vmatpush.msra.mxu0 %v1294
    %1327 = vmatpush.msra.mxu0 %v1292
    %1328 = vmatpush.msra.mxu0 %v1290
    %1329 = vmatpush.msra.mxu0 %v1288
    %1330 = vmatpush.msra.mxu0 %v1286
    %1331 = vmatpush.msra.mxu0 %v1284
    %1332 = vmatpush.msra.mxu0 %v1282
    %1333 = vmatpush.msra.mxu0 %v1280
    %1334 = vmatmul.f32.gmra.mxu0 %v1296
    %v1335 = vpop.f32.mrf.mxu0
    %v1336 = vadd.f32 %v622, %v1335
    %1337 = vdwg.mxu0
    %v1338 = vand.u32 2147483647, %v1316
    %v1339 = vand.u32 2147483647, %v1336
    %v1340 = vmul.f32 %v628, %v1338
    %v1341 = vmul.f32 %v628, %v1339
    %v1342 = vadd.f32 %v630, %v1340
    %v1343 = vadd.f32 %v631, %v1341
    %v1345 = vsel %vm657, %v1342, 0
    %v1348 = vsel %vm657, %v1343, 0
    %1350 = vmatpush.msra.mxu0 0.0
    %1351 = vmatpush.msra.mxu0 0.0
    %1352 = vmatpush.msra.mxu0 0.0
    %1353 = vmatpush.msra.mxu0 0.0
    %1354 = vmatpush.msra.mxu0 0.0
    %1355 = vmatpush.msra.mxu0 0.0
    %1356 = vmatpush.msra.mxu0 0.0
    %1357 = vmatpush.msra.mxu0 0.0
    %1358 = vmatpush.msra.mxu0 0.0
    %1359 = vmatpush.msra.mxu0 0.0
    %1360 = vmatpush.msra.mxu0 0.0
    %1361 = vmatpush.msra.mxu0 0.0
    %1362 = vmatpush.msra.mxu0 0.0
    %1363 = vmatpush.msra.mxu0 0.0
    %1364 = vmatpush.msra.mxu0 0.0
    %1365 = vmatpush.msra.mxu0 %v1345
    %1366 = vmatmul.f32.gmra.mxu0 %v634
    %v1367 = vpop.f32.mrf.mxu0
    %v1368 = vadd.f32 %v433, %v1367
    %1369 = vmatmul.f32.gmra.mxu0 %v637
    %v1370 = vpop.f32.mrf.mxu0
    %v1371 = vadd.f32 %v436, %v1370
    %1372 = vmatmul.f32.gmra.mxu0 %v640
    %v1373 = vpop.f32.mrf.mxu0
    %v1374 = vadd.f32 %v439, %v1373
    %1375 = vmatmul.f32.gmra.mxu0 %v643
    %v1376 = vpop.f32.mrf.mxu0
    %v1377 = vadd.f32 %v442, %v1376
    %1378 = vmatmul.f32.gmra.mxu0 %v646
    %v1379 = vpop.f32.mrf.mxu0
    %v1380 = vadd.f32 %v445, %v1379
    %1381 = vmatmul.f32.gmra.mxu0 %v649
    %v1382 = vpop.f32.mrf.mxu0
    %v1383 = vadd.f32 %v448, %v1382
    %1384 = vmatmul.f32.gmra.mxu0 %v652
    %v1385 = vpop.f32.mrf.mxu0
    %v1386 = vadd.f32 %v451, %v1385
    %1387 = vmatmul.f32.gmra.mxu0 %v655
    %v1388 = vpop.f32.mrf.mxu0
    %v1389 = vadd.f32 %v454, %v1388
    %1390 = vdwg.mxu0
    %1391 = vmatpush.msra.mxu0 0.0
    %1392 = vmatpush.msra.mxu0 0.0
    %1393 = vmatpush.msra.mxu0 0.0
    %1394 = vmatpush.msra.mxu0 0.0
    %1395 = vmatpush.msra.mxu0 0.0
    %1396 = vmatpush.msra.mxu0 0.0
    %1397 = vmatpush.msra.mxu0 0.0
    %1398 = vmatpush.msra.mxu0 0.0
    %1399 = vmatpush.msra.mxu0 0.0
    %1400 = vmatpush.msra.mxu0 0.0
    %1401 = vmatpush.msra.mxu0 0.0
    %1402 = vmatpush.msra.mxu0 0.0
    %1403 = vmatpush.msra.mxu0 0.0
    %1404 = vmatpush.msra.mxu0 0.0
    %1405 = vmatpush.msra.mxu0 0.0
    %1406 = vmatpush.msra.mxu0 %v1348
    %1407 = vmatmul.f32.gmra.mxu0 %v634
    %v1408 = vpop.f32.mrf.mxu0
    %v1409 = vadd.f32 %v474, %v1408
    %1410 = vmatmul.f32.gmra.mxu0 %v637
    %v1411 = vpop.f32.mrf.mxu0
    %v1412 = vadd.f32 %v477, %v1411
    %1413 = vmatmul.f32.gmra.mxu0 %v640
    %v1414 = vpop.f32.mrf.mxu0
    %v1415 = vadd.f32 %v480, %v1414
    %1416 = vmatmul.f32.gmra.mxu0 %v643
    %v1417 = vpop.f32.mrf.mxu0
    %v1418 = vadd.f32 %v483, %v1417
    %1419 = vmatmul.f32.gmra.mxu0 %v646
    %v1420 = vpop.f32.mrf.mxu0
    %v1421 = vadd.f32 %v486, %v1420
    %1422 = vmatmul.f32.gmra.mxu0 %v649
    %v1423 = vpop.f32.mrf.mxu0
    %v1424 = vadd.f32 %v489, %v1423
    %1425 = vmatmul.f32.gmra.mxu0 %v652
    %v1426 = vpop.f32.mrf.mxu0
    %v1427 = vadd.f32 %v492, %v1426
    %1428 = vmatmul.f32.gmra.mxu0 %v655
    %v1429 = vpop.f32.mrf.mxu0
    %v1430 = vadd.f32 %v495, %v1429
    %1431 = vdwg.mxu0
    %vm1432 = vcmp.gt.f32.partialorder %v1368, 0.0
    %vm1433 = vcmp.gt.f32.partialorder %v1409, 0.0
    %vm1434 = vcmp.gt.f32.partialorder %v1371, 0.0
    %vm1435 = vcmp.gt.f32.partialorder %v1412, 0.0
    %vm1436 = vcmp.gt.f32.partialorder %v1374, 0.0
    %vm1437 = vcmp.gt.f32.partialorder %v1415, 0.0
    %vm1438 = vcmp.gt.f32.partialorder %v1377, 0.0
    %vm1439 = vcmp.gt.f32.partialorder %v1418, 0.0
    %vm1440 = vcmp.gt.f32.partialorder %v1380, 0.0
    %vm1441 = vcmp.gt.f32.partialorder %v1421, 0.0
    %vm1442 = vcmp.gt.f32.partialorder %v1383, 0.0
    %vm1443 = vcmp.gt.f32.partialorder %v1424, 0.0
    %vm1444 = vcmp.gt.f32.partialorder %v1386, 0.0
    %vm1445 = vcmp.gt.f32.partialorder %v1427, 0.0
    %vm1446 = vcmp.gt.f32.partialorder %v1389, 0.0
    %vm1447 = vcmp.gt.f32.partialorder %v1430, 0.0
    %v1448 = vmul.f32 %v1368, 1.442695
    %v1449 = vpow.pop %v1448
    %v1450 = vmul.f32 %v1409, 1.442695
    %v1451 = vpow.pop %v1450
    %v1452 = vmul.f32 %v1371, 1.442695
    %v1453 = vpow.pop %v1452
    %v1454 = vmul.f32 %v1412, 1.442695
    %v1455 = vpow.pop %v1454
    %v1456 = vmul.f32 %v1374, 1.442695
    %v1457 = vpow.pop %v1456
    %v1458 = vmul.f32 %v1415, 1.442695
    %v1459 = vpow.pop %v1458
    %v1460 = vmul.f32 %v1377, 1.442695
    %v1461 = vpow.pop %v1460
    %v1462 = vmul.f32 %v1418, 1.442695
    %v1463 = vpow.pop %v1462
    %v1464 = vmul.f32 %v1380, 1.442695
    %v1465 = vpow.pop %v1464
    %v1466 = vmul.f32 %v1421, 1.442695
    %v1467 = vpow.pop %v1466
    %v1468 = vmul.f32 %v1383, 1.442695
    %v1469 = vpow.pop %v1468
    %v1470 = vmul.f32 %v1424, 1.442695
    %v1471 = vpow.pop %v1470
    %v1472 = vmul.f32 %v1386, 1.442695
    %v1473 = vpow.pop %v1472
    %v1474 = vmul.f32 %v1427, 1.442695
    %v1475 = vpow.pop %v1474
    %v1476 = vmul.f32 %v1389, 1.442695
    %v1477 = vpow.pop %v1476
    %v1478 = vmul.f32 %v1430, 1.442695
    %v1479 = vpow.pop %v1478
    %v1480 = vsub.f32 %v1449, 1.0
    %v1481 = vsub.f32 %v1451, 1.0
    %v1482 = vsub.f32 %v1453, 1.0
    %v1483 = vsub.f32 %v1455, 1.0
    %v1484 = vsub.f32 %v1457, 1.0
    %v1485 = vsub.f32 %v1459, 1.0
    %v1486 = vsub.f32 %v1461, 1.0
    %v1487 = vsub.f32 %v1463, 1.0
    %v1488 = vsub.f32 %v1465, 1.0
    %v1489 = vsub.f32 %v1467, 1.0
    %v1490 = vsub.f32 %v1469, 1.0
    %v1491 = vsub.f32 %v1471, 1.0
    %v1492 = vsub.f32 %v1473, 1.0
    %v1493 = vsub.f32 %v1475, 1.0
    %v1494 = vsub.f32 %v1477, 1.0
    %v1495 = vsub.f32 %v1479, 1.0
    %v1496 = vmul.f32 %v1480, 1.6732632
    %v1497 = vmul.f32 %v1481, 1.6732632
    %v1498 = vmul.f32 %v1482, 1.6732632
    %v1499 = vmul.f32 %v1483, 1.6732632
    %v1500 = vmul.f32 %v1484, 1.6732632
    %v1501 = vmul.f32 %v1485, 1.6732632
    %v1502 = vmul.f32 %v1486, 1.6732632
    %v1503 = vmul.f32 %v1487, 1.6732632
    %v1504 = vmul.f32 %v1488, 1.6732632
    %v1505 = vmul.f32 %v1489, 1.6732632
    %v1506 = vmul.f32 %v1490, 1.6732632
    %v1507 = vmul.f32 %v1491, 1.6732632
    %v1508 = vmul.f32 %v1492, 1.6732632
    %v1509 = vmul.f32 %v1493, 1.6732632
    %v1510 = vmul.f32 %v1494, 1.6732632
    %v1511 = vmul.f32 %v1495, 1.6732632
    %v1512 = vsel %vm1432, %v1368, %v1496
    %v1513 = vsel %vm1433, %v1409, %v1497
    %v1514 = vsel %vm1434, %v1371, %v1498
    %v1515 = vsel %vm1435, %v1412, %v1499
    %v1516 = vsel %vm1436, %v1374, %v1500
    %v1517 = vsel %vm1437, %v1415, %v1501
    %v1518 = vsel %vm1438, %v1377, %v1502
    %v1519 = vsel %vm1439, %v1418, %v1503
    %v1520 = vsel %vm1440, %v1380, %v1504
    %v1521 = vsel %vm1441, %v1421, %v1505
    %v1522 = vsel %vm1442, %v1383, %v1506
    %v1523 = vsel %vm1443, %v1424, %v1507
    %v1524 = vsel %vm1444, %v1386, %v1508
    %v1525 = vsel %vm1445, %v1427, %v1509
    %v1526 = vsel %vm1446, %v1389, %v1510
    %v1527 = vsel %vm1447, %v1430, %v1511
    %v1528 = vmul.f32 %v1512, 1.050701
    %v1529 = vmul.f32 %v1513, 1.050701
    %v1530 = vmul.f32 %v1514, 1.050701
    %v1531 = vmul.f32 %v1515, 1.050701
    %v1532 = vmul.f32 %v1516, 1.050701
    %v1533 = vmul.f32 %v1517, 1.050701
    %v1534 = vmul.f32 %v1518, 1.050701
    %v1535 = vmul.f32 %v1519, 1.050701
    %v1536 = vmul.f32 %v1520, 1.050701
    %v1537 = vmul.f32 %v1521, 1.050701
    %v1538 = vmul.f32 %v1522, 1.050701
    %v1539 = vmul.f32 %v1523, 1.050701
    %v1540 = vmul.f32 %v1524, 1.050701
    %v1541 = vmul.f32 %v1525, 1.050701
    %v1542 = vmul.f32 %v1526, 1.050701
    %v1543 = vmul.f32 %v1527, 1.050701
    %1544 = vmatpush.msra.mxu0 0.0
    %1545 = vmatpush.msra.mxu0 0.0
    %1546 = vmatpush.msra.mxu0 0.0
    %1547 = vmatpush.msra.mxu0 0.0
    %1548 = vmatpush.msra.mxu0 0.0
    %1549 = vmatpush.msra.mxu0 0.0
    %1550 = vmatpush.msra.mxu0 0.0
    %1551 = vmatpush.msra.mxu0 0.0
    %1552 = vmatpush.msra.mxu0 %v1542
    %1553 = vmatpush.msra.mxu0 %v1540
    %1554 = vmatpush.msra.mxu0 %v1538
    %1555 = vmatpush.msra.mxu0 %v1536
    %1556 = vmatpush.msra.mxu0 %v1534
    %1557 = vmatpush.msra.mxu0 %v1532
    %1558 = vmatpush.msra.mxu0 %v1530
    %1559 = vmatpush.msra.mxu0 %v1528
    %1560 = vmatmul.f32.gmra.mxu0 %v860
    %v1561 = vpop.f32.mrf.mxu0
    %v1562 = vadd.f32 %v533, %v1561
    %1563 = vmatmul.f32.gmra.mxu0 %v863
    %v1564 = vpop.f32.mrf.mxu0
    %v1565 = vadd.f32 %v538, %v1564
    %1566 = vmatmul.f32.gmra.mxu0 %v866
    %v1567 = vpop.f32.mrf.mxu0
    %v1568 = vadd.f32 %v543, %v1567
    %1569 = vmatmul.f32.gmra.mxu0 %v869
    %v1570 = vpop.f32.mrf.mxu0
    %v1571 = vadd.f32 %v548, %v1570
    %1572 = vmatmul.f32.gmra.mxu0 %v872
    %v1573 = vpop.f32.mrf.mxu0
    %v1574 = vadd.f32 %v553, %v1573
    %1575 = vmatmul.f32.gmra.mxu0 %v875
    %v1576 = vpop.f32.mrf.mxu0
    %v1577 = vadd.f32 %v558, %v1576
    %1578 = vmatmul.f32.gmra.mxu0 %v878
    %v1579 = vpop.f32.mrf.mxu0
    %v1580 = vadd.f32 %v563, %v1579
    %1581 = vmatmul.f32.gmra.mxu0 %v881
    %v1582 = vpop.f32.mrf.mxu0
    %v1583 = vadd.f32 %v568, %v1582
    %1584 = vdwg.mxu0
    %1585 = vmatpush.msra.mxu0 0.0
    %1586 = vmatpush.msra.mxu0 0.0
    %1587 = vmatpush.msra.mxu0 0.0
    %1588 = vmatpush.msra.mxu0 0.0
    %1589 = vmatpush.msra.mxu0 0.0
    %1590 = vmatpush.msra.mxu0 0.0
    %1591 = vmatpush.msra.mxu0 0.0
    %1592 = vmatpush.msra.mxu0 0.0
    %1593 = vmatpush.msra.mxu0 %v1543
    %1594 = vmatpush.msra.mxu0 %v1541
    %1595 = vmatpush.msra.mxu0 %v1539
    %1596 = vmatpush.msra.mxu0 %v1537
    %1597 = vmatpush.msra.mxu0 %v1535
    %1598 = vmatpush.msra.mxu0 %v1533
    %1599 = vmatpush.msra.mxu0 %v1531
    %1600 = vmatpush.msra.mxu0 %v1529
    %1601 = vmatmul.f32.gmra.mxu0 %v860
    %v1602 = vpop.f32.mrf.mxu0
    %v1603 = vadd.f32 %v533, %v1602
    %1604 = vmatmul.f32.gmra.mxu0 %v863
    %v1605 = vpop.f32.mrf.mxu0
    %v1606 = vadd.f32 %v538, %v1605
    %1607 = vmatmul.f32.gmra.mxu0 %v866
    %v1608 = vpop.f32.mrf.mxu0
    %v1609 = vadd.f32 %v543, %v1608
    %1610 = vmatmul.f32.gmra.mxu0 %v869
    %v1611 = vpop.f32.mrf.mxu0
    %v1612 = vadd.f32 %v548, %v1611
    %1613 = vmatmul.f32.gmra.mxu0 %v872
    %v1614 = vpop.f32.mrf.mxu0
    %v1615 = vadd.f32 %v553, %v1614
    %1616 = vmatmul.f32.gmra.mxu0 %v875
    %v1617 = vpop.f32.mrf.mxu0
    %v1618 = vadd.f32 %v558, %v1617
    %1619 = vmatmul.f32.gmra.mxu0 %v878
    %v1620 = vpop.f32.mrf.mxu0
    %v1621 = vadd.f32 %v563, %v1620
    %1622 = vmatmul.f32.gmra.mxu0 %v881
    %v1623 = vpop.f32.mrf.mxu0
    %v1624 = vadd.f32 %v568, %v1623
    %1625 = vdwg.mxu0
    %vm1626 = vcmp.gt.f32.partialorder %v1562, 0.0
    %vm1627 = vcmp.gt.f32.partialorder %v1603, 0.0
    %vm1628 = vcmp.gt.f32.partialorder %v1565, 0.0
    %vm1629 = vcmp.gt.f32.partialorder %v1606, 0.0
    %vm1630 = vcmp.gt.f32.partialorder %v1568, 0.0
    %vm1631 = vcmp.gt.f32.partialorder %v1609, 0.0
    %vm1632 = vcmp.gt.f32.partialorder %v1571, 0.0
    %vm1633 = vcmp.gt.f32.partialorder %v1612, 0.0
    %vm1634 = vcmp.gt.f32.partialorder %v1574, 0.0
    %vm1635 = vcmp.gt.f32.partialorder %v1615, 0.0
    %vm1636 = vcmp.gt.f32.partialorder %v1577, 0.0
    %vm1637 = vcmp.gt.f32.partialorder %v1618, 0.0
    %vm1638 = vcmp.gt.f32.partialorder %v1580, 0.0
    %vm1639 = vcmp.gt.f32.partialorder %v1621, 0.0
    %vm1640 = vcmp.gt.f32.partialorder %v1583, 0.0
    %vm1641 = vcmp.gt.f32.partialorder %v1624, 0.0
    %v1642 = vmul.f32 %v1562, 1.442695
    %v1643 = vpow.pop %v1642
    %v1644 = vmul.f32 %v1603, 1.442695
    %v1645 = vpow.pop %v1644
    %v1646 = vmul.f32 %v1565, 1.442695
    %v1647 = vpow.pop %v1646
    %v1648 = vmul.f32 %v1606, 1.442695
    %v1649 = vpow.pop %v1648
    %v1650 = vmul.f32 %v1568, 1.442695
    %v1651 = vpow.pop %v1650
    %v1652 = vmul.f32 %v1609, 1.442695
    %v1653 = vpow.pop %v1652
    %v1654 = vmul.f32 %v1571, 1.442695
    %v1655 = vpow.pop %v1654
    %v1656 = vmul.f32 %v1612, 1.442695
    %v1657 = vpow.pop %v1656
    %v1658 = vmul.f32 %v1574, 1.442695
    %v1659 = vpow.pop %v1658
    %v1660 = vmul.f32 %v1615, 1.442695
    %v1661 = vpow.pop %v1660
    %v1662 = vmul.f32 %v1577, 1.442695
    %v1663 = vpow.pop %v1662
    %v1664 = vmul.f32 %v1618, 1.442695
    %v1665 = vpow.pop %v1664
    %v1666 = vmul.f32 %v1580, 1.442695
    %v1667 = vpow.pop %v1666
    %v1668 = vmul.f32 %v1621, 1.442695
    %v1669 = vpow.pop %v1668
    %v1670 = vmul.f32 %v1583, 1.442695
    %v1671 = vpow.pop %v1670
    %v1672 = vmul.f32 %v1624, 1.442695
    %v1673 = vpow.pop %v1672
    %v1674 = vsub.f32 %v1643, 1.0
    %v1675 = vsub.f32 %v1645, 1.0
    %v1676 = vsub.f32 %v1647, 1.0
    %v1677 = vsub.f32 %v1649, 1.0
    %v1678 = vsub.f32 %v1651, 1.0
    %v1679 = vsub.f32 %v1653, 1.0
    %v1680 = vsub.f32 %v1655, 1.0
    %v1681 = vsub.f32 %v1657, 1.0
    %v1682 = vsub.f32 %v1659, 1.0
    %v1683 = vsub.f32 %v1661, 1.0
    %v1684 = vsub.f32 %v1663, 1.0
    %v1685 = vsub.f32 %v1665, 1.0
    %v1686 = vsub.f32 %v1667, 1.0
    %v1687 = vsub.f32 %v1669, 1.0
    %v1688 = vsub.f32 %v1671, 1.0
    %v1689 = vsub.f32 %v1673, 1.0
    %v1690 = vmul.f32 %v1674, 1.6732632
    %v1691 = vmul.f32 %v1675, 1.6732632
    %v1692 = vmul.f32 %v1676, 1.6732632
    %v1693 = vmul.f32 %v1677, 1.6732632
    %v1694 = vmul.f32 %v1678, 1.6732632
    %v1695 = vmul.f32 %v1679, 1.6732632
    %v1696 = vmul.f32 %v1680, 1.6732632
    %v1697 = vmul.f32 %v1681, 1.6732632
    %v1698 = vmul.f32 %v1682, 1.6732632
    %v1699 = vmul.f32 %v1683, 1.6732632
    %v1700 = vmul.f32 %v1684, 1.6732632
    %v1701 = vmul.f32 %v1685, 1.6732632
    %v1702 = vmul.f32 %v1686, 1.6732632
    %v1703 = vmul.f32 %v1687, 1.6732632
    %v1704 = vmul.f32 %v1688, 1.6732632
    %v1705 = vmul.f32 %v1689, 1.6732632
    %v1706 = vsel %vm1626, %v1562, %v1690
    %v1707 = vsel %vm1627, %v1603, %v1691
    %v1708 = vsel %vm1628, %v1565, %v1692
    %v1709 = vsel %vm1629, %v1606, %v1693
    %v1710 = vsel %vm1630, %v1568, %v1694
    %v1711 = vsel %vm1631, %v1609, %v1695
    %v1712 = vsel %vm1632, %v1571, %v1696
    %v1713 = vsel %vm1633, %v1612, %v1697
    %v1714 = vsel %vm1634, %v1574, %v1698
    %v1715 = vsel %vm1635, %v1615, %v1699
    %v1716 = vsel %vm1636, %v1577, %v1700
    %v1717 = vsel %vm1637, %v1618, %v1701
    %v1718 = vsel %vm1638, %v1580, %v1702
    %v1719 = vsel %vm1639, %v1621, %v1703
    %v1720 = vsel %vm1640, %v1583, %v1704
    %v1721 = vsel %vm1641, %v1624, %v1705
    %v1722 = vmul.f32 %v1706, 1.050701
    %v1723 = vmul.f32 %v1707, 1.050701
    %v1724 = vmul.f32 %v1708, 1.050701
    %v1725 = vmul.f32 %v1709, 1.050701
    %v1726 = vmul.f32 %v1710, 1.050701
    %v1727 = vmul.f32 %v1711, 1.050701
    %v1728 = vmul.f32 %v1712, 1.050701
    %v1729 = vmul.f32 %v1713, 1.050701
    %v1730 = vmul.f32 %v1714, 1.050701
    %v1731 = vmul.f32 %v1715, 1.050701
    %v1732 = vmul.f32 %v1716, 1.050701
    %v1733 = vmul.f32 %v1717, 1.050701
    %v1734 = vmul.f32 %v1718, 1.050701
    %v1735 = vmul.f32 %v1719, 1.050701
    %v1736 = vmul.f32 %v1720, 1.050701
    %v1737 = vmul.f32 %v1721, 1.050701
    %1738 = vmatpush.msra.mxu0 0.0
    %1739 = vmatpush.msra.mxu0 0.0
    %1740 = vmatpush.msra.mxu0 0.0
    %1741 = vmatpush.msra.mxu0 0.0
    %1742 = vmatpush.msra.mxu0 0.0
    %1743 = vmatpush.msra.mxu0 0.0
    %1744 = vmatpush.msra.mxu0 0.0
    %1745 = vmatpush.msra.mxu0 0.0
    %1746 = vmatpush.msra.mxu0 %v1736
    %1747 = vmatpush.msra.mxu0 %v1734
    %1748 = vmatpush.msra.mxu0 %v1732
    %1749 = vmatpush.msra.mxu0 %v1730
    %1750 = vmatpush.msra.mxu0 %v1728
    %1751 = vmatpush.msra.mxu0 %v1726
    %1752 = vmatpush.msra.mxu0 %v1724
    %1753 = vmatpush.msra.mxu0 %v1722
    %1754 = vmatmul.f32.gmra.mxu0 %v1078
    %v1755 = vpop.f32.mrf.mxu0
    %v1756 = vadd.f32 %v581, %v1755
    %1757 = vmatmul.f32.gmra.mxu0 %v1081
    %v1758 = vpop.f32.mrf.mxu0
    %v1759 = vadd.f32 %v586, %v1758
    %1760 = vmatmul.f32.gmra.mxu0 %v1084
    %v1761 = vpop.f32.mrf.mxu0
    %v1762 = vadd.f32 %v591, %v1761
    %1763 = vmatmul.f32.gmra.mxu0 %v1087
    %v1764 = vpop.f32.mrf.mxu0
    %v1765 = vadd.f32 %v596, %v1764
    %1766 = vmatmul.f32.gmra.mxu0 %v1090
    %v1767 = vpop.f32.mrf.mxu0
    %v1768 = vadd.f32 %v601, %v1767
    %1769 = vmatmul.f32.gmra.mxu0 %v1093
    %v1770 = vpop.f32.mrf.mxu0
    %v1771 = vadd.f32 %v606, %v1770
    %1772 = vmatmul.f32.gmra.mxu0 %v1096
    %v1773 = vpop.f32.mrf.mxu0
    %v1774 = vadd.f32 %v611, %v1773
    %1775 = vmatmul.f32.gmra.mxu0 %v1099
    %v1776 = vpop.f32.mrf.mxu0
    %v1777 = vadd.f32 %v616, %v1776
    %1778 = vdwg.mxu0
    %1779 = vmatpush.msra.mxu0 0.0
    %1780 = vmatpush.msra.mxu0 0.0
    %1781 = vmatpush.msra.mxu0 0.0
    %1782 = vmatpush.msra.mxu0 0.0
    %1783 = vmatpush.msra.mxu0 0.0
    %1784 = vmatpush.msra.mxu0 0.0
    %1785 = vmatpush.msra.mxu0 0.0
    %1786 = vmatpush.msra.mxu0 0.0
    %1787 = vmatpush.msra.mxu0 %v1737
    %1788 = vmatpush.msra.mxu0 %v1735
    %1789 = vmatpush.msra.mxu0 %v1733
    %1790 = vmatpush.msra.mxu0 %v1731
    %1791 = vmatpush.msra.mxu0 %v1729
    %1792 = vmatpush.msra.mxu0 %v1727
    %1793 = vmatpush.msra.mxu0 %v1725
    %1794 = vmatpush.msra.mxu0 %v1723
    %1795 = vmatmul.f32.gmra.mxu0 %v1078
    %v1796 = vpop.f32.mrf.mxu0
    %v1797 = vadd.f32 %v581, %v1796
    %1798 = vmatmul.f32.gmra.mxu0 %v1081
    %v1799 = vpop.f32.mrf.mxu0
    %v1800 = vadd.f32 %v586, %v1799
    %1801 = vmatmul.f32.gmra.mxu0 %v1084
    %v1802 = vpop.f32.mrf.mxu0
    %v1803 = vadd.f32 %v591, %v1802
    %1804 = vmatmul.f32.gmra.mxu0 %v1087
    %v1805 = vpop.f32.mrf.mxu0
    %v1806 = vadd.f32 %v596, %v1805
    %1807 = vmatmul.f32.gmra.mxu0 %v1090
    %v1808 = vpop.f32.mrf.mxu0
    %v1809 = vadd.f32 %v601, %v1808
    %1810 = vmatmul.f32.gmra.mxu0 %v1093
    %v1811 = vpop.f32.mrf.mxu0
    %v1812 = vadd.f32 %v606, %v1811
    %1813 = vmatmul.f32.gmra.mxu0 %v1096
    %v1814 = vpop.f32.mrf.mxu0
    %v1815 = vadd.f32 %v611, %v1814
    %1816 = vmatmul.f32.gmra.mxu0 %v1099
    %v1817 = vpop.f32.mrf.mxu0
    %v1818 = vadd.f32 %v616, %v1817
    %1819 = vdwg.mxu0
    %vm1820 = vcmp.gt.f32.partialorder %v1756, 0.0
    %vm1821 = vcmp.gt.f32.partialorder %v1797, 0.0
    %vm1822 = vcmp.gt.f32.partialorder %v1759, 0.0
    %vm1823 = vcmp.gt.f32.partialorder %v1800, 0.0
    %vm1824 = vcmp.gt.f32.partialorder %v1762, 0.0
    %vm1825 = vcmp.gt.f32.partialorder %v1803, 0.0
    %vm1826 = vcmp.gt.f32.partialorder %v1765, 0.0
    %vm1827 = vcmp.gt.f32.partialorder %v1806, 0.0
    %vm1828 = vcmp.gt.f32.partialorder %v1768, 0.0
    %vm1829 = vcmp.gt.f32.partialorder %v1809, 0.0
    %vm1830 = vcmp.gt.f32.partialorder %v1771, 0.0
    %vm1831 = vcmp.gt.f32.partialorder %v1812, 0.0
    %vm1832 = vcmp.gt.f32.partialorder %v1774, 0.0
    %vm1833 = vcmp.gt.f32.partialorder %v1815, 0.0
    %vm1834 = vcmp.gt.f32.partialorder %v1777, 0.0
    %vm1835 = vcmp.gt.f32.partialorder %v1818, 0.0
    %v1836 = vmul.f32 %v1756, 1.442695
    %v1837 = vpow.pop %v1836
    %v1838 = vmul.f32 %v1797, 1.442695
    %v1839 = vpow.pop %v1838
    %v1840 = vmul.f32 %v1759, 1.442695
    %v1841 = vpow.pop %v1840
    %v1842 = vmul.f32 %v1800, 1.442695
    %v1843 = vpow.pop %v1842
    %v1844 = vmul.f32 %v1762, 1.442695
    %v1845 = vpow.pop %v1844
    %v1846 = vmul.f32 %v1803, 1.442695
    %v1847 = vpow.pop %v1846
    %v1848 = vmul.f32 %v1765, 1.442695
    %v1849 = vpow.pop %v1848
    %v1850 = vmul.f32 %v1806, 1.442695
    %v1851 = vpow.pop %v1850
    %v1852 = vmul.f32 %v1768, 1.442695
    %v1853 = vpow.pop %v1852
    %v1854 = vmul.f32 %v1809, 1.442695
    %v1855 = vpow.pop %v1854
    %v1856 = vmul.f32 %v1771, 1.442695
    %v1857 = vpow.pop %v1856
    %v1858 = vmul.f32 %v1812, 1.442695
    %v1859 = vpow.pop %v1858
    %v1860 = vmul.f32 %v1774, 1.442695
    %v1861 = vpow.pop %v1860
    %v1862 = vmul.f32 %v1815, 1.442695
    %v1863 = vpow.pop %v1862
    %v1864 = vmul.f32 %v1777, 1.442695
    %v1865 = vpow.pop %v1864
    %v1866 = vmul.f32 %v1818, 1.442695
    %v1867 = vpow.pop %v1866
    %v1868 = vsub.f32 %v1837, 1.0
    %v1869 = vsub.f32 %v1839, 1.0
    %v1870 = vsub.f32 %v1841, 1.0
    %v1871 = vsub.f32 %v1843, 1.0
    %v1872 = vsub.f32 %v1845, 1.0
    %v1873 = vsub.f32 %v1847, 1.0
    %v1874 = vsub.f32 %v1849, 1.0
    %v1875 = vsub.f32 %v1851, 1.0
    %v1876 = vsub.f32 %v1853, 1.0
    %v1877 = vsub.f32 %v1855, 1.0
    %v1878 = vsub.f32 %v1857, 1.0
    %v1879 = vsub.f32 %v1859, 1.0
    %v1880 = vsub.f32 %v1861, 1.0
    %v1881 = vsub.f32 %v1863, 1.0
    %v1882 = vsub.f32 %v1865, 1.0
    %v1883 = vsub.f32 %v1867, 1.0
    %v1884 = vmul.f32 %v1868, 1.6732632
    %v1885 = vmul.f32 %v1869, 1.6732632
    %v1886 = vmul.f32 %v1870, 1.6732632
    %v1887 = vmul.f32 %v1871, 1.6732632
    %v1888 = vmul.f32 %v1872, 1.6732632
    %v1889 = vmul.f32 %v1873, 1.6732632
    %v1890 = vmul.f32 %v1874, 1.6732632
    %v1891 = vmul.f32 %v1875, 1.6732632
    %v1892 = vmul.f32 %v1876, 1.6732632
    %v1893 = vmul.f32 %v1877, 1.6732632
    %v1894 = vmul.f32 %v1878, 1.6732632
    %v1895 = vmul.f32 %v1879, 1.6732632
    %v1896 = vmul.f32 %v1880, 1.6732632
    %v1897 = vmul.f32 %v1881, 1.6732632
    %v1898 = vmul.f32 %v1882, 1.6732632
    %v1899 = vmul.f32 %v1883, 1.6732632
    %v1900 = vsel %vm1820, %v1756, %v1884
    %v1901 = vsel %vm1821, %v1797, %v1885
    %v1902 = vsel %vm1822, %v1759, %v1886
    %v1903 = vsel %vm1823, %v1800, %v1887
    %v1904 = vsel %vm1824, %v1762, %v1888
    %v1905 = vsel %vm1825, %v1803, %v1889
    %v1906 = vsel %vm1826, %v1765, %v1890
    %v1907 = vsel %vm1827, %v1806, %v1891
    %v1908 = vsel %vm1828, %v1768, %v1892
    %v1909 = vsel %vm1829, %v1809, %v1893
    %v1910 = vsel %vm1830, %v1771, %v1894
    %v1911 = vsel %vm1831, %v1812, %v1895
    %v1912 = vsel %vm1832, %v1774, %v1896
    %v1913 = vsel %vm1833, %v1815, %v1897
    %v1914 = vsel %vm1834, %v1777, %v1898
    %v1915 = vsel %vm1835, %v1818, %v1899
    %v1916 = vmul.f32 %v1900, 1.050701
    %v1917 = vmul.f32 %v1901, 1.050701
    %v1918 = vmul.f32 %v1902, 1.050701
    %v1919 = vmul.f32 %v1903, 1.050701
    %v1920 = vmul.f32 %v1904, 1.050701
    %v1921 = vmul.f32 %v1905, 1.050701
    %v1922 = vmul.f32 %v1906, 1.050701
    %v1923 = vmul.f32 %v1907, 1.050701
    %v1924 = vmul.f32 %v1908, 1.050701
    %v1925 = vmul.f32 %v1909, 1.050701
    %v1926 = vmul.f32 %v1910, 1.050701
    %v1927 = vmul.f32 %v1911, 1.050701
    %v1928 = vmul.f32 %v1912, 1.050701
    %v1929 = vmul.f32 %v1913, 1.050701
    %v1930 = vmul.f32 %v1914, 1.050701
    %v1931 = vmul.f32 %v1915, 1.050701
    %1932 = vmatpush.msra.mxu0 0.0
    %1933 = vmatpush.msra.mxu0 0.0
    %1934 = vmatpush.msra.mxu0 0.0
    %1935 = vmatpush.msra.mxu0 0.0
    %1936 = vmatpush.msra.mxu0 0.0
    %1937 = vmatpush.msra.mxu0 0.0
    %1938 = vmatpush.msra.mxu0 0.0
    %1939 = vmatpush.msra.mxu0 0.0
    %1940 = vmatpush.msra.mxu0 %v1930
    %1941 = vmatpush.msra.mxu0 %v1928
    %1942 = vmatpush.msra.mxu0 %v1926
    %1943 = vmatpush.msra.mxu0 %v1924
    %1944 = vmatpush.msra.mxu0 %v1922
    %1945 = vmatpush.msra.mxu0 %v1920
    %1946 = vmatpush.msra.mxu0 %v1918
    %1947 = vmatpush.msra.mxu0 %v1916
    %1948 = vmatmul.f32.gmra.mxu0 %v1296
    %v1949 = vpop.f32.mrf.mxu0
    %v1950 = vadd.f32 %v622, %v1949
    %1951 = vdwg.mxu0
    %1952 = vmatpush.msra.mxu0 0.0
    %1953 = vmatpush.msra.mxu0 0.0
    %1954 = vmatpush.msra.mxu0 0.0
    %1955 = vmatpush.msra.mxu0 0.0
    %1956 = vmatpush.msra.mxu0 0.0
    %1957 = vmatpush.msra.mxu0 0.0
    %1958 = vmatpush.msra.mxu0 0.0
    %1959 = vmatpush.msra.mxu0 0.0
    %1960 = vmatpush.msra.mxu0 %v1931
    %1961 = vmatpush.msra.mxu0 %v1929
    %1962 = vmatpush.msra.mxu0 %v1927
    %1963 = vmatpush.msra.mxu0 %v1925
    %1964 = vmatpush.msra.mxu0 %v1923
    %1965 = vmatpush.msra.mxu0 %v1921
    %1966 = vmatpush.msra.mxu0 %v1919
    %1967 = vmatpush.msra.mxu0 %v1917
    %1968 = vmatmul.f32.gmra.mxu0 %v1296
    %v1969 = vpop.f32.mrf.mxu0
    %v1970 = vadd.f32 %v622, %v1969
    %1971 = vdwg.mxu0
    %v1972 = vand.u32 2147483647, %v1950
    %v1973 = vand.u32 2147483647, %v1970
    %v1974 = vmul.f32 %v628, %v1972
    %v1975 = vmul.f32 %v628, %v1973
    %v1976 = vadd.f32 %v1342, %v1974
    %v1977 = vadd.f32 %v1343, %v1975
    %v1979 = vsel %vm657, %v1976, 0
    %v1982 = vsel %vm657, %v1977, 0
    %1984 = vmatpush.msra.mxu0 0.0
    %1985 = vmatpush.msra.mxu0 0.0
    %1986 = vmatpush.msra.mxu0 0.0
    %1987 = vmatpush.msra.mxu0 0.0
    %1988 = vmatpush.msra.mxu0 0.0
    %1989 = vmatpush.msra.mxu0 0.0
    %1990 = vmatpush.msra.mxu0 0.0
    %1991 = vmatpush.msra.mxu0 0.0
    %1992 = vmatpush.msra.mxu0 0.0
    %1993 = vmatpush.msra.mxu0 0.0
    %1994 = vmatpush.msra.mxu0 0.0
    %1995 = vmatpush.msra.mxu0 0.0
    %1996 = vmatpush.msra.mxu0 0.0
    %1997 = vmatpush.msra.mxu0 0.0
    %1998 = vmatpush.msra.mxu0 0.0
    %1999 = vmatpush.msra.mxu0 %v1979
    %2000 = vmatmul.f32.gmra.mxu0 %v634
    %v2001 = vpop.f32.mrf.mxu0
    %v2002 = vadd.f32 %v433, %v2001
    %2003 = vmatmul.f32.gmra.mxu0 %v637
    %v2004 = vpop.f32.mrf.mxu0
    %v2005 = vadd.f32 %v436, %v2004
    %2006 = vmatmul.f32.gmra.mxu0 %v640
    %v2007 = vpop.f32.mrf.mxu0
    %v2008 = vadd.f32 %v439, %v2007
    %2009 = vmatmul.f32.gmra.mxu0 %v643
    %v2010 = vpop.f32.mrf.mxu0
    %v2011 = vadd.f32 %v442, %v2010
    %2012 = vmatmul.f32.gmra.mxu0 %v646
    %v2013 = vpop.f32.mrf.mxu0
    %v2014 = vadd.f32 %v445, %v2013
    %2015 = vmatmul.f32.gmra.mxu0 %v649
    %v2016 = vpop.f32.mrf.mxu0
    %v2017 = vadd.f32 %v448, %v2016
    %2018 = vmatmul.f32.gmra.mxu0 %v652
    %v2019 = vpop.f32.mrf.mxu0
    %v2020 = vadd.f32 %v451, %v2019
    %2021 = vmatmul.f32.gmra.mxu0 %v655
    %v2022 = vpop.f32.mrf.mxu0
    %v2023 = vadd.f32 %v454, %v2022
    %2024 = vdwg.mxu0
    %2025 = vmatpush.msra.mxu0 0.0
    %2026 = vmatpush.msra.mxu0 0.0
    %2027 = vmatpush.msra.mxu0 0.0
    %2028 = vmatpush.msra.mxu0 0.0
    %2029 = vmatpush.msra.mxu0 0.0
    %2030 = vmatpush.msra.mxu0 0.0
    %2031 = vmatpush.msra.mxu0 0.0
    %2032 = vmatpush.msra.mxu0 0.0
    %2033 = vmatpush.msra.mxu0 0.0
    %2034 = vmatpush.msra.mxu0 0.0
    %2035 = vmatpush.msra.mxu0 0.0
    %2036 = vmatpush.msra.mxu0 0.0
    %2037 = vmatpush.msra.mxu0 0.0
    %2038 = vmatpush.msra.mxu0 0.0
    %2039 = vmatpush.msra.mxu0 0.0
    %2040 = vmatpush.msra.mxu0 %v1982
    %2041 = vmatmul.f32.gmra.mxu0 %v634
    %v2042 = vpop.f32.mrf.mxu0
    %v2043 = vadd.f32 %v474, %v2042
    %2044 = vmatmul.f32.gmra.mxu0 %v637
    %v2045 = vpop.f32.mrf.mxu0
    %v2046 = vadd.f32 %v477, %v2045
    %2047 = vmatmul.f32.gmra.mxu0 %v640
    %v2048 = vpop.f32.mrf.mxu0
    %v2049 = vadd.f32 %v480, %v2048
    %2050 = vmatmul.f32.gmra.mxu0 %v643
    %v2051 = vpop.f32.mrf.mxu0
    %v2052 = vadd.f32 %v483, %v2051
    %2053 = vmatmul.f32.gmra.mxu0 %v646
    %v2054 = vpop.f32.mrf.mxu0
    %v2055 = vadd.f32 %v486, %v2054
    %2056 = vmatmul.f32.gmra.mxu0 %v649
    %v2057 = vpop.f32.mrf.mxu0
    %v2058 = vadd.f32 %v489, %v2057
    %2059 = vmatmul.f32.gmra.mxu0 %v652
    %v2060 = vpop.f32.mrf.mxu0
    %v2061 = vadd.f32 %v492, %v2060
    %2062 = vmatmul.f32.gmra.mxu0 %v655
    %v2063 = vpop.f32.mrf.mxu0
    %v2064 = vadd.f32 %v495, %v2063
    %2065 = vdwg.mxu0
    %vm2066 = vcmp.gt.f32.partialorder %v2002, 0.0
    %vm2067 = vcmp.gt.f32.partialorder %v2043, 0.0
    %vm2068 = vcmp.gt.f32.partialorder %v2005, 0.0
    %vm2069 = vcmp.gt.f32.partialorder %v2046, 0.0
    %vm2070 = vcmp.gt.f32.partialorder %v2008, 0.0
    %vm2071 = vcmp.gt.f32.partialorder %v2049, 0.0
    %vm2072 = vcmp.gt.f32.partialorder %v2011, 0.0
    %vm2073 = vcmp.gt.f32.partialorder %v2052, 0.0
    %vm2074 = vcmp.gt.f32.partialorder %v2014, 0.0
    %vm2075 = vcmp.gt.f32.partialorder %v2055, 0.0
    %vm2076 = vcmp.gt.f32.partialorder %v2017, 0.0
    %vm2077 = vcmp.gt.f32.partialorder %v2058, 0.0
    %vm2078 = vcmp.gt.f32.partialorder %v2020, 0.0
    %vm2079 = vcmp.gt.f32.partialorder %v2061, 0.0
    %vm2080 = vcmp.gt.f32.partialorder %v2023, 0.0
    %vm2081 = vcmp.gt.f32.partialorder %v2064, 0.0
    %v2082 = vmul.f32 %v2002, 1.442695
    %v2083 = vpow.pop %v2082
    %v2084 = vmul.f32 %v2043, 1.442695
    %v2085 = vpow.pop %v2084
    %v2086 = vmul.f32 %v2005, 1.442695
    %v2087 = vpow.pop %v2086
    %v2088 = vmul.f32 %v2046, 1.442695
    %v2089 = vpow.pop %v2088
    %v2090 = vmul.f32 %v2008, 1.442695
    %v2091 = vpow.pop %v2090
    %v2092 = vmul.f32 %v2049, 1.442695
    %v2093 = vpow.pop %v2092
    %v2094 = vmul.f32 %v2011, 1.442695
    %v2095 = vpow.pop %v2094
    %v2096 = vmul.f32 %v2052, 1.442695
    %v2097 = vpow.pop %v2096
    %v2098 = vmul.f32 %v2014, 1.442695
    %v2099 = vpow.pop %v2098
    %v2100 = vmul.f32 %v2055, 1.442695
    %v2101 = vpow.pop %v2100
    %v2102 = vmul.f32 %v2017, 1.442695
    %v2103 = vpow.pop %v2102
    %v2104 = vmul.f32 %v2058, 1.442695
    %v2105 = vpow.pop %v2104
    %v2106 = vmul.f32 %v2020, 1.442695
    %v2107 = vpow.pop %v2106
    %v2108 = vmul.f32 %v2061, 1.442695
    %v2109 = vpow.pop %v2108
    %v2110 = vmul.f32 %v2023, 1.442695
    %v2111 = vpow.pop %v2110
    %v2112 = vmul.f32 %v2064, 1.442695
    %v2113 = vpow.pop %v2112
    %v2114 = vsub.f32 %v2083, 1.0
    %v2115 = vsub.f32 %v2085, 1.0
    %v2116 = vsub.f32 %v2087, 1.0
    %v2117 = vsub.f32 %v2089, 1.0
    %v2118 = vsub.f32 %v2091, 1.0
    %v2119 = vsub.f32 %v2093, 1.0
    %v2120 = vsub.f32 %v2095, 1.0
    %v2121 = vsub.f32 %v2097, 1.0
    %v2122 = vsub.f32 %v2099, 1.0
    %v2123 = vsub.f32 %v2101, 1.0
    %v2124 = vsub.f32 %v2103, 1.0
    %v2125 = vsub.f32 %v2105, 1.0
    %v2126 = vsub.f32 %v2107, 1.0
    %v2127 = vsub.f32 %v2109, 1.0
    %v2128 = vsub.f32 %v2111, 1.0
    %v2129 = vsub.f32 %v2113, 1.0
    %v2130 = vmul.f32 %v2114, 1.6732632
    %v2131 = vmul.f32 %v2115, 1.6732632
    %v2132 = vmul.f32 %v2116, 1.6732632
    %v2133 = vmul.f32 %v2117, 1.6732632
    %v2134 = vmul.f32 %v2118, 1.6732632
    %v2135 = vmul.f32 %v2119, 1.6732632
    %v2136 = vmul.f32 %v2120, 1.6732632
    %v2137 = vmul.f32 %v2121, 1.6732632
    %v2138 = vmul.f32 %v2122, 1.6732632
    %v2139 = vmul.f32 %v2123, 1.6732632
    %v2140 = vmul.f32 %v2124, 1.6732632
    %v2141 = vmul.f32 %v2125, 1.6732632
    %v2142 = vmul.f32 %v2126, 1.6732632
    %v2143 = vmul.f32 %v2127, 1.6732632
    %v2144 = vmul.f32 %v2128, 1.6732632
    %v2145 = vmul.f32 %v2129, 1.6732632
    %v2146 = vsel %vm2066, %v2002, %v2130
    %v2147 = vsel %vm2067, %v2043, %v2131
    %v2148 = vsel %vm2068, %v2005, %v2132
    %v2149 = vsel %vm2069, %v2046, %v2133
    %v2150 = vsel %vm2070, %v2008, %v2134
    %v2151 = vsel %vm2071, %v2049, %v2135
    %v2152 = vsel %vm2072, %v2011, %v2136
    %v2153 = vsel %vm2073, %v2052, %v2137
    %v2154 = vsel %vm2074, %v2014, %v2138
    %v2155 = vsel %vm2075, %v2055, %v2139
    %v2156 = vsel %vm2076, %v2017, %v2140
    %v2157 = vsel %vm2077, %v2058, %v2141
    %v2158 = vsel %vm2078, %v2020, %v2142
    %v2159 = vsel %vm2079, %v2061, %v2143
    %v2160 = vsel %vm2080, %v2023, %v2144
    %v2161 = vsel %vm2081, %v2064, %v2145
    %v2162 = vmul.f32 %v2146, 1.050701
    %v2163 = vmul.f32 %v2147, 1.050701
    %v2164 = vmul.f32 %v2148, 1.050701
    %v2165 = vmul.f32 %v2149, 1.050701
    %v2166 = vmul.f32 %v2150, 1.050701
    %v2167 = vmul.f32 %v2151, 1.050701
    %v2168 = vmul.f32 %v2152, 1.050701
    %v2169 = vmul.f32 %v2153, 1.050701
    %v2170 = vmul.f32 %v2154, 1.050701
    %v2171 = vmul.f32 %v2155, 1.050701
    %v2172 = vmul.f32 %v2156, 1.050701
    %v2173 = vmul.f32 %v2157, 1.050701
    %v2174 = vmul.f32 %v2158, 1.050701
    %v2175 = vmul.f32 %v2159, 1.050701
    %v2176 = vmul.f32 %v2160, 1.050701
    %v2177 = vmul.f32 %v2161, 1.050701
    %2178 = vmatpush.msra.mxu0 0.0
    %2179 = vmatpush.msra.mxu0 0.0
    %2180 = vmatpush.msra.mxu0 0.0
    %2181 = vmatpush.msra.mxu0 0.0
    %2182 = vmatpush.msra.mxu0 0.0
    %2183 = vmatpush.msra.mxu0 0.0
    %2184 = vmatpush.msra.mxu0 0.0
    %2185 = vmatpush.msra.mxu0 0.0
    %2186 = vmatpush.msra.mxu0 %v2176
    %2187 = vmatpush.msra.mxu0 %v2174
    %2188 = vmatpush.msra.mxu0 %v2172
    %2189 = vmatpush.msra.mxu0 %v2170
    %2190 = vmatpush.msra.mxu0 %v2168
    %2191 = vmatpush.msra.mxu0 %v2166
    %2192 = vmatpush.msra.mxu0 %v2164
    %2193 = vmatpush.msra.mxu0 %v2162
    %2194 = vmatmul.f32.gmra.mxu0 %v860
    %v2195 = vpop.f32.mrf.mxu0
    %v2196 = vadd.f32 %v533, %v2195
    %2197 = vmatmul.f32.gmra.mxu0 %v863
    %v2198 = vpop.f32.mrf.mxu0
    %v2199 = vadd.f32 %v538, %v2198
    %2200 = vmatmul.f32.gmra.mxu0 %v866
    %v2201 = vpop.f32.mrf.mxu0
    %v2202 = vadd.f32 %v543, %v2201
    %2203 = vmatmul.f32.gmra.mxu0 %v869
    %v2204 = vpop.f32.mrf.mxu0
    %v2205 = vadd.f32 %v548, %v2204
    %2206 = vmatmul.f32.gmra.mxu0 %v872
    %v2207 = vpop.f32.mrf.mxu0
    %v2208 = vadd.f32 %v553, %v2207
    %2209 = vmatmul.f32.gmra.mxu0 %v875
    %v2210 = vpop.f32.mrf.mxu0
    %v2211 = vadd.f32 %v558, %v2210
    %2212 = vmatmul.f32.gmra.mxu0 %v878
    %v2213 = vpop.f32.mrf.mxu0
    %v2214 = vadd.f32 %v563, %v2213
    %2215 = vmatmul.f32.gmra.mxu0 %v881
    %v2216 = vpop.f32.mrf.mxu0
    %v2217 = vadd.f32 %v568, %v2216
    %2218 = vdwg.mxu0
    %2219 = vmatpush.msra.mxu0 0.0
    %2220 = vmatpush.msra.mxu0 0.0
    %2221 = vmatpush.msra.mxu0 0.0
    %2222 = vmatpush.msra.mxu0 0.0
    %2223 = vmatpush.msra.mxu0 0.0
    %2224 = vmatpush.msra.mxu0 0.0
    %2225 = vmatpush.msra.mxu0 0.0
    %2226 = vmatpush.msra.mxu0 0.0
    %2227 = vmatpush.msra.mxu0 %v2177
    %2228 = vmatpush.msra.mxu0 %v2175
    %2229 = vmatpush.msra.mxu0 %v2173
    %2230 = vmatpush.msra.mxu0 %v2171
    %2231 = vmatpush.msra.mxu0 %v2169
    %2232 = vmatpush.msra.mxu0 %v2167
    %2233 = vmatpush.msra.mxu0 %v2165
    %2234 = vmatpush.msra.mxu0 %v2163
    %2235 = vmatmul.f32.gmra.mxu0 %v860
    %v2236 = vpop.f32.mrf.mxu0
    %v2237 = vadd.f32 %v533, %v2236
    %2238 = vmatmul.f32.gmra.mxu0 %v863
    %v2239 = vpop.f32.mrf.mxu0
    %v2240 = vadd.f32 %v538, %v2239
    %2241 = vmatmul.f32.gmra.mxu0 %v866
    %v2242 = vpop.f32.mrf.mxu0
    %v2243 = vadd.f32 %v543, %v2242
    %2244 = vmatmul.f32.gmra.mxu0 %v869
    %v2245 = vpop.f32.mrf.mxu0
    %v2246 = vadd.f32 %v548, %v2245
    %2247 = vmatmul.f32.gmra.mxu0 %v872
    %v2248 = vpop.f32.mrf.mxu0
    %v2249 = vadd.f32 %v553, %v2248
    %2250 = vmatmul.f32.gmra.mxu0 %v875
    %v2251 = vpop.f32.mrf.mxu0
    %v2252 = vadd.f32 %v558, %v2251
    %2253 = vmatmul.f32.gmra.mxu0 %v878
    %v2254 = vpop.f32.mrf.mxu0
    %v2255 = vadd.f32 %v563, %v2254
    %2256 = vmatmul.f32.gmra.mxu0 %v881
    %v2257 = vpop.f32.mrf.mxu0
    %v2258 = vadd.f32 %v568, %v2257
    %2259 = vdwg.mxu0
    %vm2260 = vcmp.gt.f32.partialorder %v2196, 0.0
    %vm2261 = vcmp.gt.f32.partialorder %v2237, 0.0
    %vm2262 = vcmp.gt.f32.partialorder %v2199, 0.0
    %vm2263 = vcmp.gt.f32.partialorder %v2240, 0.0
    %vm2264 = vcmp.gt.f32.partialorder %v2202, 0.0
    %vm2265 = vcmp.gt.f32.partialorder %v2243, 0.0
    %vm2266 = vcmp.gt.f32.partialorder %v2205, 0.0
    %vm2267 = vcmp.gt.f32.partialorder %v2246, 0.0
    %vm2268 = vcmp.gt.f32.partialorder %v2208, 0.0
    %vm2269 = vcmp.gt.f32.partialorder %v2249, 0.0
    %vm2270 = vcmp.gt.f32.partialorder %v2211, 0.0
    %vm2271 = vcmp.gt.f32.partialorder %v2252, 0.0
    %vm2272 = vcmp.gt.f32.partialorder %v2214, 0.0
    %vm2273 = vcmp.gt.f32.partialorder %v2255, 0.0
    %vm2274 = vcmp.gt.f32.partialorder %v2217, 0.0
    %vm2275 = vcmp.gt.f32.partialorder %v2258, 0.0
    %v2276 = vmul.f32 %v2196, 1.442695
    %v2277 = vpow.pop %v2276
    %v2278 = vmul.f32 %v2237, 1.442695
    %v2279 = vpow.pop %v2278
    %v2280 = vmul.f32 %v2199, 1.442695
    %v2281 = vpow.pop %v2280
    %v2282 = vmul.f32 %v2240, 1.442695
    %v2283 = vpow.pop %v2282
    %v2284 = vmul.f32 %v2202, 1.442695
    %v2285 = vpow.pop %v2284
    %v2286 = vmul.f32 %v2243, 1.442695
    %v2287 = vpow.pop %v2286
    %v2288 = vmul.f32 %v2205, 1.442695
    %v2289 = vpow.pop %v2288
    %v2290 = vmul.f32 %v2246, 1.442695
    %v2291 = vpow.pop %v2290
    %v2292 = vmul.f32 %v2208, 1.442695
    %v2293 = vpow.pop %v2292
    %v2294 = vmul.f32 %v2249, 1.442695
    %v2295 = vpow.pop %v2294
    %v2296 = vmul.f32 %v2211, 1.442695
    %v2297 = vpow.pop %v2296
    %v2298 = vmul.f32 %v2252, 1.442695
    %v2299 = vpow.pop %v2298
    %v2300 = vmul.f32 %v2214, 1.442695
    %v2301 = vpow.pop %v2300
    %v2302 = vmul.f32 %v2255, 1.442695
    %v2303 = vpow.pop %v2302
    %v2304 = vmul.f32 %v2217, 1.442695
    %v2305 = vpow.pop %v2304
    %v2306 = vmul.f32 %v2258, 1.442695
    %v2307 = vpow.pop %v2306
    %v2308 = vsub.f32 %v2277, 1.0
    %v2309 = vsub.f32 %v2279, 1.0
    %v2310 = vsub.f32 %v2281, 1.0
    %v2311 = vsub.f32 %v2283, 1.0
    %v2312 = vsub.f32 %v2285, 1.0
    %v2313 = vsub.f32 %v2287, 1.0
    %v2314 = vsub.f32 %v2289, 1.0
    %v2315 = vsub.f32 %v2291, 1.0
    %v2316 = vsub.f32 %v2293, 1.0
    %v2317 = vsub.f32 %v2295, 1.0
    %v2318 = vsub.f32 %v2297, 1.0
    %v2319 = vsub.f32 %v2299, 1.0
    %v2320 = vsub.f32 %v2301, 1.0
    %v2321 = vsub.f32 %v2303, 1.0
    %v2322 = vsub.f32 %v2305, 1.0
    %v2323 = vsub.f32 %v2307, 1.0
    %v2324 = vmul.f32 %v2308, 1.6732632
    %v2325 = vmul.f32 %v2309, 1.6732632
    %v2326 = vmul.f32 %v2310, 1.6732632
    %v2327 = vmul.f32 %v2311, 1.6732632
    %v2328 = vmul.f32 %v2312, 1.6732632
    %v2329 = vmul.f32 %v2313, 1.6732632
    %v2330 = vmul.f32 %v2314, 1.6732632
    %v2331 = vmul.f32 %v2315, 1.6732632
    %v2332 = vmul.f32 %v2316, 1.6732632
    %v2333 = vmul.f32 %v2317, 1.6732632
    %v2334 = vmul.f32 %v2318, 1.6732632
    %v2335 = vmul.f32 %v2319, 1.6732632
    %v2336 = vmul.f32 %v2320, 1.6732632
    %v2337 = vmul.f32 %v2321, 1.6732632
    %v2338 = vmul.f32 %v2322, 1.6732632
    %v2339 = vmul.f32 %v2323, 1.6732632
    %v2340 = vsel %vm2260, %v2196, %v2324
    %v2341 = vsel %vm2261, %v2237, %v2325
    %v2342 = vsel %vm2262, %v2199, %v2326
    %v2343 = vsel %vm2263, %v2240, %v2327
    %v2344 = vsel %vm2264, %v2202, %v2328
    %v2345 = vsel %vm2265, %v2243, %v2329
    %v2346 = vsel %vm2266, %v2205, %v2330
    %v2347 = vsel %vm2267, %v2246, %v2331
    %v2348 = vsel %vm2268, %v2208, %v2332
    %v2349 = vsel %vm2269, %v2249, %v2333
    %v2350 = vsel %vm2270, %v2211, %v2334
    %v2351 = vsel %vm2271, %v2252, %v2335
    %v2352 = vsel %vm2272, %v2214, %v2336
    %v2353 = vsel %vm2273, %v2255, %v2337
    %v2354 = vsel %vm2274, %v2217, %v2338
    %v2355 = vsel %vm2275, %v2258, %v2339
    %v2356 = vmul.f32 %v2340, 1.050701
    %v2357 = vmul.f32 %v2341, 1.050701
    %v2358 = vmul.f32 %v2342, 1.050701
    %v2359 = vmul.f32 %v2343, 1.050701
    %v2360 = vmul.f32 %v2344, 1.050701
    %v2361 = vmul.f32 %v2345, 1.050701
    %v2362 = vmul.f32 %v2346, 1.050701
    %v2363 = vmul.f32 %v2347, 1.050701
    %v2364 = vmul.f32 %v2348, 1.050701
    %v2365 = vmul.f32 %v2349, 1.050701
    %v2366 = vmul.f32 %v2350, 1.050701
    %v2367 = vmul.f32 %v2351, 1.050701
    %v2368 = vmul.f32 %v2352, 1.050701
    %v2369 = vmul.f32 %v2353, 1.050701
    %v2370 = vmul.f32 %v2354, 1.050701
    %v2371 = vmul.f32 %v2355, 1.050701
    %2372 = vmatpush.msra.mxu0 0.0
    %2373 = vmatpush.msra.mxu0 0.0
    %2374 = vmatpush.msra.mxu0 0.0
    %2375 = vmatpush.msra.mxu0 0.0
    %2376 = vmatpush.msra.mxu0 0.0
    %2377 = vmatpush.msra.mxu0 0.0
    %2378 = vmatpush.msra.mxu0 0.0
    %2379 = vmatpush.msra.mxu0 0.0
    %2380 = vmatpush.msra.mxu0 %v2370
    %2381 = vmatpush.msra.mxu0 %v2368
    %2382 = vmatpush.msra.mxu0 %v2366
    %2383 = vmatpush.msra.mxu0 %v2364
    %2384 = vmatpush.msra.mxu0 %v2362
    %2385 = vmatpush.msra.mxu0 %v2360
    %2386 = vmatpush.msra.mxu0 %v2358
    %2387 = vmatpush.msra.mxu0 %v2356
    %2388 = vmatmul.f32.gmra.mxu0 %v1078
    %v2389 = vpop.f32.mrf.mxu0
    %v2390 = vadd.f32 %v581, %v2389
    %2391 = vmatmul.f32.gmra.mxu0 %v1081
    %v2392 = vpop.f32.mrf.mxu0
    %v2393 = vadd.f32 %v586, %v2392
    %2394 = vmatmul.f32.gmra.mxu0 %v1084
    %v2395 = vpop.f32.mrf.mxu0
    %v2396 = vadd.f32 %v591, %v2395
    %2397 = vmatmul.f32.gmra.mxu0 %v1087
    %v2398 = vpop.f32.mrf.mxu0
    %v2399 = vadd.f32 %v596, %v2398
    %2400 = vmatmul.f32.gmra.mxu0 %v1090
    %v2401 = vpop.f32.mrf.mxu0
    %v2402 = vadd.f32 %v601, %v2401
    %2403 = vmatmul.f32.gmra.mxu0 %v1093
    %v2404 = vpop.f32.mrf.mxu0
    %v2405 = vadd.f32 %v606, %v2404
    %2406 = vmatmul.f32.gmra.mxu0 %v1096
    %v2407 = vpop.f32.mrf.mxu0
    %v2408 = vadd.f32 %v611, %v2407
    %2409 = vmatmul.f32.gmra.mxu0 %v1099
    %v2410 = vpop.f32.mrf.mxu0
    %v2411 = vadd.f32 %v616, %v2410
    %2412 = vdwg.mxu0
    %2413 = vmatpush.msra.mxu0 0.0
    %2414 = vmatpush.msra.mxu0 0.0
    %2415 = vmatpush.msra.mxu0 0.0
    %2416 = vmatpush.msra.mxu0 0.0
    %2417 = vmatpush.msra.mxu0 0.0
    %2418 = vmatpush.msra.mxu0 0.0
    %2419 = vmatpush.msra.mxu0 0.0
    %2420 = vmatpush.msra.mxu0 0.0
    %2421 = vmatpush.msra.mxu0 %v2371
    %2422 = vmatpush.msra.mxu0 %v2369
    %2423 = vmatpush.msra.mxu0 %v2367
    %2424 = vmatpush.msra.mxu0 %v2365
    %2425 = vmatpush.msra.mxu0 %v2363
    %2426 = vmatpush.msra.mxu0 %v2361
    %2427 = vmatpush.msra.mxu0 %v2359
    %2428 = vmatpush.msra.mxu0 %v2357
    %2429 = vmatmul.f32.gmra.mxu0 %v1078
    %v2430 = vpop.f32.mrf.mxu0
    %v2431 = vadd.f32 %v581, %v2430
    %2432 = vmatmul.f32.gmra.mxu0 %v1081
    %v2433 = vpop.f32.mrf.mxu0
    %v2434 = vadd.f32 %v586, %v2433
    %2435 = vmatmul.f32.gmra.mxu0 %v1084
    %v2436 = vpop.f32.mrf.mxu0
    %v2437 = vadd.f32 %v591, %v2436
    %2438 = vmatmul.f32.gmra.mxu0 %v1087
    %v2439 = vpop.f32.mrf.mxu0
    %v2440 = vadd.f32 %v596, %v2439
    %2441 = vmatmul.f32.gmra.mxu0 %v1090
    %v2442 = vpop.f32.mrf.mxu0
    %v2443 = vadd.f32 %v601, %v2442
    %2444 = vmatmul.f32.gmra.mxu0 %v1093
    %v2445 = vpop.f32.mrf.mxu0
    %v2446 = vadd.f32 %v606, %v2445
    %2447 = vmatmul.f32.gmra.mxu0 %v1096
    %v2448 = vpop.f32.mrf.mxu0
    %v2449 = vadd.f32 %v611, %v2448
    %2450 = vmatmul.f32.gmra.mxu0 %v1099
    %v2451 = vpop.f32.mrf.mxu0
    %v2452 = vadd.f32 %v616, %v2451
    %2453 = vdwg.mxu0
    %vm2454 = vcmp.gt.f32.partialorder %v2390, 0.0
    %vm2455 = vcmp.gt.f32.partialorder %v2431, 0.0
    %vm2456 = vcmp.gt.f32.partialorder %v2393, 0.0
    %vm2457 = vcmp.gt.f32.partialorder %v2434, 0.0
    %vm2458 = vcmp.gt.f32.partialorder %v2396, 0.0
    %vm2459 = vcmp.gt.f32.partialorder %v2437, 0.0
    %vm2460 = vcmp.gt.f32.partialorder %v2399, 0.0
    %vm2461 = vcmp.gt.f32.partialorder %v2440, 0.0
    %vm2462 = vcmp.gt.f32.partialorder %v2402, 0.0
    %vm2463 = vcmp.gt.f32.partialorder %v2443, 0.0
    %vm2464 = vcmp.gt.f32.partialorder %v2405, 0.0
    %vm2465 = vcmp.gt.f32.partialorder %v2446, 0.0
    %vm2466 = vcmp.gt.f32.partialorder %v2408, 0.0
    %vm2467 = vcmp.gt.f32.partialorder %v2449, 0.0
    %vm2468 = vcmp.gt.f32.partialorder %v2411, 0.0
    %vm2469 = vcmp.gt.f32.partialorder %v2452, 0.0
    %v2470 = vmul.f32 %v2390, 1.442695
    %v2471 = vpow.pop %v2470
    %v2472 = vmul.f32 %v2431, 1.442695
    %v2473 = vpow.pop %v2472
    %v2474 = vmul.f32 %v2393, 1.442695
    %v2475 = vpow.pop %v2474
    %v2476 = vmul.f32 %v2434, 1.442695
    %v2477 = vpow.pop %v2476
    %v2478 = vmul.f32 %v2396, 1.442695
    %v2479 = vpow.pop %v2478
    %v2480 = vmul.f32 %v2437, 1.442695
    %v2481 = vpow.pop %v2480
    %v2482 = vmul.f32 %v2399, 1.442695
    %v2483 = vpow.pop %v2482
    %v2484 = vmul.f32 %v2440, 1.442695
    %v2485 = vpow.pop %v2484
    %v2486 = vmul.f32 %v2402, 1.442695
    %v2487 = vpow.pop %v2486
    %v2488 = vmul.f32 %v2443, 1.442695
    %v2489 = vpow.pop %v2488
    %v2490 = vmul.f32 %v2405, 1.442695
    %v2491 = vpow.pop %v2490
    %v2492 = vmul.f32 %v2446, 1.442695
    %v2493 = vpow.pop %v2492
    %v2494 = vmul.f32 %v2408, 1.442695
    %v2495 = vpow.pop %v2494
    %v2496 = vmul.f32 %v2449, 1.442695
    %v2497 = vpow.pop %v2496
    %v2498 = vmul.f32 %v2411, 1.442695
    %v2499 = vpow.pop %v2498
    %v2500 = vmul.f32 %v2452, 1.442695
    %v2501 = vpow.pop %v2500
    %v2502 = vsub.f32 %v2471, 1.0
    %v2503 = vsub.f32 %v2473, 1.0
    %v2504 = vsub.f32 %v2475, 1.0
    %v2505 = vsub.f32 %v2477, 1.0
    %v2506 = vsub.f32 %v2479, 1.0
    %v2507 = vsub.f32 %v2481, 1.0
    %v2508 = vsub.f32 %v2483, 1.0
    %v2509 = vsub.f32 %v2485, 1.0
    %v2510 = vsub.f32 %v2487, 1.0
    %v2511 = vsub.f32 %v2489, 1.0
    %v2512 = vsub.f32 %v2491, 1.0
    %v2513 = vsub.f32 %v2493, 1.0
    %v2514 = vsub.f32 %v2495, 1.0
    %v2515 = vsub.f32 %v2497, 1.0
    %v2516 = vsub.f32 %v2499, 1.0
    %v2517 = vsub.f32 %v2501, 1.0
    %v2518 = vmul.f32 %v2502, 1.6732632
    %v2519 = vmul.f32 %v2503, 1.6732632
    %v2520 = vmul.f32 %v2504, 1.6732632
    %v2521 = vmul.f32 %v2505, 1.6732632
    %v2522 = vmul.f32 %v2506, 1.6732632
    %v2523 = vmul.f32 %v2507, 1.6732632
    %v2524 = vmul.f32 %v2508, 1.6732632
    %v2525 = vmul.f32 %v2509, 1.6732632
    %v2526 = vmul.f32 %v2510, 1.6732632
    %v2527 = vmul.f32 %v2511, 1.6732632
    %v2528 = vmul.f32 %v2512, 1.6732632
    %v2529 = vmul.f32 %v2513, 1.6732632
    %v2530 = vmul.f32 %v2514, 1.6732632
    %v2531 = vmul.f32 %v2515, 1.6732632
    %v2532 = vmul.f32 %v2516, 1.6732632
    %v2533 = vmul.f32 %v2517, 1.6732632
    %v2534 = vsel %vm2454, %v2390, %v2518
    %v2535 = vsel %vm2455, %v2431, %v2519
    %v2536 = vsel %vm2456, %v2393, %v2520
    %v2537 = vsel %vm2457, %v2434, %v2521
    %v2538 = vsel %vm2458, %v2396, %v2522
    %v2539 = vsel %vm2459, %v2437, %v2523
    %v2540 = vsel %vm2460, %v2399, %v2524
    %v2541 = vsel %vm2461, %v2440, %v2525
    %v2542 = vsel %vm2462, %v2402, %v2526
    %v2543 = vsel %vm2463, %v2443, %v2527
    %v2544 = vsel %vm2464, %v2405, %v2528
    %v2545 = vsel %vm2465, %v2446, %v2529
    %v2546 = vsel %vm2466, %v2408, %v2530
    %v2547 = vsel %vm2467, %v2449, %v2531
    %v2548 = vsel %vm2468, %v2411, %v2532
    %v2549 = vsel %vm2469, %v2452, %v2533
    %v2550 = vmul.f32 %v2534, 1.050701
    %v2551 = vmul.f32 %v2535, 1.050701
    %v2552 = vmul.f32 %v2536, 1.050701
    %v2553 = vmul.f32 %v2537, 1.050701
    %v2554 = vmul.f32 %v2538, 1.050701
    %v2555 = vmul.f32 %v2539, 1.050701
    %v2556 = vmul.f32 %v2540, 1.050701
    %v2557 = vmul.f32 %v2541, 1.050701
    %v2558 = vmul.f32 %v2542, 1.050701
    %v2559 = vmul.f32 %v2543, 1.050701
    %v2560 = vmul.f32 %v2544, 1.050701
    %v2561 = vmul.f32 %v2545, 1.050701
    %v2562 = vmul.f32 %v2546, 1.050701
    %v2563 = vmul.f32 %v2547, 1.050701
    %v2564 = vmul.f32 %v2548, 1.050701
    %v2565 = vmul.f32 %v2549, 1.050701
    %2566 = vmatpush.msra.mxu0 0.0
    %2567 = vmatpush.msra.mxu0 0.0
    %2568 = vmatpush.msra.mxu0 0.0
    %2569 = vmatpush.msra.mxu0 0.0
    %2570 = vmatpush.msra.mxu0 0.0
    %2571 = vmatpush.msra.mxu0 0.0
    %2572 = vmatpush.msra.mxu0 0.0
    %2573 = vmatpush.msra.mxu0 0.0
    %2574 = vmatpush.msra.mxu0 %v2564
    %2575 = vmatpush.msra.mxu0 %v2562
    %2576 = vmatpush.msra.mxu0 %v2560
    %2577 = vmatpush.msra.mxu0 %v2558
    %2578 = vmatpush.msra.mxu0 %v2556
    %2579 = vmatpush.msra.mxu0 %v2554
    %2580 = vmatpush.msra.mxu0 %v2552
    %2581 = vmatpush.msra.mxu0 %v2550
    %2582 = vmatmul.f32.gmra.mxu0 %v1296
    %v2583 = vpop.f32.mrf.mxu0
    %v2584 = vadd.f32 %v622, %v2583
    %2585 = vdwg.mxu0
    %2586 = vmatpush.msra.mxu0 0.0
    %2587 = vmatpush.msra.mxu0 0.0
    %2588 = vmatpush.msra.mxu0 0.0
    %2589 = vmatpush.msra.mxu0 0.0
    %2590 = vmatpush.msra.mxu0 0.0
    %2591 = vmatpush.msra.mxu0 0.0
    %2592 = vmatpush.msra.mxu0 0.0
    %2593 = vmatpush.msra.mxu0 0.0
    %2594 = vmatpush.msra.mxu0 %v2565
    %2595 = vmatpush.msra.mxu0 %v2563
    %2596 = vmatpush.msra.mxu0 %v2561
    %2597 = vmatpush.msra.mxu0 %v2559
    %2598 = vmatpush.msra.mxu0 %v2557
    %2599 = vmatpush.msra.mxu0 %v2555
    %2600 = vmatpush.msra.mxu0 %v2553
    %2601 = vmatpush.msra.mxu0 %v2551
    %2602 = vmatmul.f32.gmra.mxu0 %v1296
    %v2603 = vpop.f32.mrf.mxu0
    %v2604 = vadd.f32 %v622, %v2603
    %2605 = vdwg.mxu0
    %v2606 = vand.u32 2147483647, %v2584
    %v2607 = vand.u32 2147483647, %v2604
    %v2608 = vmul.f32 %v628, %v2606
    %v2609 = vmul.f32 %v628, %v2607
    %v2610 = vadd.f32 %v1976, %v2608
    %v2611 = vadd.f32 %v1977, %v2609
    %v2613 = vsel %vm657, %v2610, 0
    %v2616 = vsel %vm657, %v2611, 0
    %2618 = vmatpush.msra.mxu0 0.0
    %2619 = vmatpush.msra.mxu0 0.0
    %2620 = vmatpush.msra.mxu0 0.0
    %2621 = vmatpush.msra.mxu0 0.0
    %2622 = vmatpush.msra.mxu0 0.0
    %2623 = vmatpush.msra.mxu0 0.0
    %2624 = vmatpush.msra.mxu0 0.0
    %2625 = vmatpush.msra.mxu0 0.0
    %2626 = vmatpush.msra.mxu0 0.0
    %2627 = vmatpush.msra.mxu0 0.0
    %2628 = vmatpush.msra.mxu0 0.0
    %2629 = vmatpush.msra.mxu0 0.0
    %2630 = vmatpush.msra.mxu0 0.0
    %2631 = vmatpush.msra.mxu0 0.0
    %2632 = vmatpush.msra.mxu0 0.0
    %2633 = vmatpush.msra.mxu0 %v2613
    %2634 = vmatmul.f32.gmra.mxu0 %v634
    %v2635 = vpop.f32.mrf.mxu0
    %v2636 = vadd.f32 %v433, %v2635
    %2637 = vmatmul.f32.gmra.mxu0 %v637
    %v2638 = vpop.f32.mrf.mxu0
    %v2639 = vadd.f32 %v436, %v2638
    %2640 = vmatmul.f32.gmra.mxu0 %v640
    %v2641 = vpop.f32.mrf.mxu0
    %v2642 = vadd.f32 %v439, %v2641
    %2643 = vmatmul.f32.gmra.mxu0 %v643
    %v2644 = vpop.f32.mrf.mxu0
    %v2645 = vadd.f32 %v442, %v2644
    %2646 = vmatmul.f32.gmra.mxu0 %v646
    %v2647 = vpop.f32.mrf.mxu0
    %v2648 = vadd.f32 %v445, %v2647
    %2649 = vmatmul.f32.gmra.mxu0 %v649
    %v2650 = vpop.f32.mrf.mxu0
    %v2651 = vadd.f32 %v448, %v2650
    %2652 = vmatmul.f32.gmra.mxu0 %v652
    %v2653 = vpop.f32.mrf.mxu0
    %v2654 = vadd.f32 %v451, %v2653
    %2655 = vmatmul.f32.gmra.mxu0 %v655
    %v2656 = vpop.f32.mrf.mxu0
    %v2657 = vadd.f32 %v454, %v2656
    %2658 = vdwg.mxu0
    %2659 = vmatpush.msra.mxu0 0.0
    %2660 = vmatpush.msra.mxu0 0.0
    %2661 = vmatpush.msra.mxu0 0.0
    %2662 = vmatpush.msra.mxu0 0.0
    %2663 = vmatpush.msra.mxu0 0.0
    %2664 = vmatpush.msra.mxu0 0.0
    %2665 = vmatpush.msra.mxu0 0.0
    %2666 = vmatpush.msra.mxu0 0.0
    %2667 = vmatpush.msra.mxu0 0.0
    %2668 = vmatpush.msra.mxu0 0.0
    %2669 = vmatpush.msra.mxu0 0.0
    %2670 = vmatpush.msra.mxu0 0.0
    %2671 = vmatpush.msra.mxu0 0.0
    %2672 = vmatpush.msra.mxu0 0.0
    %2673 = vmatpush.msra.mxu0 0.0
    %2674 = vmatpush.msra.mxu0 %v2616
    %2675 = vmatmul.f32.gmra.mxu0 %v634
    %v2676 = vpop.f32.mrf.mxu0
    %v2677 = vadd.f32 %v474, %v2676
    %2678 = vmatmul.f32.gmra.mxu0 %v637
    %v2679 = vpop.f32.mrf.mxu0
    %v2680 = vadd.f32 %v477, %v2679
    %2681 = vmatmul.f32.gmra.mxu0 %v640
    %v2682 = vpop.f32.mrf.mxu0
    %v2683 = vadd.f32 %v480, %v2682
    %2684 = vmatmul.f32.gmra.mxu0 %v643
    %v2685 = vpop.f32.mrf.mxu0
    %v2686 = vadd.f32 %v483, %v2685
    %2687 = vmatmul.f32.gmra.mxu0 %v646
    %v2688 = vpop.f32.mrf.mxu0
    %v2689 = vadd.f32 %v486, %v2688
    %2690 = vmatmul.f32.gmra.mxu0 %v649
    %v2691 = vpop.f32.mrf.mxu0
    %v2692 = vadd.f32 %v489, %v2691
    %2693 = vmatmul.f32.gmra.mxu0 %v652
    %v2694 = vpop.f32.mrf.mxu0
    %v2695 = vadd.f32 %v492, %v2694
    %2696 = vmatmul.f32.gmra.mxu0 %v655
    %v2697 = vpop.f32.mrf.mxu0
    %v2698 = vadd.f32 %v495, %v2697
    %2699 = vdwg.mxu0
    %vm2700 = vcmp.gt.f32.partialorder %v2636, 0.0
    %vm2701 = vcmp.gt.f32.partialorder %v2677, 0.0
    %vm2702 = vcmp.gt.f32.partialorder %v2639, 0.0
    %vm2703 = vcmp.gt.f32.partialorder %v2680, 0.0
    %vm2704 = vcmp.gt.f32.partialorder %v2642, 0.0
    %vm2705 = vcmp.gt.f32.partialorder %v2683, 0.0
    %vm2706 = vcmp.gt.f32.partialorder %v2645, 0.0
    %vm2707 = vcmp.gt.f32.partialorder %v2686, 0.0
    %vm2708 = vcmp.gt.f32.partialorder %v2648, 0.0
    %vm2709 = vcmp.gt.f32.partialorder %v2689, 0.0
    %vm2710 = vcmp.gt.f32.partialorder %v2651, 0.0
    %vm2711 = vcmp.gt.f32.partialorder %v2692, 0.0
    %vm2712 = vcmp.gt.f32.partialorder %v2654, 0.0
    %vm2713 = vcmp.gt.f32.partialorder %v2695, 0.0
    %vm2714 = vcmp.gt.f32.partialorder %v2657, 0.0
    %vm2715 = vcmp.gt.f32.partialorder %v2698, 0.0
    %v2716 = vmul.f32 %v2636, 1.442695
    %v2717 = vpow.pop %v2716
    %v2718 = vmul.f32 %v2677, 1.442695
    %v2719 = vpow.pop %v2718
    %v2720 = vmul.f32 %v2639, 1.442695
    %v2721 = vpow.pop %v2720
    %v2722 = vmul.f32 %v2680, 1.442695
    %v2723 = vpow.pop %v2722
    %v2724 = vmul.f32 %v2642, 1.442695
    %v2725 = vpow.pop %v2724
    %v2726 = vmul.f32 %v2683, 1.442695
    %v2727 = vpow.pop %v2726
    %v2728 = vmul.f32 %v2645, 1.442695
    %v2729 = vpow.pop %v2728
    %v2730 = vmul.f32 %v2686, 1.442695
    %v2731 = vpow.pop %v2730
    %v2732 = vmul.f32 %v2648, 1.442695
    %v2733 = vpow.pop %v2732
    %v2734 = vmul.f32 %v2689, 1.442695
    %v2735 = vpow.pop %v2734
    %v2736 = vmul.f32 %v2651, 1.442695
    %v2737 = vpow.pop %v2736
    %v2738 = vmul.f32 %v2692, 1.442695
    %v2739 = vpow.pop %v2738
    %v2740 = vmul.f32 %v2654, 1.442695
    %v2741 = vpow.pop %v2740
    %v2742 = vmul.f32 %v2695, 1.442695
    %v2743 = vpow.pop %v2742
    %v2744 = vmul.f32 %v2657, 1.442695
    %v2745 = vpow.pop %v2744
    %v2746 = vmul.f32 %v2698, 1.442695
    %v2747 = vpow.pop %v2746
    %v2748 = vsub.f32 %v2717, 1.0
    %v2749 = vsub.f32 %v2719, 1.0
    %v2750 = vsub.f32 %v2721, 1.0
    %v2751 = vsub.f32 %v2723, 1.0
    %v2752 = vsub.f32 %v2725, 1.0
    %v2753 = vsub.f32 %v2727, 1.0
    %v2754 = vsub.f32 %v2729, 1.0
    %v2755 = vsub.f32 %v2731, 1.0
    %v2756 = vsub.f32 %v2733, 1.0
    %v2757 = vsub.f32 %v2735, 1.0
    %v2758 = vsub.f32 %v2737, 1.0
    %v2759 = vsub.f32 %v2739, 1.0
    %v2760 = vsub.f32 %v2741, 1.0
    %v2761 = vsub.f32 %v2743, 1.0
    %v2762 = vsub.f32 %v2745, 1.0
    %v2763 = vsub.f32 %v2747, 1.0
    %v2764 = vmul.f32 %v2748, 1.6732632
    %v2765 = vmul.f32 %v2749, 1.6732632
    %v2766 = vmul.f32 %v2750, 1.6732632
    %v2767 = vmul.f32 %v2751, 1.6732632
    %v2768 = vmul.f32 %v2752, 1.6732632
    %v2769 = vmul.f32 %v2753, 1.6732632
    %v2770 = vmul.f32 %v2754, 1.6732632
    %v2771 = vmul.f32 %v2755, 1.6732632
    %v2772 = vmul.f32 %v2756, 1.6732632
    %v2773 = vmul.f32 %v2757, 1.6732632
    %v2774 = vmul.f32 %v2758, 1.6732632
    %v2775 = vmul.f32 %v2759, 1.6732632
    %v2776 = vmul.f32 %v2760, 1.6732632
    %v2777 = vmul.f32 %v2761, 1.6732632
    %v2778 = vmul.f32 %v2762, 1.6732632
    %v2779 = vmul.f32 %v2763, 1.6732632
    %v2780 = vsel %vm2700, %v2636, %v2764
    %v2781 = vsel %vm2701, %v2677, %v2765
    %v2782 = vsel %vm2702, %v2639, %v2766
    %v2783 = vsel %vm2703, %v2680, %v2767
    %v2784 = vsel %vm2704, %v2642, %v2768
    %v2785 = vsel %vm2705, %v2683, %v2769
    %v2786 = vsel %vm2706, %v2645, %v2770
    %v2787 = vsel %vm2707, %v2686, %v2771
    %v2788 = vsel %vm2708, %v2648, %v2772
    %v2789 = vsel %vm2709, %v2689, %v2773
    %v2790 = vsel %vm2710, %v2651, %v2774
    %v2791 = vsel %vm2711, %v2692, %v2775
    %v2792 = vsel %vm2712, %v2654, %v2776
    %v2793 = vsel %vm2713, %v2695, %v2777
    %v2794 = vsel %vm2714, %v2657, %v2778
    %v2795 = vsel %vm2715, %v2698, %v2779
    %v2796 = vmul.f32 %v2780, 1.050701
    %v2797 = vmul.f32 %v2781, 1.050701
    %v2798 = vmul.f32 %v2782, 1.050701
    %v2799 = vmul.f32 %v2783, 1.050701
    %v2800 = vmul.f32 %v2784, 1.050701
    %v2801 = vmul.f32 %v2785, 1.050701
    %v2802 = vmul.f32 %v2786, 1.050701
    %v2803 = vmul.f32 %v2787, 1.050701
    %v2804 = vmul.f32 %v2788, 1.050701
    %v2805 = vmul.f32 %v2789, 1.050701
    %v2806 = vmul.f32 %v2790, 1.050701
    %v2807 = vmul.f32 %v2791, 1.050701
    %v2808 = vmul.f32 %v2792, 1.050701
    %v2809 = vmul.f32 %v2793, 1.050701
    %v2810 = vmul.f32 %v2794, 1.050701
    %v2811 = vmul.f32 %v2795, 1.050701
    %2812 = vmatpush.msra.mxu0 0.0
    %2813 = vmatpush.msra.mxu0 0.0
    %2814 = vmatpush.msra.mxu0 0.0
    %2815 = vmatpush.msra.mxu0 0.0
    %2816 = vmatpush.msra.mxu0 0.0
    %2817 = vmatpush.msra.mxu0 0.0
    %2818 = vmatpush.msra.mxu0 0.0
    %2819 = vmatpush.msra.mxu0 0.0
    %2820 = vmatpush.msra.mxu0 %v2810
    %2821 = vmatpush.msra.mxu0 %v2808
    %2822 = vmatpush.msra.mxu0 %v2806
    %2823 = vmatpush.msra.mxu0 %v2804
    %2824 = vmatpush.msra.mxu0 %v2802
    %2825 = vmatpush.msra.mxu0 %v2800
    %2826 = vmatpush.msra.mxu0 %v2798
    %2827 = vmatpush.msra.mxu0 %v2796
    %2828 = vmatmul.f32.gmra.mxu0 %v860
    %v2829 = vpop.f32.mrf.mxu0
    %v2830 = vadd.f32 %v533, %v2829
    %2831 = vmatmul.f32.gmra.mxu0 %v863
    %v2832 = vpop.f32.mrf.mxu0
    %v2833 = vadd.f32 %v538, %v2832
    %2834 = vmatmul.f32.gmra.mxu0 %v866
    %v2835 = vpop.f32.mrf.mxu0
    %v2836 = vadd.f32 %v543, %v2835
    %2837 = vmatmul.f32.gmra.mxu0 %v869
    %v2838 = vpop.f32.mrf.mxu0
    %v2839 = vadd.f32 %v548, %v2838
    %2840 = vmatmul.f32.gmra.mxu0 %v872
    %v2841 = vpop.f32.mrf.mxu0
    %v2842 = vadd.f32 %v553, %v2841
    %2843 = vmatmul.f32.gmra.mxu0 %v875
    %v2844 = vpop.f32.mrf.mxu0
    %v2845 = vadd.f32 %v558, %v2844
    %2846 = vmatmul.f32.gmra.mxu0 %v878
    %v2847 = vpop.f32.mrf.mxu0
    %v2848 = vadd.f32 %v563, %v2847
    %2849 = vmatmul.f32.gmra.mxu0 %v881
    %v2850 = vpop.f32.mrf.mxu0
    %v2851 = vadd.f32 %v568, %v2850
    %2852 = vdwg.mxu0
    %2853 = vmatpush.msra.mxu0 0.0
    %2854 = vmatpush.msra.mxu0 0.0
    %2855 = vmatpush.msra.mxu0 0.0
    %2856 = vmatpush.msra.mxu0 0.0
    %2857 = vmatpush.msra.mxu0 0.0
    %2858 = vmatpush.msra.mxu0 0.0
    %2859 = vmatpush.msra.mxu0 0.0
    %2860 = vmatpush.msra.mxu0 0.0
    %2861 = vmatpush.msra.mxu0 %v2811
    %2862 = vmatpush.msra.mxu0 %v2809
    %2863 = vmatpush.msra.mxu0 %v2807
    %2864 = vmatpush.msra.mxu0 %v2805
    %2865 = vmatpush.msra.mxu0 %v2803
    %2866 = vmatpush.msra.mxu0 %v2801
    %2867 = vmatpush.msra.mxu0 %v2799
    %2868 = vmatpush.msra.mxu0 %v2797
    %2869 = vmatmul.f32.gmra.mxu0 %v860
    %v2870 = vpop.f32.mrf.mxu0
    %v2871 = vadd.f32 %v533, %v2870
    %2872 = vmatmul.f32.gmra.mxu0 %v863
    %v2873 = vpop.f32.mrf.mxu0
    %v2874 = vadd.f32 %v538, %v2873
    %2875 = vmatmul.f32.gmra.mxu0 %v866
    %v2876 = vpop.f32.mrf.mxu0
    %v2877 = vadd.f32 %v543, %v2876
    %2878 = vmatmul.f32.gmra.mxu0 %v869
    %v2879 = vpop.f32.mrf.mxu0
    %v2880 = vadd.f32 %v548, %v2879
    %2881 = vmatmul.f32.gmra.mxu0 %v872
    %v2882 = vpop.f32.mrf.mxu0
    %v2883 = vadd.f32 %v553, %v2882
    %2884 = vmatmul.f32.gmra.mxu0 %v875
    %v2885 = vpop.f32.mrf.mxu0
    %v2886 = vadd.f32 %v558, %v2885
    %2887 = vmatmul.f32.gmra.mxu0 %v878
    %v2888 = vpop.f32.mrf.mxu0
    %v2889 = vadd.f32 %v563, %v2888
    %2890 = vmatmul.f32.gmra.mxu0 %v881
    %v2891 = vpop.f32.mrf.mxu0
    %v2892 = vadd.f32 %v568, %v2891
    %2893 = vdwg.mxu0
    %vm2894 = vcmp.gt.f32.partialorder %v2830, 0.0
    %vm2895 = vcmp.gt.f32.partialorder %v2871, 0.0
    %vm2896 = vcmp.gt.f32.partialorder %v2833, 0.0
    %vm2897 = vcmp.gt.f32.partialorder %v2874, 0.0
    %vm2898 = vcmp.gt.f32.partialorder %v2836, 0.0
    %vm2899 = vcmp.gt.f32.partialorder %v2877, 0.0
    %vm2900 = vcmp.gt.f32.partialorder %v2839, 0.0
    %vm2901 = vcmp.gt.f32.partialorder %v2880, 0.0
    %vm2902 = vcmp.gt.f32.partialorder %v2842, 0.0
    %vm2903 = vcmp.gt.f32.partialorder %v2883, 0.0
    %vm2904 = vcmp.gt.f32.partialorder %v2845, 0.0
    %vm2905 = vcmp.gt.f32.partialorder %v2886, 0.0
    %vm2906 = vcmp.gt.f32.partialorder %v2848, 0.0
    %vm2907 = vcmp.gt.f32.partialorder %v2889, 0.0
    %vm2908 = vcmp.gt.f32.partialorder %v2851, 0.0
    %vm2909 = vcmp.gt.f32.partialorder %v2892, 0.0
    %v2910 = vmul.f32 %v2830, 1.442695
    %v2911 = vpow.pop %v2910
    %v2912 = vmul.f32 %v2871, 1.442695
    %v2913 = vpow.pop %v2912
    %v2914 = vmul.f32 %v2833, 1.442695
    %v2915 = vpow.pop %v2914
    %v2916 = vmul.f32 %v2874, 1.442695
    %v2917 = vpow.pop %v2916
    %v2918 = vmul.f32 %v2836, 1.442695
    %v2919 = vpow.pop %v2918
    %v2920 = vmul.f32 %v2877, 1.442695
    %v2921 = vpow.pop %v2920
    %v2922 = vmul.f32 %v2839, 1.442695
    %v2923 = vpow.pop %v2922
    %v2924 = vmul.f32 %v2880, 1.442695
    %v2925 = vpow.pop %v2924
    %v2926 = vmul.f32 %v2842, 1.442695
    %v2927 = vpow.pop %v2926
    %v2928 = vmul.f32 %v2883, 1.442695
    %v2929 = vpow.pop %v2928
    %v2930 = vmul.f32 %v2845, 1.442695
    %v2931 = vpow.pop %v2930
    %v2932 = vmul.f32 %v2886, 1.442695
    %v2933 = vpow.pop %v2932
    %v2934 = vmul.f32 %v2848, 1.442695
    %v2935 = vpow.pop %v2934
    %v2936 = vmul.f32 %v2889, 1.442695
    %v2937 = vpow.pop %v2936
    %v2938 = vmul.f32 %v2851, 1.442695
    %v2939 = vpow.pop %v2938
    %v2940 = vmul.f32 %v2892, 1.442695
    %v2941 = vpow.pop %v2940
    %v2942 = vsub.f32 %v2911, 1.0
    %v2943 = vsub.f32 %v2913, 1.0
    %v2944 = vsub.f32 %v2915, 1.0
    %v2945 = vsub.f32 %v2917, 1.0
    %v2946 = vsub.f32 %v2919, 1.0
    %v2947 = vsub.f32 %v2921, 1.0
    %v2948 = vsub.f32 %v2923, 1.0
    %v2949 = vsub.f32 %v2925, 1.0
    %v2950 = vsub.f32 %v2927, 1.0
    %v2951 = vsub.f32 %v2929, 1.0
    %v2952 = vsub.f32 %v2931, 1.0
    %v2953 = vsub.f32 %v2933, 1.0
    %v2954 = vsub.f32 %v2935, 1.0
    %v2955 = vsub.f32 %v2937, 1.0
    %v2956 = vsub.f32 %v2939, 1.0
    %v2957 = vsub.f32 %v2941, 1.0
    %v2958 = vmul.f32 %v2942, 1.6732632
    %v2959 = vmul.f32 %v2943, 1.6732632
    %v2960 = vmul.f32 %v2944, 1.6732632
    %v2961 = vmul.f32 %v2945, 1.6732632
    %v2962 = vmul.f32 %v2946, 1.6732632
    %v2963 = vmul.f32 %v2947, 1.6732632
    %v2964 = vmul.f32 %v2948, 1.6732632
    %v2965 = vmul.f32 %v2949, 1.6732632
    %v2966 = vmul.f32 %v2950, 1.6732632
    %v2967 = vmul.f32 %v2951, 1.6732632
    %v2968 = vmul.f32 %v2952, 1.6732632
    %v2969 = vmul.f32 %v2953, 1.6732632
    %v2970 = vmul.f32 %v2954, 1.6732632
    %v2971 = vmul.f32 %v2955, 1.6732632
    %v2972 = vmul.f32 %v2956, 1.6732632
    %v2973 = vmul.f32 %v2957, 1.6732632
    %v2974 = vsel %vm2894, %v2830, %v2958
    %v2975 = vsel %vm2895, %v2871, %v2959
    %v2976 = vsel %vm2896, %v2833, %v2960
    %v2977 = vsel %vm2897, %v2874, %v2961
    %v2978 = vsel %vm2898, %v2836, %v2962
    %v2979 = vsel %vm2899, %v2877, %v2963
    %v2980 = vsel %vm2900, %v2839, %v2964
    %v2981 = vsel %vm2901, %v2880, %v2965
    %v2982 = vsel %vm2902, %v2842, %v2966
    %v2983 = vsel %vm2903, %v2883, %v2967
    %v2984 = vsel %vm2904, %v2845, %v2968
    %v2985 = vsel %vm2905, %v2886, %v2969
    %v2986 = vsel %vm2906, %v2848, %v2970
    %v2987 = vsel %vm2907, %v2889, %v2971
    %v2988 = vsel %vm2908, %v2851, %v2972
    %v2989 = vsel %vm2909, %v2892, %v2973
    %v2990 = vmul.f32 %v2974, 1.050701
    %v2991 = vmul.f32 %v2975, 1.050701
    %v2992 = vmul.f32 %v2976, 1.050701
    %v2993 = vmul.f32 %v2977, 1.050701
    %v2994 = vmul.f32 %v2978, 1.050701
    %v2995 = vmul.f32 %v2979, 1.050701
    %v2996 = vmul.f32 %v2980, 1.050701
    %v2997 = vmul.f32 %v2981, 1.050701
    %v2998 = vmul.f32 %v2982, 1.050701
    %v2999 = vmul.f32 %v2983, 1.050701
    %v3000 = vmul.f32 %v2984, 1.050701
    %v3001 = vmul.f32 %v2985, 1.050701
    %v3002 = vmul.f32 %v2986, 1.050701
    %v3003 = vmul.f32 %v2987, 1.050701
    %v3004 = vmul.f32 %v2988, 1.050701
    %v3005 = vmul.f32 %v2989, 1.050701
    %3006 = vmatpush.msra.mxu0 0.0
    %3007 = vmatpush.msra.mxu0 0.0
    %3008 = vmatpush.msra.mxu0 0.0
    %3009 = vmatpush.msra.mxu0 0.0
    %3010 = vmatpush.msra.mxu0 0.0
    %3011 = vmatpush.msra.mxu0 0.0
    %3012 = vmatpush.msra.mxu0 0.0
    %3013 = vmatpush.msra.mxu0 0.0
    %3014 = vmatpush.msra.mxu0 %v3004
    %3015 = vmatpush.msra.mxu0 %v3002
    %3016 = vmatpush.msra.mxu0 %v3000
    %3017 = vmatpush.msra.mxu0 %v2998
    %3018 = vmatpush.msra.mxu0 %v2996
    %3019 = vmatpush.msra.mxu0 %v2994
    %3020 = vmatpush.msra.mxu0 %v2992
    %3021 = vmatpush.msra.mxu0 %v2990
    %3022 = vmatmul.f32.gmra.mxu0 %v1078
    %v3023 = vpop.f32.mrf.mxu0
    %v3024 = vadd.f32 %v581, %v3023
    %3025 = vmatmul.f32.gmra.mxu0 %v1081
    %v3026 = vpop.f32.mrf.mxu0
    %v3027 = vadd.f32 %v586, %v3026
    %3028 = vmatmul.f32.gmra.mxu0 %v1084
    %v3029 = vpop.f32.mrf.mxu0
    %v3030 = vadd.f32 %v591, %v3029
    %3031 = vmatmul.f32.gmra.mxu0 %v1087
    %v3032 = vpop.f32.mrf.mxu0
    %v3033 = vadd.f32 %v596, %v3032
    %3034 = vmatmul.f32.gmra.mxu0 %v1090
    %v3035 = vpop.f32.mrf.mxu0
    %v3036 = vadd.f32 %v601, %v3035
    %3037 = vmatmul.f32.gmra.mxu0 %v1093
    %v3038 = vpop.f32.mrf.mxu0
    %v3039 = vadd.f32 %v606, %v3038
    %3040 = vmatmul.f32.gmra.mxu0 %v1096
    %v3041 = vpop.f32.mrf.mxu0
    %v3042 = vadd.f32 %v611, %v3041
    %3043 = vmatmul.f32.gmra.mxu0 %v1099
    %v3044 = vpop.f32.mrf.mxu0
    %v3045 = vadd.f32 %v616, %v3044
    %3046 = vdwg.mxu0
    %3047 = vmatpush.msra.mxu0 0.0
    %3048 = vmatpush.msra.mxu0 0.0
    %3049 = vmatpush.msra.mxu0 0.0
    %3050 = vmatpush.msra.mxu0 0.0
    %3051 = vmatpush.msra.mxu0 0.0
    %3052 = vmatpush.msra.mxu0 0.0
    %3053 = vmatpush.msra.mxu0 0.0
    %3054 = vmatpush.msra.mxu0 0.0
    %3055 = vmatpush.msra.mxu0 %v3005
    %3056 = vmatpush.msra.mxu0 %v3003
    %3057 = vmatpush.msra.mxu0 %v3001
    %3058 = vmatpush.msra.mxu0 %v2999
    %3059 = vmatpush.msra.mxu0 %v2997
    %3060 = vmatpush.msra.mxu0 %v2995
    %3061 = vmatpush.msra.mxu0 %v2993
    %3062 = vmatpush.msra.mxu0 %v2991
    %3063 = vmatmul.f32.gmra.mxu0 %v1078
    %v3064 = vpop.f32.mrf.mxu0
    %v3065 = vadd.f32 %v581, %v3064
    %3066 = vmatmul.f32.gmra.mxu0 %v1081
    %v3067 = vpop.f32.mrf.mxu0
    %v3068 = vadd.f32 %v586, %v3067
    %3069 = vmatmul.f32.gmra.mxu0 %v1084
    %v3070 = vpop.f32.mrf.mxu0
    %v3071 = vadd.f32 %v591, %v3070
    %3072 = vmatmul.f32.gmra.mxu0 %v1087
    %v3073 = vpop.f32.mrf.mxu0
    %v3074 = vadd.f32 %v596, %v3073
    %3075 = vmatmul.f32.gmra.mxu0 %v1090
    %v3076 = vpop.f32.mrf.mxu0
    %v3077 = vadd.f32 %v601, %v3076
    %3078 = vmatmul.f32.gmra.mxu0 %v1093
    %v3079 = vpop.f32.mrf.mxu0
    %v3080 = vadd.f32 %v606, %v3079
    %3081 = vmatmul.f32.gmra.mxu0 %v1096
    %v3082 = vpop.f32.mrf.mxu0
    %v3083 = vadd.f32 %v611, %v3082
    %3084 = vmatmul.f32.gmra.mxu0 %v1099
    %v3085 = vpop.f32.mrf.mxu0
    %v3086 = vadd.f32 %v616, %v3085
    %3087 = vdwg.mxu0
    %vm3088 = vcmp.gt.f32.partialorder %v3024, 0.0
    %vm3089 = vcmp.gt.f32.partialorder %v3065, 0.0
    %vm3090 = vcmp.gt.f32.partialorder %v3027, 0.0
    %vm3091 = vcmp.gt.f32.partialorder %v3068, 0.0
    %vm3092 = vcmp.gt.f32.partialorder %v3030, 0.0
    %vm3093 = vcmp.gt.f32.partialorder %v3071, 0.0
    %vm3094 = vcmp.gt.f32.partialorder %v3033, 0.0
    %vm3095 = vcmp.gt.f32.partialorder %v3074, 0.0
    %vm3096 = vcmp.gt.f32.partialorder %v3036, 0.0
    %vm3097 = vcmp.gt.f32.partialorder %v3077, 0.0
    %vm3098 = vcmp.gt.f32.partialorder %v3039, 0.0
    %vm3099 = vcmp.gt.f32.partialorder %v3080, 0.0
    %vm3100 = vcmp.gt.f32.partialorder %v3042, 0.0
    %vm3101 = vcmp.gt.f32.partialorder %v3083, 0.0
    %vm3102 = vcmp.gt.f32.partialorder %v3045, 0.0
    %vm3103 = vcmp.gt.f32.partialorder %v3086, 0.0
    %v3104 = vmul.f32 %v3024, 1.442695
    %v3105 = vpow.pop %v3104
    %v3106 = vmul.f32 %v3065, 1.442695
    %v3107 = vpow.pop %v3106
    %v3108 = vmul.f32 %v3027, 1.442695
    %v3109 = vpow.pop %v3108
    %v3110 = vmul.f32 %v3068, 1.442695
    %v3111 = vpow.pop %v3110
    %v3112 = vmul.f32 %v3030, 1.442695
    %v3113 = vpow.pop %v3112
    %v3114 = vmul.f32 %v3071, 1.442695
    %v3115 = vpow.pop %v3114
    %v3116 = vmul.f32 %v3033, 1.442695
    %v3117 = vpow.pop %v3116
    %v3118 = vmul.f32 %v3074, 1.442695
    %v3119 = vpow.pop %v3118
    %v3120 = vmul.f32 %v3036, 1.442695
    %v3121 = vpow.pop %v3120
    %v3122 = vmul.f32 %v3077, 1.442695
    %v3123 = vpow.pop %v3122
    %v3124 = vmul.f32 %v3039, 1.442695
    %v3125 = vpow.pop %v3124
    %v3126 = vmul.f32 %v3080, 1.442695
    %v3127 = vpow.pop %v3126
    %v3128 = vmul.f32 %v3042, 1.442695
    %v3129 = vpow.pop %v3128
    %v3130 = vmul.f32 %v3083, 1.442695
    %v3131 = vpow.pop %v3130
    %v3132 = vmul.f32 %v3045, 1.442695
    %v3133 = vpow.pop %v3132
    %v3134 = vmul.f32 %v3086, 1.442695
    %v3135 = vpow.pop %v3134
    %v3136 = vsub.f32 %v3105, 1.0
    %v3137 = vsub.f32 %v3107, 1.0
    %v3138 = vsub.f32 %v3109, 1.0
    %v3139 = vsub.f32 %v3111, 1.0
    %v3140 = vsub.f32 %v3113, 1.0
    %v3141 = vsub.f32 %v3115, 1.0
    %v3142 = vsub.f32 %v3117, 1.0
    %v3143 = vsub.f32 %v3119, 1.0
    %v3144 = vsub.f32 %v3121, 1.0
    %v3145 = vsub.f32 %v3123, 1.0
    %v3146 = vsub.f32 %v3125, 1.0
    %v3147 = vsub.f32 %v3127, 1.0
    %v3148 = vsub.f32 %v3129, 1.0
    %v3149 = vsub.f32 %v3131, 1.0
    %v3150 = vsub.f32 %v3133, 1.0
    %v3151 = vsub.f32 %v3135, 1.0
    %v3152 = vmul.f32 %v3136, 1.6732632
    %v3153 = vmul.f32 %v3137, 1.6732632
    %v3154 = vmul.f32 %v3138, 1.6732632
    %v3155 = vmul.f32 %v3139, 1.6732632
    %v3156 = vmul.f32 %v3140, 1.6732632
    %v3157 = vmul.f32 %v3141, 1.6732632
    %v3158 = vmul.f32 %v3142, 1.6732632
    %v3159 = vmul.f32 %v3143, 1.6732632
    %v3160 = vmul.f32 %v3144, 1.6732632
    %v3161 = vmul.f32 %v3145, 1.6732632
    %v3162 = vmul.f32 %v3146, 1.6732632
    %v3163 = vmul.f32 %v3147, 1.6732632
    %v3164 = vmul.f32 %v3148, 1.6732632
    %v3165 = vmul.f32 %v3149, 1.6732632
    %v3166 = vmul.f32 %v3150, 1.6732632
    %v3167 = vmul.f32 %v3151, 1.6732632
    %v3168 = vsel %vm3088, %v3024, %v3152
    %v3169 = vsel %vm3089, %v3065, %v3153
    %v3170 = vsel %vm3090, %v3027, %v3154
    %v3171 = vsel %vm3091, %v3068, %v3155
    %v3172 = vsel %vm3092, %v3030, %v3156
    %v3173 = vsel %vm3093, %v3071, %v3157
    %v3174 = vsel %vm3094, %v3033, %v3158
    %v3175 = vsel %vm3095, %v3074, %v3159
    %v3176 = vsel %vm3096, %v3036, %v3160
    %v3177 = vsel %vm3097, %v3077, %v3161
    %v3178 = vsel %vm3098, %v3039, %v3162
    %v3179 = vsel %vm3099, %v3080, %v3163
    %v3180 = vsel %vm3100, %v3042, %v3164
    %v3181 = vsel %vm3101, %v3083, %v3165
    %v3182 = vsel %vm3102, %v3045, %v3166
    %v3183 = vsel %vm3103, %v3086, %v3167
    %v3184 = vmul.f32 %v3168, 1.050701
    %v3185 = vmul.f32 %v3169, 1.050701
    %v3186 = vmul.f32 %v3170, 1.050701
    %v3187 = vmul.f32 %v3171, 1.050701
    %v3188 = vmul.f32 %v3172, 1.050701
    %v3189 = vmul.f32 %v3173, 1.050701
    %v3190 = vmul.f32 %v3174, 1.050701
    %v3191 = vmul.f32 %v3175, 1.050701
    %v3192 = vmul.f32 %v3176, 1.050701
    %v3193 = vmul.f32 %v3177, 1.050701
    %v3194 = vmul.f32 %v3178, 1.050701
    %v3195 = vmul.f32 %v3179, 1.050701
    %v3196 = vmul.f32 %v3180, 1.050701
    %v3197 = vmul.f32 %v3181, 1.050701
    %v3198 = vmul.f32 %v3182, 1.050701
    %v3199 = vmul.f32 %v3183, 1.050701
    %3200 = vmatpush.msra.mxu0 0.0
    %3201 = vmatpush.msra.mxu0 0.0
    %3202 = vmatpush.msra.mxu0 0.0
    %3203 = vmatpush.msra.mxu0 0.0
    %3204 = vmatpush.msra.mxu0 0.0
    %3205 = vmatpush.msra.mxu0 0.0
    %3206 = vmatpush.msra.mxu0 0.0
    %3207 = vmatpush.msra.mxu0 0.0
    %3208 = vmatpush.msra.mxu0 %v3198
    %3209 = vmatpush.msra.mxu0 %v3196
    %3210 = vmatpush.msra.mxu0 %v3194
    %3211 = vmatpush.msra.mxu0 %v3192
    %3212 = vmatpush.msra.mxu0 %v3190
    %3213 = vmatpush.msra.mxu0 %v3188
    %3214 = vmatpush.msra.mxu0 %v3186
    %3215 = vmatpush.msra.mxu0 %v3184
    %3216 = vmatmul.f32.gmra.mxu0 %v1296
    %v3217 = vpop.f32.mrf.mxu0
    %v3218 = vadd.f32 %v622, %v3217
    %3219 = vdwg.mxu0
    %3220 = vmatpush.msra.mxu0 0.0
    %3221 = vmatpush.msra.mxu0 0.0
    %3222 = vmatpush.msra.mxu0 0.0
    %3223 = vmatpush.msra.mxu0 0.0
    %3224 = vmatpush.msra.mxu0 0.0
    %3225 = vmatpush.msra.mxu0 0.0
    %3226 = vmatpush.msra.mxu0 0.0
    %3227 = vmatpush.msra.mxu0 0.0
    %3228 = vmatpush.msra.mxu0 %v3199
    %3229 = vmatpush.msra.mxu0 %v3197
    %3230 = vmatpush.msra.mxu0 %v3195
    %3231 = vmatpush.msra.mxu0 %v3193
    %3232 = vmatpush.msra.mxu0 %v3191
    %3233 = vmatpush.msra.mxu0 %v3189
    %3234 = vmatpush.msra.mxu0 %v3187
    %3235 = vmatpush.msra.mxu0 %v3185
    %3236 = vmatmul.f32.gmra.mxu0 %v1296
    %v3237 = vpop.f32.mrf.mxu0
    %v3238 = vadd.f32 %v622, %v3237
    %3239 = vdwg.mxu0
    %v3240 = vand.u32 2147483647, %v3218
    %v3241 = vand.u32 2147483647, %v3238
    %v3242 = vmul.f32 %v628, %v3240
    %v3243 = vmul.f32 %v628, %v3241
    %v3244 = vadd.f32 %v2610, %v3242
    %v3245 = vadd.f32 %v2611, %v3243
    %v3247 = vsel %vm657, %v3244, 0
    %v3250 = vsel %vm657, %v3245, 0
    %3252 = vmatpush.msra.mxu0 0.0
    %3253 = vmatpush.msra.mxu0 0.0
    %3254 = vmatpush.msra.mxu0 0.0
    %3255 = vmatpush.msra.mxu0 0.0
    %3256 = vmatpush.msra.mxu0 0.0
    %3257 = vmatpush.msra.mxu0 0.0
    %3258 = vmatpush.msra.mxu0 0.0
    %3259 = vmatpush.msra.mxu0 0.0
    %3260 = vmatpush.msra.mxu0 0.0
    %3261 = vmatpush.msra.mxu0 0.0
    %3262 = vmatpush.msra.mxu0 0.0
    %3263 = vmatpush.msra.mxu0 0.0
    %3264 = vmatpush.msra.mxu0 0.0
    %3265 = vmatpush.msra.mxu0 0.0
    %3266 = vmatpush.msra.mxu0 0.0
    %3267 = vmatpush.msra.mxu0 %v3247
    %3268 = vmatmul.f32.gmra.mxu0 %v634
    %v3269 = vpop.f32.mrf.mxu0
    %v3270 = vadd.f32 %v433, %v3269
    %3271 = vmatmul.f32.gmra.mxu0 %v637
    %v3272 = vpop.f32.mrf.mxu0
    %v3273 = vadd.f32 %v436, %v3272
    %3274 = vmatmul.f32.gmra.mxu0 %v640
    %v3275 = vpop.f32.mrf.mxu0
    %v3276 = vadd.f32 %v439, %v3275
    %3277 = vmatmul.f32.gmra.mxu0 %v643
    %v3278 = vpop.f32.mrf.mxu0
    %v3279 = vadd.f32 %v442, %v3278
    %3280 = vmatmul.f32.gmra.mxu0 %v646
    %v3281 = vpop.f32.mrf.mxu0
    %v3282 = vadd.f32 %v445, %v3281
    %3283 = vmatmul.f32.gmra.mxu0 %v649
    %v3284 = vpop.f32.mrf.mxu0
    %v3285 = vadd.f32 %v448, %v3284
    %3286 = vmatmul.f32.gmra.mxu0 %v652
    %v3287 = vpop.f32.mrf.mxu0
    %v3288 = vadd.f32 %v451, %v3287
    %3289 = vmatmul.f32.gmra.mxu0 %v655
    %v3290 = vpop.f32.mrf.mxu0
    %v3291 = vadd.f32 %v454, %v3290
    %3292 = vdwg.mxu0
    %3293 = vmatpush.msra.mxu0 0.0
    %3294 = vmatpush.msra.mxu0 0.0
    %3295 = vmatpush.msra.mxu0 0.0
    %3296 = vmatpush.msra.mxu0 0.0
    %3297 = vmatpush.msra.mxu0 0.0
    %3298 = vmatpush.msra.mxu0 0.0
    %3299 = vmatpush.msra.mxu0 0.0
    %3300 = vmatpush.msra.mxu0 0.0
    %3301 = vmatpush.msra.mxu0 0.0
    %3302 = vmatpush.msra.mxu0 0.0
    %3303 = vmatpush.msra.mxu0 0.0
    %3304 = vmatpush.msra.mxu0 0.0
    %3305 = vmatpush.msra.mxu0 0.0
    %3306 = vmatpush.msra.mxu0 0.0
    %3307 = vmatpush.msra.mxu0 0.0
    %3308 = vmatpush.msra.mxu0 %v3250
    %3309 = vmatmul.f32.gmra.mxu0 %v634
    %v3310 = vpop.f32.mrf.mxu0
    %v3311 = vadd.f32 %v474, %v3310
    %3312 = vmatmul.f32.gmra.mxu0 %v637
    %v3313 = vpop.f32.mrf.mxu0
    %v3314 = vadd.f32 %v477, %v3313
    %3315 = vmatmul.f32.gmra.mxu0 %v640
    %v3316 = vpop.f32.mrf.mxu0
    %v3317 = vadd.f32 %v480, %v3316
    %3318 = vmatmul.f32.gmra.mxu0 %v643
    %v3319 = vpop.f32.mrf.mxu0
    %v3320 = vadd.f32 %v483, %v3319
    %3321 = vmatmul.f32.gmra.mxu0 %v646
    %v3322 = vpop.f32.mrf.mxu0
    %v3323 = vadd.f32 %v486, %v3322
    %3324 = vmatmul.f32.gmra.mxu0 %v649
    %v3325 = vpop.f32.mrf.mxu0
    %v3326 = vadd.f32 %v489, %v3325
    %3327 = vmatmul.f32.gmra.mxu0 %v652
    %v3328 = vpop.f32.mrf.mxu0
    %v3329 = vadd.f32 %v492, %v3328
    %3330 = vmatmul.f32.gmra.mxu0 %v655
    %v3331 = vpop.f32.mrf.mxu0
    %v3332 = vadd.f32 %v495, %v3331
    %3333 = vdwg.mxu0
    %vm3334 = vcmp.gt.f32.partialorder %v3270, 0.0
    %vm3335 = vcmp.gt.f32.partialorder %v3311, 0.0
    %vm3336 = vcmp.gt.f32.partialorder %v3273, 0.0
    %vm3337 = vcmp.gt.f32.partialorder %v3314, 0.0
    %vm3338 = vcmp.gt.f32.partialorder %v3276, 0.0
    %vm3339 = vcmp.gt.f32.partialorder %v3317, 0.0
    %vm3340 = vcmp.gt.f32.partialorder %v3279, 0.0
    %vm3341 = vcmp.gt.f32.partialorder %v3320, 0.0
    %vm3342 = vcmp.gt.f32.partialorder %v3282, 0.0
    %vm3343 = vcmp.gt.f32.partialorder %v3323, 0.0
    %vm3344 = vcmp.gt.f32.partialorder %v3285, 0.0
    %vm3345 = vcmp.gt.f32.partialorder %v3326, 0.0
    %vm3346 = vcmp.gt.f32.partialorder %v3288, 0.0
    %vm3347 = vcmp.gt.f32.partialorder %v3329, 0.0
    %vm3348 = vcmp.gt.f32.partialorder %v3291, 0.0
    %vm3349 = vcmp.gt.f32.partialorder %v3332, 0.0
    %v3350 = vmul.f32 %v3270, 1.442695
    %v3351 = vpow.pop %v3350
    %v3352 = vmul.f32 %v3311, 1.442695
    %v3353 = vpow.pop %v3352
    %v3354 = vmul.f32 %v3273, 1.442695
    %v3355 = vpow.pop %v3354
    %v3356 = vmul.f32 %v3314, 1.442695
    %v3357 = vpow.pop %v3356
    %v3358 = vmul.f32 %v3276, 1.442695
    %v3359 = vpow.pop %v3358
    %v3360 = vmul.f32 %v3317, 1.442695
    %v3361 = vpow.pop %v3360
    %v3362 = vmul.f32 %v3279, 1.442695
    %v3363 = vpow.pop %v3362
    %v3364 = vmul.f32 %v3320, 1.442695
    %v3365 = vpow.pop %v3364
    %v3366 = vmul.f32 %v3282, 1.442695
    %v3367 = vpow.pop %v3366
    %v3368 = vmul.f32 %v3323, 1.442695
    %v3369 = vpow.pop %v3368
    %v3370 = vmul.f32 %v3285, 1.442695
    %v3371 = vpow.pop %v3370
    %v3372 = vmul.f32 %v3326, 1.442695
    %v3373 = vpow.pop %v3372
    %v3374 = vmul.f32 %v3288, 1.442695
    %v3375 = vpow.pop %v3374
    %v3376 = vmul.f32 %v3329, 1.442695
    %v3377 = vpow.pop %v3376
    %v3378 = vmul.f32 %v3291, 1.442695
    %v3379 = vpow.pop %v3378
    %v3380 = vmul.f32 %v3332, 1.442695
    %v3381 = vpow.pop %v3380
    %v3382 = vsub.f32 %v3351, 1.0
    %v3383 = vsub.f32 %v3353, 1.0
    %v3384 = vsub.f32 %v3355, 1.0
    %v3385 = vsub.f32 %v3357, 1.0
    %v3386 = vsub.f32 %v3359, 1.0
    %v3387 = vsub.f32 %v3361, 1.0
    %v3388 = vsub.f32 %v3363, 1.0
    %v3389 = vsub.f32 %v3365, 1.0
    %v3390 = vsub.f32 %v3367, 1.0
    %v3391 = vsub.f32 %v3369, 1.0
    %v3392 = vsub.f32 %v3371, 1.0
    %v3393 = vsub.f32 %v3373, 1.0
    %v3394 = vsub.f32 %v3375, 1.0
    %v3395 = vsub.f32 %v3377, 1.0
    %v3396 = vsub.f32 %v3379, 1.0
    %v3397 = vsub.f32 %v3381, 1.0
    %v3398 = vmul.f32 %v3382, 1.6732632
    %v3399 = vmul.f32 %v3383, 1.6732632
    %v3400 = vmul.f32 %v3384, 1.6732632
    %v3401 = vmul.f32 %v3385, 1.6732632
    %v3402 = vmul.f32 %v3386, 1.6732632
    %v3403 = vmul.f32 %v3387, 1.6732632
    %v3404 = vmul.f32 %v3388, 1.6732632
    %v3405 = vmul.f32 %v3389, 1.6732632
    %v3406 = vmul.f32 %v3390, 1.6732632
    %v3407 = vmul.f32 %v3391, 1.6732632
    %v3408 = vmul.f32 %v3392, 1.6732632
    %v3409 = vmul.f32 %v3393, 1.6732632
    %v3410 = vmul.f32 %v3394, 1.6732632
    %v3411 = vmul.f32 %v3395, 1.6732632
    %v3412 = vmul.f32 %v3396, 1.6732632
    %v3413 = vmul.f32 %v3397, 1.6732632
    %v3414 = vsel %vm3334, %v3270, %v3398
    %v3415 = vsel %vm3335, %v3311, %v3399
    %v3416 = vsel %vm3336, %v3273, %v3400
    %v3417 = vsel %vm3337, %v3314, %v3401
    %v3418 = vsel %vm3338, %v3276, %v3402
    %v3419 = vsel %vm3339, %v3317, %v3403
    %v3420 = vsel %vm3340, %v3279, %v3404
    %v3421 = vsel %vm3341, %v3320, %v3405
    %v3422 = vsel %vm3342, %v3282, %v3406
    %v3423 = vsel %vm3343, %v3323, %v3407
    %v3424 = vsel %vm3344, %v3285, %v3408
    %v3425 = vsel %vm3345, %v3326, %v3409
    %v3426 = vsel %vm3346, %v3288, %v3410
    %v3427 = vsel %vm3347, %v3329, %v3411
    %v3428 = vsel %vm3348, %v3291, %v3412
    %v3429 = vsel %vm3349, %v3332, %v3413
    %v3430 = vmul.f32 %v3414, 1.050701
    %v3431 = vmul.f32 %v3415, 1.050701
    %v3432 = vmul.f32 %v3416, 1.050701
    %v3433 = vmul.f32 %v3417, 1.050701
    %v3434 = vmul.f32 %v3418, 1.050701
    %v3435 = vmul.f32 %v3419, 1.050701
    %v3436 = vmul.f32 %v3420, 1.050701
    %v3437 = vmul.f32 %v3421, 1.050701
    %v3438 = vmul.f32 %v3422, 1.050701
    %v3439 = vmul.f32 %v3423, 1.050701
    %v3440 = vmul.f32 %v3424, 1.050701
    %v3441 = vmul.f32 %v3425, 1.050701
    %v3442 = vmul.f32 %v3426, 1.050701
    %v3443 = vmul.f32 %v3427, 1.050701
    %v3444 = vmul.f32 %v3428, 1.050701
    %v3445 = vmul.f32 %v3429, 1.050701
    %3446 = vmatpush.msra.mxu0 0.0
    %3447 = vmatpush.msra.mxu0 0.0
    %3448 = vmatpush.msra.mxu0 0.0
    %3449 = vmatpush.msra.mxu0 0.0
    %3450 = vmatpush.msra.mxu0 0.0
    %3451 = vmatpush.msra.mxu0 0.0
    %3452 = vmatpush.msra.mxu0 0.0
    %3453 = vmatpush.msra.mxu0 0.0
    %3454 = vmatpush.msra.mxu0 %v3444
    %3455 = vmatpush.msra.mxu0 %v3442
    %3456 = vmatpush.msra.mxu0 %v3440
    %3457 = vmatpush.msra.mxu0 %v3438
    %3458 = vmatpush.msra.mxu0 %v3436
    %3459 = vmatpush.msra.mxu0 %v3434
    %3460 = vmatpush.msra.mxu0 %v3432
    %3461 = vmatpush.msra.mxu0 %v3430
    %3462 = vmatmul.f32.gmra.mxu0 %v860
    %v3463 = vpop.f32.mrf.mxu0
    %v3464 = vadd.f32 %v533, %v3463
    %3465 = vmatmul.f32.gmra.mxu0 %v863
    %v3466 = vpop.f32.mrf.mxu0
    %v3467 = vadd.f32 %v538, %v3466
    %3468 = vmatmul.f32.gmra.mxu0 %v866
    %v3469 = vpop.f32.mrf.mxu0
    %v3470 = vadd.f32 %v543, %v3469
    %3471 = vmatmul.f32.gmra.mxu0 %v869
    %v3472 = vpop.f32.mrf.mxu0
    %v3473 = vadd.f32 %v548, %v3472
    %3474 = vmatmul.f32.gmra.mxu0 %v872
    %v3475 = vpop.f32.mrf.mxu0
    %v3476 = vadd.f32 %v553, %v3475
    %3477 = vmatmul.f32.gmra.mxu0 %v875
    %v3478 = vpop.f32.mrf.mxu0
    %v3479 = vadd.f32 %v558, %v3478
    %3480 = vmatmul.f32.gmra.mxu0 %v878
    %v3481 = vpop.f32.mrf.mxu0
    %v3482 = vadd.f32 %v563, %v3481
    %3483 = vmatmul.f32.gmra.mxu0 %v881
    %v3484 = vpop.f32.mrf.mxu0
    %v3485 = vadd.f32 %v568, %v3484
    %3486 = vdwg.mxu0
    %3487 = vmatpush.msra.mxu0 0.0
    %3488 = vmatpush.msra.mxu0 0.0
    %3489 = vmatpush.msra.mxu0 0.0
    %3490 = vmatpush.msra.mxu0 0.0
    %3491 = vmatpush.msra.mxu0 0.0
    %3492 = vmatpush.msra.mxu0 0.0
    %3493 = vmatpush.msra.mxu0 0.0
    %3494 = vmatpush.msra.mxu0 0.0
    %3495 = vmatpush.msra.mxu0 %v3445
    %3496 = vmatpush.msra.mxu0 %v3443
    %3497 = vmatpush.msra.mxu0 %v3441
    %3498 = vmatpush.msra.mxu0 %v3439
    %3499 = vmatpush.msra.mxu0 %v3437
    %3500 = vmatpush.msra.mxu0 %v3435
    %3501 = vmatpush.msra.mxu0 %v3433
    %3502 = vmatpush.msra.mxu0 %v3431
    %3503 = vmatmul.f32.gmra.mxu0 %v860
    %v3504 = vpop.f32.mrf.mxu0
    %v3505 = vadd.f32 %v533, %v3504
    %3506 = vmatmul.f32.gmra.mxu0 %v863
    %v3507 = vpop.f32.mrf.mxu0
    %v3508 = vadd.f32 %v538, %v3507
    %3509 = vmatmul.f32.gmra.mxu0 %v866
    %v3510 = vpop.f32.mrf.mxu0
    %v3511 = vadd.f32 %v543, %v3510
    %3512 = vmatmul.f32.gmra.mxu0 %v869
    %v3513 = vpop.f32.mrf.mxu0
    %v3514 = vadd.f32 %v548, %v3513
    %3515 = vmatmul.f32.gmra.mxu0 %v872
    %v3516 = vpop.f32.mrf.mxu0
    %v3517 = vadd.f32 %v553, %v3516
    %3518 = vmatmul.f32.gmra.mxu0 %v875
    %v3519 = vpop.f32.mrf.mxu0
    %v3520 = vadd.f32 %v558, %v3519
    %3521 = vmatmul.f32.gmra.mxu0 %v878
    %v3522 = vpop.f32.mrf.mxu0
    %v3523 = vadd.f32 %v563, %v3522
    %3524 = vmatmul.f32.gmra.mxu0 %v881
    %v3525 = vpop.f32.mrf.mxu0
    %v3526 = vadd.f32 %v568, %v3525
    %3527 = vdwg.mxu0
    %vm3528 = vcmp.gt.f32.partialorder %v3464, 0.0
    %vm3529 = vcmp.gt.f32.partialorder %v3505, 0.0
    %vm3530 = vcmp.gt.f32.partialorder %v3467, 0.0
    %vm3531 = vcmp.gt.f32.partialorder %v3508, 0.0
    %vm3532 = vcmp.gt.f32.partialorder %v3470, 0.0
    %vm3533 = vcmp.gt.f32.partialorder %v3511, 0.0
    %vm3534 = vcmp.gt.f32.partialorder %v3473, 0.0
    %vm3535 = vcmp.gt.f32.partialorder %v3514, 0.0
    %vm3536 = vcmp.gt.f32.partialorder %v3476, 0.0
    %vm3537 = vcmp.gt.f32.partialorder %v3517, 0.0
    %vm3538 = vcmp.gt.f32.partialorder %v3479, 0.0
    %vm3539 = vcmp.gt.f32.partialorder %v3520, 0.0
    %vm3540 = vcmp.gt.f32.partialorder %v3482, 0.0
    %vm3541 = vcmp.gt.f32.partialorder %v3523, 0.0
    %vm3542 = vcmp.gt.f32.partialorder %v3485, 0.0
    %vm3543 = vcmp.gt.f32.partialorder %v3526, 0.0
    %v3544 = vmul.f32 %v3464, 1.442695
    %v3545 = vpow.pop %v3544
    %v3546 = vmul.f32 %v3505, 1.442695
    %v3547 = vpow.pop %v3546
    %v3548 = vmul.f32 %v3467, 1.442695
    %v3549 = vpow.pop %v3548
    %v3550 = vmul.f32 %v3508, 1.442695
    %v3551 = vpow.pop %v3550
    %v3552 = vmul.f32 %v3470, 1.442695
    %v3553 = vpow.pop %v3552
    %v3554 = vmul.f32 %v3511, 1.442695
    %v3555 = vpow.pop %v3554
    %v3556 = vmul.f32 %v3473, 1.442695
    %v3557 = vpow.pop %v3556
    %v3558 = vmul.f32 %v3514, 1.442695
    %v3559 = vpow.pop %v3558
    %v3560 = vmul.f32 %v3476, 1.442695
    %v3561 = vpow.pop %v3560
    %v3562 = vmul.f32 %v3517, 1.442695
    %v3563 = vpow.pop %v3562
    %v3564 = vmul.f32 %v3479, 1.442695
    %v3565 = vpow.pop %v3564
    %v3566 = vmul.f32 %v3520, 1.442695
    %v3567 = vpow.pop %v3566
    %v3568 = vmul.f32 %v3482, 1.442695
    %v3569 = vpow.pop %v3568
    %v3570 = vmul.f32 %v3523, 1.442695
    %v3571 = vpow.pop %v3570
    %v3572 = vmul.f32 %v3485, 1.442695
    %v3573 = vpow.pop %v3572
    %v3574 = vmul.f32 %v3526, 1.442695
    %v3575 = vpow.pop %v3574
    %v3576 = vsub.f32 %v3545, 1.0
    %v3577 = vsub.f32 %v3547, 1.0
    %v3578 = vsub.f32 %v3549, 1.0
    %v3579 = vsub.f32 %v3551, 1.0
    %v3580 = vsub.f32 %v3553, 1.0
    %v3581 = vsub.f32 %v3555, 1.0
    %v3582 = vsub.f32 %v3557, 1.0
    %v3583 = vsub.f32 %v3559, 1.0
    %v3584 = vsub.f32 %v3561, 1.0
    %v3585 = vsub.f32 %v3563, 1.0
    %v3586 = vsub.f32 %v3565, 1.0
    %v3587 = vsub.f32 %v3567, 1.0
    %v3588 = vsub.f32 %v3569, 1.0
    %v3589 = vsub.f32 %v3571, 1.0
    %v3590 = vsub.f32 %v3573, 1.0
    %v3591 = vsub.f32 %v3575, 1.0
    %v3592 = vmul.f32 %v3576, 1.6732632
    %v3593 = vmul.f32 %v3577, 1.6732632
    %v3594 = vmul.f32 %v3578, 1.6732632
    %v3595 = vmul.f32 %v3579, 1.6732632
    %v3596 = vmul.f32 %v3580, 1.6732632
    %v3597 = vmul.f32 %v3581, 1.6732632
    %v3598 = vmul.f32 %v3582, 1.6732632
    %v3599 = vmul.f32 %v3583, 1.6732632
    %v3600 = vmul.f32 %v3584, 1.6732632
    %v3601 = vmul.f32 %v3585, 1.6732632
    %v3602 = vmul.f32 %v3586, 1.6732632
    %v3603 = vmul.f32 %v3587, 1.6732632
    %v3604 = vmul.f32 %v3588, 1.6732632
    %v3605 = vmul.f32 %v3589, 1.6732632
    %v3606 = vmul.f32 %v3590, 1.6732632
    %v3607 = vmul.f32 %v3591, 1.6732632
    %v3608 = vsel %vm3528, %v3464, %v3592
    %v3609 = vsel %vm3529, %v3505, %v3593
    %v3610 = vsel %vm3530, %v3467, %v3594
    %v3611 = vsel %vm3531, %v3508, %v3595
    %v3612 = vsel %vm3532, %v3470, %v3596
    %v3613 = vsel %vm3533, %v3511, %v3597
    %v3614 = vsel %vm3534, %v3473, %v3598
    %v3615 = vsel %vm3535, %v3514, %v3599
    %v3616 = vsel %vm3536, %v3476, %v3600
    %v3617 = vsel %vm3537, %v3517, %v3601
    %v3618 = vsel %vm3538, %v3479, %v3602
    %v3619 = vsel %vm3539, %v3520, %v3603
    %v3620 = vsel %vm3540, %v3482, %v3604
    %v3621 = vsel %vm3541, %v3523, %v3605
    %v3622 = vsel %vm3542, %v3485, %v3606
    %v3623 = vsel %vm3543, %v3526, %v3607
    %v3624 = vmul.f32 %v3608, 1.050701
    %v3625 = vmul.f32 %v3609, 1.050701
    %v3626 = vmul.f32 %v3610, 1.050701
    %v3627 = vmul.f32 %v3611, 1.050701
    %v3628 = vmul.f32 %v3612, 1.050701
    %v3629 = vmul.f32 %v3613, 1.050701
    %v3630 = vmul.f32 %v3614, 1.050701
    %v3631 = vmul.f32 %v3615, 1.050701
    %v3632 = vmul.f32 %v3616, 1.050701
    %v3633 = vmul.f32 %v3617, 1.050701
    %v3634 = vmul.f32 %v3618, 1.050701
    %v3635 = vmul.f32 %v3619, 1.050701
    %v3636 = vmul.f32 %v3620, 1.050701
    %v3637 = vmul.f32 %v3621, 1.050701
    %v3638 = vmul.f32 %v3622, 1.050701
    %v3639 = vmul.f32 %v3623, 1.050701
    %3640 = vmatpush.msra.mxu0 0.0
    %3641 = vmatpush.msra.mxu0 0.0
    %3642 = vmatpush.msra.mxu0 0.0
    %3643 = vmatpush.msra.mxu0 0.0
    %3644 = vmatpush.msra.mxu0 0.0
    %3645 = vmatpush.msra.mxu0 0.0
    %3646 = vmatpush.msra.mxu0 0.0
    %3647 = vmatpush.msra.mxu0 0.0
    %3648 = vmatpush.msra.mxu0 %v3638
    %3649 = vmatpush.msra.mxu0 %v3636
    %3650 = vmatpush.msra.mxu0 %v3634
    %3651 = vmatpush.msra.mxu0 %v3632
    %3652 = vmatpush.msra.mxu0 %v3630
    %3653 = vmatpush.msra.mxu0 %v3628
    %3654 = vmatpush.msra.mxu0 %v3626
    %3655 = vmatpush.msra.mxu0 %v3624
    %3656 = vmatmul.f32.gmra.mxu0 %v1078
    %v3657 = vpop.f32.mrf.mxu0
    %v3658 = vadd.f32 %v581, %v3657
    %3659 = vmatmul.f32.gmra.mxu0 %v1081
    %v3660 = vpop.f32.mrf.mxu0
    %v3661 = vadd.f32 %v586, %v3660
    %3662 = vmatmul.f32.gmra.mxu0 %v1084
    %v3663 = vpop.f32.mrf.mxu0
    %v3664 = vadd.f32 %v591, %v3663
    %3665 = vmatmul.f32.gmra.mxu0 %v1087
    %v3666 = vpop.f32.mrf.mxu0
    %v3667 = vadd.f32 %v596, %v3666
    %3668 = vmatmul.f32.gmra.mxu0 %v1090
    %v3669 = vpop.f32.mrf.mxu0
    %v3670 = vadd.f32 %v601, %v3669
    %3671 = vmatmul.f32.gmra.mxu0 %v1093
    %v3672 = vpop.f32.mrf.mxu0
    %v3673 = vadd.f32 %v606, %v3672
    %3674 = vmatmul.f32.gmra.mxu0 %v1096
    %v3675 = vpop.f32.mrf.mxu0
    %v3676 = vadd.f32 %v611, %v3675
    %3677 = vmatmul.f32.gmra.mxu0 %v1099
    %v3678 = vpop.f32.mrf.mxu0
    %v3679 = vadd.f32 %v616, %v3678
    %3680 = vdwg.mxu0
    %3681 = vmatpush.msra.mxu0 0.0
    %3682 = vmatpush.msra.mxu0 0.0
    %3683 = vmatpush.msra.mxu0 0.0
    %3684 = vmatpush.msra.mxu0 0.0
    %3685 = vmatpush.msra.mxu0 0.0
    %3686 = vmatpush.msra.mxu0 0.0
    %3687 = vmatpush.msra.mxu0 0.0
    %3688 = vmatpush.msra.mxu0 0.0
    %3689 = vmatpush.msra.mxu0 %v3639
    %3690 = vmatpush.msra.mxu0 %v3637
    %3691 = vmatpush.msra.mxu0 %v3635
    %3692 = vmatpush.msra.mxu0 %v3633
    %3693 = vmatpush.msra.mxu0 %v3631
    %3694 = vmatpush.msra.mxu0 %v3629
    %3695 = vmatpush.msra.mxu0 %v3627
    %3696 = vmatpush.msra.mxu0 %v3625
    %3697 = vmatmul.f32.gmra.mxu0 %v1078
    %v3698 = vpop.f32.mrf.mxu0
    %v3699 = vadd.f32 %v581, %v3698
    %3700 = vmatmul.f32.gmra.mxu0 %v1081
    %v3701 = vpop.f32.mrf.mxu0
    %v3702 = vadd.f32 %v586, %v3701
    %3703 = vmatmul.f32.gmra.mxu0 %v1084
    %v3704 = vpop.f32.mrf.mxu0
    %v3705 = vadd.f32 %v591, %v3704
    %3706 = vmatmul.f32.gmra.mxu0 %v1087
    %v3707 = vpop.f32.mrf.mxu0
    %v3708 = vadd.f32 %v596, %v3707
    %3709 = vmatmul.f32.gmra.mxu0 %v1090
    %v3710 = vpop.f32.mrf.mxu0
    %v3711 = vadd.f32 %v601, %v3710
    %3712 = vmatmul.f32.gmra.mxu0 %v1093
    %v3713 = vpop.f32.mrf.mxu0
    %v3714 = vadd.f32 %v606, %v3713
    %3715 = vmatmul.f32.gmra.mxu0 %v1096
    %v3716 = vpop.f32.mrf.mxu0
    %v3717 = vadd.f32 %v611, %v3716
    %3718 = vmatmul.f32.gmra.mxu0 %v1099
    %v3719 = vpop.f32.mrf.mxu0
    %v3720 = vadd.f32 %v616, %v3719
    %3721 = vdwg.mxu0
    %vm3722 = vcmp.gt.f32.partialorder %v3658, 0.0
    %vm3723 = vcmp.gt.f32.partialorder %v3699, 0.0
    %vm3724 = vcmp.gt.f32.partialorder %v3661, 0.0
    %vm3725 = vcmp.gt.f32.partialorder %v3702, 0.0
    %vm3726 = vcmp.gt.f32.partialorder %v3664, 0.0
    %vm3727 = vcmp.gt.f32.partialorder %v3705, 0.0
    %vm3728 = vcmp.gt.f32.partialorder %v3667, 0.0
    %vm3729 = vcmp.gt.f32.partialorder %v3708, 0.0
    %vm3730 = vcmp.gt.f32.partialorder %v3670, 0.0
    %vm3731 = vcmp.gt.f32.partialorder %v3711, 0.0
    %vm3732 = vcmp.gt.f32.partialorder %v3673, 0.0
    %vm3733 = vcmp.gt.f32.partialorder %v3714, 0.0
    %vm3734 = vcmp.gt.f32.partialorder %v3676, 0.0
    %vm3735 = vcmp.gt.f32.partialorder %v3717, 0.0
    %vm3736 = vcmp.gt.f32.partialorder %v3679, 0.0
    %vm3737 = vcmp.gt.f32.partialorder %v3720, 0.0
    %v3738 = vmul.f32 %v3658, 1.442695
    %v3739 = vpow.pop %v3738
    %v3740 = vmul.f32 %v3699, 1.442695
    %v3741 = vpow.pop %v3740
    %v3742 = vmul.f32 %v3661, 1.442695
    %v3743 = vpow.pop %v3742
    %v3744 = vmul.f32 %v3702, 1.442695
    %v3745 = vpow.pop %v3744
    %v3746 = vmul.f32 %v3664, 1.442695
    %v3747 = vpow.pop %v3746
    %v3748 = vmul.f32 %v3705, 1.442695
    %v3749 = vpow.pop %v3748
    %v3750 = vmul.f32 %v3667, 1.442695
    %v3751 = vpow.pop %v3750
    %v3752 = vmul.f32 %v3708, 1.442695
    %v3753 = vpow.pop %v3752
    %v3754 = vmul.f32 %v3670, 1.442695
    %v3755 = vpow.pop %v3754
    %v3756 = vmul.f32 %v3711, 1.442695
    %v3757 = vpow.pop %v3756
    %v3758 = vmul.f32 %v3673, 1.442695
    %v3759 = vpow.pop %v3758
    %v3760 = vmul.f32 %v3714, 1.442695
    %v3761 = vpow.pop %v3760
    %v3762 = vmul.f32 %v3676, 1.442695
    %v3763 = vpow.pop %v3762
    %v3764 = vmul.f32 %v3717, 1.442695
    %v3765 = vpow.pop %v3764
    %v3766 = vmul.f32 %v3679, 1.442695
    %v3767 = vpow.pop %v3766
    %v3768 = vmul.f32 %v3720, 1.442695
    %v3769 = vpow.pop %v3768
    %v3770 = vsub.f32 %v3739, 1.0
    %v3771 = vsub.f32 %v3741, 1.0
    %v3772 = vsub.f32 %v3743, 1.0
    %v3773 = vsub.f32 %v3745, 1.0
    %v3774 = vsub.f32 %v3747, 1.0
    %v3775 = vsub.f32 %v3749, 1.0
    %v3776 = vsub.f32 %v3751, 1.0
    %v3777 = vsub.f32 %v3753, 1.0
    %v3778 = vsub.f32 %v3755, 1.0
    %v3779 = vsub.f32 %v3757, 1.0
    %v3780 = vsub.f32 %v3759, 1.0
    %v3781 = vsub.f32 %v3761, 1.0
    %v3782 = vsub.f32 %v3763, 1.0
    %v3783 = vsub.f32 %v3765, 1.0
    %v3784 = vsub.f32 %v3767, 1.0
    %v3785 = vsub.f32 %v3769, 1.0
    %v3786 = vmul.f32 %v3770, 1.6732632
    %v3787 = vmul.f32 %v3771, 1.6732632
    %v3788 = vmul.f32 %v3772, 1.6732632
    %v3789 = vmul.f32 %v3773, 1.6732632
    %v3790 = vmul.f32 %v3774, 1.6732632
    %v3791 = vmul.f32 %v3775, 1.6732632
    %v3792 = vmul.f32 %v3776, 1.6732632
    %v3793 = vmul.f32 %v3777, 1.6732632
    %v3794 = vmul.f32 %v3778, 1.6732632
    %v3795 = vmul.f32 %v3779, 1.6732632
    %v3796 = vmul.f32 %v3780, 1.6732632
    %v3797 = vmul.f32 %v3781, 1.6732632
    %v3798 = vmul.f32 %v3782, 1.6732632
    %v3799 = vmul.f32 %v3783, 1.6732632
    %v3800 = vmul.f32 %v3784, 1.6732632
    %v3801 = vmul.f32 %v3785, 1.6732632
    %v3802 = vsel %vm3722, %v3658, %v3786
    %v3803 = vsel %vm3723, %v3699, %v3787
    %v3804 = vsel %vm3724, %v3661, %v3788
    %v3805 = vsel %vm3725, %v3702, %v3789
    %v3806 = vsel %vm3726, %v3664, %v3790
    %v3807 = vsel %vm3727, %v3705, %v3791
    %v3808 = vsel %vm3728, %v3667, %v3792
    %v3809 = vsel %vm3729, %v3708, %v3793
    %v3810 = vsel %vm3730, %v3670, %v3794
    %v3811 = vsel %vm3731, %v3711, %v3795
    %v3812 = vsel %vm3732, %v3673, %v3796
    %v3813 = vsel %vm3733, %v3714, %v3797
    %v3814 = vsel %vm3734, %v3676, %v3798
    %v3815 = vsel %vm3735, %v3717, %v3799
    %v3816 = vsel %vm3736, %v3679, %v3800
    %v3817 = vsel %vm3737, %v3720, %v3801
    %v3818 = vmul.f32 %v3802, 1.050701
    %v3819 = vmul.f32 %v3803, 1.050701
    %v3820 = vmul.f32 %v3804, 1.050701
    %v3821 = vmul.f32 %v3805, 1.050701
    %v3822 = vmul.f32 %v3806, 1.050701
    %v3823 = vmul.f32 %v3807, 1.050701
    %v3824 = vmul.f32 %v3808, 1.050701
    %v3825 = vmul.f32 %v3809, 1.050701
    %v3826 = vmul.f32 %v3810, 1.050701
    %v3827 = vmul.f32 %v3811, 1.050701
    %v3828 = vmul.f32 %v3812, 1.050701
    %v3829 = vmul.f32 %v3813, 1.050701
    %v3830 = vmul.f32 %v3814, 1.050701
    %v3831 = vmul.f32 %v3815, 1.050701
    %v3832 = vmul.f32 %v3816, 1.050701
    %v3833 = vmul.f32 %v3817, 1.050701
    %3834 = vmatpush.msra.mxu0 0.0
    %3835 = vmatpush.msra.mxu0 0.0
    %3836 = vmatpush.msra.mxu0 0.0
    %3837 = vmatpush.msra.mxu0 0.0
    %3838 = vmatpush.msra.mxu0 0.0
    %3839 = vmatpush.msra.mxu0 0.0
    %3840 = vmatpush.msra.mxu0 0.0
    %3841 = vmatpush.msra.mxu0 0.0
    %3842 = vmatpush.msra.mxu0 %v3832
    %3843 = vmatpush.msra.mxu0 %v3830
    %3844 = vmatpush.msra.mxu0 %v3828
    %3845 = vmatpush.msra.mxu0 %v3826
    %3846 = vmatpush.msra.mxu0 %v3824
    %3847 = vmatpush.msra.mxu0 %v3822
    %3848 = vmatpush.msra.mxu0 %v3820
    %3849 = vmatpush.msra.mxu0 %v3818
    %3850 = vmatmul.f32.gmra.mxu0 %v1296
    %v3851 = vpop.f32.mrf.mxu0
    %v3852 = vadd.f32 %v622, %v3851
    %3853 = vdwg.mxu0
    %3854 = vmatpush.msra.mxu0 0.0
    %3855 = vmatpush.msra.mxu0 0.0
    %3856 = vmatpush.msra.mxu0 0.0
    %3857 = vmatpush.msra.mxu0 0.0
    %3858 = vmatpush.msra.mxu0 0.0
    %3859 = vmatpush.msra.mxu0 0.0
    %3860 = vmatpush.msra.mxu0 0.0
    %3861 = vmatpush.msra.mxu0 0.0
    %3862 = vmatpush.msra.mxu0 %v3833
    %3863 = vmatpush.msra.mxu0 %v3831
    %3864 = vmatpush.msra.mxu0 %v3829
    %3865 = vmatpush.msra.mxu0 %v3827
    %3866 = vmatpush.msra.mxu0 %v3825
    %3867 = vmatpush.msra.mxu0 %v3823
    %3868 = vmatpush.msra.mxu0 %v3821
    %3869 = vmatpush.msra.mxu0 %v3819
    %3870 = vmatmul.f32.gmra.mxu0 %v1296
    %v3871 = vpop.f32.mrf.mxu0
    %v3872 = vadd.f32 %v622, %v3871
    %3873 = vdwg.mxu0
    %v3874 = vand.u32 2147483647, %v3852
    %v3875 = vand.u32 2147483647, %v3872
    %v3876 = vmul.f32 %v628, %v3874
    %v3877 = vmul.f32 %v628, %v3875
    %v3878 = vadd.f32 %v3244, %v3876
    %v3879 = vadd.f32 %v3245, %v3877
    %v3881 = vsel %vm657, %v3878, 0
    %v3884 = vsel %vm657, %v3879, 0
    %3886 = vmatpush.msra.mxu0 0.0
    %3887 = vmatpush.msra.mxu0 0.0
    %3888 = vmatpush.msra.mxu0 0.0
    %3889 = vmatpush.msra.mxu0 0.0
    %3890 = vmatpush.msra.mxu0 0.0
    %3891 = vmatpush.msra.mxu0 0.0
    %3892 = vmatpush.msra.mxu0 0.0
    %3893 = vmatpush.msra.mxu0 0.0
    %3894 = vmatpush.msra.mxu0 0.0
    %3895 = vmatpush.msra.mxu0 0.0
    %3896 = vmatpush.msra.mxu0 0.0
    %3897 = vmatpush.msra.mxu0 0.0
    %3898 = vmatpush.msra.mxu0 0.0
    %3899 = vmatpush.msra.mxu0 0.0
    %3900 = vmatpush.msra.mxu0 0.0
    %3901 = vmatpush.msra.mxu0 %v3881
    %3902 = vmatmul.f32.gmra.mxu0 %v634
    %v3903 = vpop.f32.mrf.mxu0
    %v3904 = vadd.f32 %v433, %v3903
    %3905 = vmatmul.f32.gmra.mxu0 %v637
    %v3906 = vpop.f32.mrf.mxu0
    %v3907 = vadd.f32 %v436, %v3906
    %3908 = vmatmul.f32.gmra.mxu0 %v640
    %v3909 = vpop.f32.mrf.mxu0
    %v3910 = vadd.f32 %v439, %v3909
    %3911 = vmatmul.f32.gmra.mxu0 %v643
    %v3912 = vpop.f32.mrf.mxu0
    %v3913 = vadd.f32 %v442, %v3912
    %3914 = vmatmul.f32.gmra.mxu0 %v646
    %v3915 = vpop.f32.mrf.mxu0
    %v3916 = vadd.f32 %v445, %v3915
    %3917 = vmatmul.f32.gmra.mxu0 %v649
    %v3918 = vpop.f32.mrf.mxu0
    %v3919 = vadd.f32 %v448, %v3918
    %3920 = vmatmul.f32.gmra.mxu0 %v652
    %v3921 = vpop.f32.mrf.mxu0
    %v3922 = vadd.f32 %v451, %v3921
    %3923 = vmatmul.f32.gmra.mxu0 %v655
    %v3924 = vpop.f32.mrf.mxu0
    %v3925 = vadd.f32 %v454, %v3924
    %3926 = vdwg.mxu0
    %3927 = vmatpush.msra.mxu0 0.0
    %3928 = vmatpush.msra.mxu0 0.0
    %3929 = vmatpush.msra.mxu0 0.0
    %3930 = vmatpush.msra.mxu0 0.0
    %3931 = vmatpush.msra.mxu0 0.0
    %3932 = vmatpush.msra.mxu0 0.0
    %3933 = vmatpush.msra.mxu0 0.0
    %3934 = vmatpush.msra.mxu0 0.0
    %3935 = vmatpush.msra.mxu0 0.0
    %3936 = vmatpush.msra.mxu0 0.0
    %3937 = vmatpush.msra.mxu0 0.0
    %3938 = vmatpush.msra.mxu0 0.0
    %3939 = vmatpush.msra.mxu0 0.0
    %3940 = vmatpush.msra.mxu0 0.0
    %3941 = vmatpush.msra.mxu0 0.0
    %3942 = vmatpush.msra.mxu0 %v3884
    %3943 = vmatmul.f32.gmra.mxu0 %v634
    %v3944 = vpop.f32.mrf.mxu0
    %v3945 = vadd.f32 %v474, %v3944
    %3946 = vmatmul.f32.gmra.mxu0 %v637
    %v3947 = vpop.f32.mrf.mxu0
    %v3948 = vadd.f32 %v477, %v3947
    %3949 = vmatmul.f32.gmra.mxu0 %v640
    %v3950 = vpop.f32.mrf.mxu0
    %v3951 = vadd.f32 %v480, %v3950
    %3952 = vmatmul.f32.gmra.mxu0 %v643
    %v3953 = vpop.f32.mrf.mxu0
    %v3954 = vadd.f32 %v483, %v3953
    %3955 = vmatmul.f32.gmra.mxu0 %v646
    %v3956 = vpop.f32.mrf.mxu0
    %v3957 = vadd.f32 %v486, %v3956
    %3958 = vmatmul.f32.gmra.mxu0 %v649
    %v3959 = vpop.f32.mrf.mxu0
    %v3960 = vadd.f32 %v489, %v3959
    %3961 = vmatmul.f32.gmra.mxu0 %v652
    %v3962 = vpop.f32.mrf.mxu0
    %v3963 = vadd.f32 %v492, %v3962
    %3964 = vmatmul.f32.gmra.mxu0 %v655
    %v3965 = vpop.f32.mrf.mxu0
    %v3966 = vadd.f32 %v495, %v3965
    %3967 = vdwg.mxu0
    %vm3968 = vcmp.gt.f32.partialorder %v3904, 0.0
    %vm3969 = vcmp.gt.f32.partialorder %v3945, 0.0
    %vm3970 = vcmp.gt.f32.partialorder %v3907, 0.0
    %vm3971 = vcmp.gt.f32.partialorder %v3948, 0.0
    %vm3972 = vcmp.gt.f32.partialorder %v3910, 0.0
    %vm3973 = vcmp.gt.f32.partialorder %v3951, 0.0
    %vm3974 = vcmp.gt.f32.partialorder %v3913, 0.0
    %vm3975 = vcmp.gt.f32.partialorder %v3954, 0.0
    %vm3976 = vcmp.gt.f32.partialorder %v3916, 0.0
    %vm3977 = vcmp.gt.f32.partialorder %v3957, 0.0
    %vm3978 = vcmp.gt.f32.partialorder %v3919, 0.0
    %vm3979 = vcmp.gt.f32.partialorder %v3960, 0.0
    %vm3980 = vcmp.gt.f32.partialorder %v3922, 0.0
    %vm3981 = vcmp.gt.f32.partialorder %v3963, 0.0
    %vm3982 = vcmp.gt.f32.partialorder %v3925, 0.0
    %vm3983 = vcmp.gt.f32.partialorder %v3966, 0.0
    %v3984 = vmul.f32 %v3904, 1.442695
    %v3985 = vpow.pop %v3984
    %v3986 = vmul.f32 %v3945, 1.442695
    %v3987 = vpow.pop %v3986
    %v3988 = vmul.f32 %v3907, 1.442695
    %v3989 = vpow.pop %v3988
    %v3990 = vmul.f32 %v3948, 1.442695
    %v3991 = vpow.pop %v3990
    %v3992 = vmul.f32 %v3910, 1.442695
    %v3993 = vpow.pop %v3992
    %v3994 = vmul.f32 %v3951, 1.442695
    %v3995 = vpow.pop %v3994
    %v3996 = vmul.f32 %v3913, 1.442695
    %v3997 = vpow.pop %v3996
    %v3998 = vmul.f32 %v3954, 1.442695
    %v3999 = vpow.pop %v3998
    %v4000 = vmul.f32 %v3916, 1.442695
    %v4001 = vpow.pop %v4000
    %v4002 = vmul.f32 %v3957, 1.442695
    %v4003 = vpow.pop %v4002
    %v4004 = vmul.f32 %v3919, 1.442695
    %v4005 = vpow.pop %v4004
    %v4006 = vmul.f32 %v3960, 1.442695
    %v4007 = vpow.pop %v4006
    %v4008 = vmul.f32 %v3922, 1.442695
    %v4009 = vpow.pop %v4008
    %v4010 = vmul.f32 %v3963, 1.442695
    %v4011 = vpow.pop %v4010
    %v4012 = vmul.f32 %v3925, 1.442695
    %v4013 = vpow.pop %v4012
    %v4014 = vmul.f32 %v3966, 1.442695
    %v4015 = vpow.pop %v4014
    %v4016 = vsub.f32 %v3985, 1.0
    %v4017 = vsub.f32 %v3987, 1.0
    %v4018 = vsub.f32 %v3989, 1.0
    %v4019 = vsub.f32 %v3991, 1.0
    %v4020 = vsub.f32 %v3993, 1.0
    %v4021 = vsub.f32 %v3995, 1.0
    %v4022 = vsub.f32 %v3997, 1.0
    %v4023 = vsub.f32 %v3999, 1.0
    %v4024 = vsub.f32 %v4001, 1.0
    %v4025 = vsub.f32 %v4003, 1.0
    %v4026 = vsub.f32 %v4005, 1.0
    %v4027 = vsub.f32 %v4007, 1.0
    %v4028 = vsub.f32 %v4009, 1.0
    %v4029 = vsub.f32 %v4011, 1.0
    %v4030 = vsub.f32 %v4013, 1.0
    %v4031 = vsub.f32 %v4015, 1.0
    %v4032 = vmul.f32 %v4016, 1.6732632
    %v4033 = vmul.f32 %v4017, 1.6732632
    %v4034 = vmul.f32 %v4018, 1.6732632
    %v4035 = vmul.f32 %v4019, 1.6732632
    %v4036 = vmul.f32 %v4020, 1.6732632
    %v4037 = vmul.f32 %v4021, 1.6732632
    %v4038 = vmul.f32 %v4022, 1.6732632
    %v4039 = vmul.f32 %v4023, 1.6732632
    %v4040 = vmul.f32 %v4024, 1.6732632
    %v4041 = vmul.f32 %v4025, 1.6732632
    %v4042 = vmul.f32 %v4026, 1.6732632
    %v4043 = vmul.f32 %v4027, 1.6732632
    %v4044 = vmul.f32 %v4028, 1.6732632
    %v4045 = vmul.f32 %v4029, 1.6732632
    %v4046 = vmul.f32 %v4030, 1.6732632
    %v4047 = vmul.f32 %v4031, 1.6732632
    %v4048 = vsel %vm3968, %v3904, %v4032
    %v4049 = vsel %vm3969, %v3945, %v4033
    %v4050 = vsel %vm3970, %v3907, %v4034
    %v4051 = vsel %vm3971, %v3948, %v4035
    %v4052 = vsel %vm3972, %v3910, %v4036
    %v4053 = vsel %vm3973, %v3951, %v4037
    %v4054 = vsel %vm3974, %v3913, %v4038
    %v4055 = vsel %vm3975, %v3954, %v4039
    %v4056 = vsel %vm3976, %v3916, %v4040
    %v4057 = vsel %vm3977, %v3957, %v4041
    %v4058 = vsel %vm3978, %v3919, %v4042
    %v4059 = vsel %vm3979, %v3960, %v4043
    %v4060 = vsel %vm3980, %v3922, %v4044
    %v4061 = vsel %vm3981, %v3963, %v4045
    %v4062 = vsel %vm3982, %v3925, %v4046
    %v4063 = vsel %vm3983, %v3966, %v4047
    %v4064 = vmul.f32 %v4048, 1.050701
    %v4065 = vmul.f32 %v4049, 1.050701
    %v4066 = vmul.f32 %v4050, 1.050701
    %v4067 = vmul.f32 %v4051, 1.050701
    %v4068 = vmul.f32 %v4052, 1.050701
    %v4069 = vmul.f32 %v4053, 1.050701
    %v4070 = vmul.f32 %v4054, 1.050701
    %v4071 = vmul.f32 %v4055, 1.050701
    %v4072 = vmul.f32 %v4056, 1.050701
    %v4073 = vmul.f32 %v4057, 1.050701
    %v4074 = vmul.f32 %v4058, 1.050701
    %v4075 = vmul.f32 %v4059, 1.050701
    %v4076 = vmul.f32 %v4060, 1.050701
    %v4077 = vmul.f32 %v4061, 1.050701
    %v4078 = vmul.f32 %v4062, 1.050701
    %v4079 = vmul.f32 %v4063, 1.050701
    %4080 = vmatpush.msra.mxu0 0.0
    %4081 = vmatpush.msra.mxu0 0.0
    %4082 = vmatpush.msra.mxu0 0.0
    %4083 = vmatpush.msra.mxu0 0.0
    %4084 = vmatpush.msra.mxu0 0.0
    %4085 = vmatpush.msra.mxu0 0.0
    %4086 = vmatpush.msra.mxu0 0.0
    %4087 = vmatpush.msra.mxu0 0.0
    %4088 = vmatpush.msra.mxu0 %v4078
    %4089 = vmatpush.msra.mxu0 %v4076
    %4090 = vmatpush.msra.mxu0 %v4074
    %4091 = vmatpush.msra.mxu0 %v4072
    %4092 = vmatpush.msra.mxu0 %v4070
    %4093 = vmatpush.msra.mxu0 %v4068
    %4094 = vmatpush.msra.mxu0 %v4066
    %4095 = vmatpush.msra.mxu0 %v4064
    %4096 = vmatmul.f32.gmra.mxu0 %v860
    %v4097 = vpop.f32.mrf.mxu0
    %v4098 = vadd.f32 %v533, %v4097
    %4099 = vmatmul.f32.gmra.mxu0 %v863
    %v4100 = vpop.f32.mrf.mxu0
    %v4101 = vadd.f32 %v538, %v4100
    %4102 = vmatmul.f32.gmra.mxu0 %v866
    %v4103 = vpop.f32.mrf.mxu0
    %v4104 = vadd.f32 %v543, %v4103
    %4105 = vmatmul.f32.gmra.mxu0 %v869
    %v4106 = vpop.f32.mrf.mxu0
    %v4107 = vadd.f32 %v548, %v4106
    %4108 = vmatmul.f32.gmra.mxu0 %v872
    %v4109 = vpop.f32.mrf.mxu0
    %v4110 = vadd.f32 %v553, %v4109
    %4111 = vmatmul.f32.gmra.mxu0 %v875
    %v4112 = vpop.f32.mrf.mxu0
    %v4113 = vadd.f32 %v558, %v4112
    %4114 = vmatmul.f32.gmra.mxu0 %v878
    %v4115 = vpop.f32.mrf.mxu0
    %v4116 = vadd.f32 %v563, %v4115
    %4117 = vmatmul.f32.gmra.mxu0 %v881
    %v4118 = vpop.f32.mrf.mxu0
    %v4119 = vadd.f32 %v568, %v4118
    %4120 = vdwg.mxu0
    %4121 = vmatpush.msra.mxu0 0.0
    %4122 = vmatpush.msra.mxu0 0.0
    %4123 = vmatpush.msra.mxu0 0.0
    %4124 = vmatpush.msra.mxu0 0.0
    %4125 = vmatpush.msra.mxu0 0.0
    %4126 = vmatpush.msra.mxu0 0.0
    %4127 = vmatpush.msra.mxu0 0.0
    %4128 = vmatpush.msra.mxu0 0.0
    %4129 = vmatpush.msra.mxu0 %v4079
    %4130 = vmatpush.msra.mxu0 %v4077
    %4131 = vmatpush.msra.mxu0 %v4075
    %4132 = vmatpush.msra.mxu0 %v4073
    %4133 = vmatpush.msra.mxu0 %v4071
    %4134 = vmatpush.msra.mxu0 %v4069
    %4135 = vmatpush.msra.mxu0 %v4067
    %4136 = vmatpush.msra.mxu0 %v4065
    %4137 = vmatmul.f32.gmra.mxu0 %v860
    %v4138 = vpop.f32.mrf.mxu0
    %v4139 = vadd.f32 %v533, %v4138
    %4140 = vmatmul.f32.gmra.mxu0 %v863
    %v4141 = vpop.f32.mrf.mxu0
    %v4142 = vadd.f32 %v538, %v4141
    %4143 = vmatmul.f32.gmra.mxu0 %v866
    %v4144 = vpop.f32.mrf.mxu0
    %v4145 = vadd.f32 %v543, %v4144
    %4146 = vmatmul.f32.gmra.mxu0 %v869
    %v4147 = vpop.f32.mrf.mxu0
    %v4148 = vadd.f32 %v548, %v4147
    %4149 = vmatmul.f32.gmra.mxu0 %v872
    %v4150 = vpop.f32.mrf.mxu0
    %v4151 = vadd.f32 %v553, %v4150
    %4152 = vmatmul.f32.gmra.mxu0 %v875
    %v4153 = vpop.f32.mrf.mxu0
    %v4154 = vadd.f32 %v558, %v4153
    %4155 = vmatmul.f32.gmra.mxu0 %v878
    %v4156 = vpop.f32.mrf.mxu0
    %v4157 = vadd.f32 %v563, %v4156
    %4158 = vmatmul.f32.gmra.mxu0 %v881
    %v4159 = vpop.f32.mrf.mxu0
    %v4160 = vadd.f32 %v568, %v4159
    %4161 = vdwg.mxu0
    %vm4162 = vcmp.gt.f32.partialorder %v4098, 0.0
    %vm4163 = vcmp.gt.f32.partialorder %v4139, 0.0
    %vm4164 = vcmp.gt.f32.partialorder %v4101, 0.0
    %vm4165 = vcmp.gt.f32.partialorder %v4142, 0.0
    %vm4166 = vcmp.gt.f32.partialorder %v4104, 0.0
    %vm4167 = vcmp.gt.f32.partialorder %v4145, 0.0
    %vm4168 = vcmp.gt.f32.partialorder %v4107, 0.0
    %vm4169 = vcmp.gt.f32.partialorder %v4148, 0.0
    %vm4170 = vcmp.gt.f32.partialorder %v4110, 0.0
    %vm4171 = vcmp.gt.f32.partialorder %v4151, 0.0
    %vm4172 = vcmp.gt.f32.partialorder %v4113, 0.0
    %vm4173 = vcmp.gt.f32.partialorder %v4154, 0.0
    %vm4174 = vcmp.gt.f32.partialorder %v4116, 0.0
    %vm4175 = vcmp.gt.f32.partialorder %v4157, 0.0
    %vm4176 = vcmp.gt.f32.partialorder %v4119, 0.0
    %vm4177 = vcmp.gt.f32.partialorder %v4160, 0.0
    %v4178 = vmul.f32 %v4098, 1.442695
    %v4179 = vpow.pop %v4178
    %v4180 = vmul.f32 %v4139, 1.442695
    %v4181 = vpow.pop %v4180
    %v4182 = vmul.f32 %v4101, 1.442695
    %v4183 = vpow.pop %v4182
    %v4184 = vmul.f32 %v4142, 1.442695
    %v4185 = vpow.pop %v4184
    %v4186 = vmul.f32 %v4104, 1.442695
    %v4187 = vpow.pop %v4186
    %v4188 = vmul.f32 %v4145, 1.442695
    %v4189 = vpow.pop %v4188
    %v4190 = vmul.f32 %v4107, 1.442695
    %v4191 = vpow.pop %v4190
    %v4192 = vmul.f32 %v4148, 1.442695
    %v4193 = vpow.pop %v4192
    %v4194 = vmul.f32 %v4110, 1.442695
    %v4195 = vpow.pop %v4194
    %v4196 = vmul.f32 %v4151, 1.442695
    %v4197 = vpow.pop %v4196
    %v4198 = vmul.f32 %v4113, 1.442695
    %v4199 = vpow.pop %v4198
    %v4200 = vmul.f32 %v4154, 1.442695
    %v4201 = vpow.pop %v4200
    %v4202 = vmul.f32 %v4116, 1.442695
    %v4203 = vpow.pop %v4202
    %v4204 = vmul.f32 %v4157, 1.442695
    %v4205 = vpow.pop %v4204
    %v4206 = vmul.f32 %v4119, 1.442695
    %v4207 = vpow.pop %v4206
    %v4208 = vmul.f32 %v4160, 1.442695
    %v4209 = vpow.pop %v4208
    %v4210 = vsub.f32 %v4179, 1.0
    %v4211 = vsub.f32 %v4181, 1.0
    %v4212 = vsub.f32 %v4183, 1.0
    %v4213 = vsub.f32 %v4185, 1.0
    %v4214 = vsub.f32 %v4187, 1.0
    %v4215 = vsub.f32 %v4189, 1.0
    %v4216 = vsub.f32 %v4191, 1.0
    %v4217 = vsub.f32 %v4193, 1.0
    %v4218 = vsub.f32 %v4195, 1.0
    %v4219 = vsub.f32 %v4197, 1.0
    %v4220 = vsub.f32 %v4199, 1.0
    %v4221 = vsub.f32 %v4201, 1.0
    %v4222 = vsub.f32 %v4203, 1.0
    %v4223 = vsub.f32 %v4205, 1.0
    %v4224 = vsub.f32 %v4207, 1.0
    %v4225 = vsub.f32 %v4209, 1.0
    %v4226 = vmul.f32 %v4210, 1.6732632
    %v4227 = vmul.f32 %v4211, 1.6732632
    %v4228 = vmul.f32 %v4212, 1.6732632
    %v4229 = vmul.f32 %v4213, 1.6732632
    %v4230 = vmul.f32 %v4214, 1.6732632
    %v4231 = vmul.f32 %v4215, 1.6732632
    %v4232 = vmul.f32 %v4216, 1.6732632
    %v4233 = vmul.f32 %v4217, 1.6732632
    %v4234 = vmul.f32 %v4218, 1.6732632
    %v4235 = vmul.f32 %v4219, 1.6732632
    %v4236 = vmul.f32 %v4220, 1.6732632
    %v4237 = vmul.f32 %v4221, 1.6732632
    %v4238 = vmul.f32 %v4222, 1.6732632
    %v4239 = vmul.f32 %v4223, 1.6732632
    %v4240 = vmul.f32 %v4224, 1.6732632
    %v4241 = vmul.f32 %v4225, 1.6732632
    %v4242 = vsel %vm4162, %v4098, %v4226
    %v4243 = vsel %vm4163, %v4139, %v4227
    %v4244 = vsel %vm4164, %v4101, %v4228
    %v4245 = vsel %vm4165, %v4142, %v4229
    %v4246 = vsel %vm4166, %v4104, %v4230
    %v4247 = vsel %vm4167, %v4145, %v4231
    %v4248 = vsel %vm4168, %v4107, %v4232
    %v4249 = vsel %vm4169, %v4148, %v4233
    %v4250 = vsel %vm4170, %v4110, %v4234
    %v4251 = vsel %vm4171, %v4151, %v4235
    %v4252 = vsel %vm4172, %v4113, %v4236
    %v4253 = vsel %vm4173, %v4154, %v4237
    %v4254 = vsel %vm4174, %v4116, %v4238
    %v4255 = vsel %vm4175, %v4157, %v4239
    %v4256 = vsel %vm4176, %v4119, %v4240
    %v4257 = vsel %vm4177, %v4160, %v4241
    %v4258 = vmul.f32 %v4242, 1.050701
    %v4259 = vmul.f32 %v4243, 1.050701
    %v4260 = vmul.f32 %v4244, 1.050701
    %v4261 = vmul.f32 %v4245, 1.050701
    %v4262 = vmul.f32 %v4246, 1.050701
    %v4263 = vmul.f32 %v4247, 1.050701
    %v4264 = vmul.f32 %v4248, 1.050701
    %v4265 = vmul.f32 %v4249, 1.050701
    %v4266 = vmul.f32 %v4250, 1.050701
    %v4267 = vmul.f32 %v4251, 1.050701
    %v4268 = vmul.f32 %v4252, 1.050701
    %v4269 = vmul.f32 %v4253, 1.050701
    %v4270 = vmul.f32 %v4254, 1.050701
    %v4271 = vmul.f32 %v4255, 1.050701
    %v4272 = vmul.f32 %v4256, 1.050701
    %v4273 = vmul.f32 %v4257, 1.050701
    %4274 = vmatpush.msra.mxu0 0.0
    %4275 = vmatpush.msra.mxu0 0.0
    %4276 = vmatpush.msra.mxu0 0.0
    %4277 = vmatpush.msra.mxu0 0.0
    %4278 = vmatpush.msra.mxu0 0.0
    %4279 = vmatpush.msra.mxu0 0.0
    %4280 = vmatpush.msra.mxu0 0.0
    %4281 = vmatpush.msra.mxu0 0.0
    %4282 = vmatpush.msra.mxu0 %v4272
    %4283 = vmatpush.msra.mxu0 %v4270
    %4284 = vmatpush.msra.mxu0 %v4268
    %4285 = vmatpush.msra.mxu0 %v4266
    %4286 = vmatpush.msra.mxu0 %v4264
    %4287 = vmatpush.msra.mxu0 %v4262
    %4288 = vmatpush.msra.mxu0 %v4260
    %4289 = vmatpush.msra.mxu0 %v4258
    %4290 = vmatmul.f32.gmra.mxu0 %v1078
    %v4291 = vpop.f32.mrf.mxu0
    %v4292 = vadd.f32 %v581, %v4291
    %4293 = vmatmul.f32.gmra.mxu0 %v1081
    %v4294 = vpop.f32.mrf.mxu0
    %v4295 = vadd.f32 %v586, %v4294
    %4296 = vmatmul.f32.gmra.mxu0 %v1084
    %v4297 = vpop.f32.mrf.mxu0
    %v4298 = vadd.f32 %v591, %v4297
    %4299 = vmatmul.f32.gmra.mxu0 %v1087
    %v4300 = vpop.f32.mrf.mxu0
    %v4301 = vadd.f32 %v596, %v4300
    %4302 = vmatmul.f32.gmra.mxu0 %v1090
    %v4303 = vpop.f32.mrf.mxu0
    %v4304 = vadd.f32 %v601, %v4303
    %4305 = vmatmul.f32.gmra.mxu0 %v1093
    %v4306 = vpop.f32.mrf.mxu0
    %v4307 = vadd.f32 %v606, %v4306
    %4308 = vmatmul.f32.gmra.mxu0 %v1096
    %v4309 = vpop.f32.mrf.mxu0
    %v4310 = vadd.f32 %v611, %v4309
    %4311 = vmatmul.f32.gmra.mxu0 %v1099
    %v4312 = vpop.f32.mrf.mxu0
    %v4313 = vadd.f32 %v616, %v4312
    %4314 = vdwg.mxu0
    %4315 = vmatpush.msra.mxu0 0.0
    %4316 = vmatpush.msra.mxu0 0.0
    %4317 = vmatpush.msra.mxu0 0.0
    %4318 = vmatpush.msra.mxu0 0.0
    %4319 = vmatpush.msra.mxu0 0.0
    %4320 = vmatpush.msra.mxu0 0.0
    %4321 = vmatpush.msra.mxu0 0.0
    %4322 = vmatpush.msra.mxu0 0.0
    %4323 = vmatpush.msra.mxu0 %v4273
    %4324 = vmatpush.msra.mxu0 %v4271
    %4325 = vmatpush.msra.mxu0 %v4269
    %4326 = vmatpush.msra.mxu0 %v4267
    %4327 = vmatpush.msra.mxu0 %v4265
    %4328 = vmatpush.msra.mxu0 %v4263
    %4329 = vmatpush.msra.mxu0 %v4261
    %4330 = vmatpush.msra.mxu0 %v4259
    %4331 = vmatmul.f32.gmra.mxu0 %v1078
    %v4332 = vpop.f32.mrf.mxu0
    %v4333 = vadd.f32 %v581, %v4332
    %4334 = vmatmul.f32.gmra.mxu0 %v1081
    %v4335 = vpop.f32.mrf.mxu0
    %v4336 = vadd.f32 %v586, %v4335
    %4337 = vmatmul.f32.gmra.mxu0 %v1084
    %v4338 = vpop.f32.mrf.mxu0
    %v4339 = vadd.f32 %v591, %v4338
    %4340 = vmatmul.f32.gmra.mxu0 %v1087
    %v4341 = vpop.f32.mrf.mxu0
    %v4342 = vadd.f32 %v596, %v4341
    %4343 = vmatmul.f32.gmra.mxu0 %v1090
    %v4344 = vpop.f32.mrf.mxu0
    %v4345 = vadd.f32 %v601, %v4344
    %4346 = vmatmul.f32.gmra.mxu0 %v1093
    %v4347 = vpop.f32.mrf.mxu0
    %v4348 = vadd.f32 %v606, %v4347
    %4349 = vmatmul.f32.gmra.mxu0 %v1096
    %v4350 = vpop.f32.mrf.mxu0
    %v4351 = vadd.f32 %v611, %v4350
    %4352 = vmatmul.f32.gmra.mxu0 %v1099
    %v4353 = vpop.f32.mrf.mxu0
    %v4354 = vadd.f32 %v616, %v4353
    %4355 = vdwg.mxu0
    %vm4356 = vcmp.gt.f32.partialorder %v4292, 0.0
    %vm4357 = vcmp.gt.f32.partialorder %v4333, 0.0
    %vm4358 = vcmp.gt.f32.partialorder %v4295, 0.0
    %vm4359 = vcmp.gt.f32.partialorder %v4336, 0.0
    %vm4360 = vcmp.gt.f32.partialorder %v4298, 0.0
    %vm4361 = vcmp.gt.f32.partialorder %v4339, 0.0
    %vm4362 = vcmp.gt.f32.partialorder %v4301, 0.0
    %vm4363 = vcmp.gt.f32.partialorder %v4342, 0.0
    %vm4364 = vcmp.gt.f32.partialorder %v4304, 0.0
    %vm4365 = vcmp.gt.f32.partialorder %v4345, 0.0
    %vm4366 = vcmp.gt.f32.partialorder %v4307, 0.0
    %vm4367 = vcmp.gt.f32.partialorder %v4348, 0.0
    %vm4368 = vcmp.gt.f32.partialorder %v4310, 0.0
    %vm4369 = vcmp.gt.f32.partialorder %v4351, 0.0
    %vm4370 = vcmp.gt.f32.partialorder %v4313, 0.0
    %vm4371 = vcmp.gt.f32.partialorder %v4354, 0.0
    %v4372 = vmul.f32 %v4292, 1.442695
    %v4373 = vpow.pop %v4372
    %v4374 = vmul.f32 %v4333, 1.442695
    %v4375 = vpow.pop %v4374
    %v4376 = vmul.f32 %v4295, 1.442695
    %v4377 = vpow.pop %v4376
    %v4378 = vmul.f32 %v4336, 1.442695
    %v4379 = vpow.pop %v4378
    %v4380 = vmul.f32 %v4298, 1.442695
    %v4381 = vpow.pop %v4380
    %v4382 = vmul.f32 %v4339, 1.442695
    %v4383 = vpow.pop %v4382
    %v4384 = vmul.f32 %v4301, 1.442695
    %v4385 = vpow.pop %v4384
    %v4386 = vmul.f32 %v4342, 1.442695
    %v4387 = vpow.pop %v4386
    %v4388 = vmul.f32 %v4304, 1.442695
    %v4389 = vpow.pop %v4388
    %v4390 = vmul.f32 %v4345, 1.442695
    %v4391 = vpow.pop %v4390
    %v4392 = vmul.f32 %v4307, 1.442695
    %v4393 = vpow.pop %v4392
    %v4394 = vmul.f32 %v4348, 1.442695
    %v4395 = vpow.pop %v4394
    %v4396 = vmul.f32 %v4310, 1.442695
    %v4397 = vpow.pop %v4396
    %v4398 = vmul.f32 %v4351, 1.442695
    %v4399 = vpow.pop %v4398
    %v4400 = vmul.f32 %v4313, 1.442695
    %v4401 = vpow.pop %v4400
    %v4402 = vmul.f32 %v4354, 1.442695
    %v4403 = vpow.pop %v4402
    %v4404 = vsub.f32 %v4373, 1.0
    %v4405 = vsub.f32 %v4375, 1.0
    %v4406 = vsub.f32 %v4377, 1.0
    %v4407 = vsub.f32 %v4379, 1.0
    %v4408 = vsub.f32 %v4381, 1.0
    %v4409 = vsub.f32 %v4383, 1.0
    %v4410 = vsub.f32 %v4385, 1.0
    %v4411 = vsub.f32 %v4387, 1.0
    %v4412 = vsub.f32 %v4389, 1.0
    %v4413 = vsub.f32 %v4391, 1.0
    %v4414 = vsub.f32 %v4393, 1.0
    %v4415 = vsub.f32 %v4395, 1.0
    %v4416 = vsub.f32 %v4397, 1.0
    %v4417 = vsub.f32 %v4399, 1.0
    %v4418 = vsub.f32 %v4401, 1.0
    %v4419 = vsub.f32 %v4403, 1.0
    %v4420 = vmul.f32 %v4404, 1.6732632
    %v4421 = vmul.f32 %v4405, 1.6732632
    %v4422 = vmul.f32 %v4406, 1.6732632
    %v4423 = vmul.f32 %v4407, 1.6732632
    %v4424 = vmul.f32 %v4408, 1.6732632
    %v4425 = vmul.f32 %v4409, 1.6732632
    %v4426 = vmul.f32 %v4410, 1.6732632
    %v4427 = vmul.f32 %v4411, 1.6732632
    %v4428 = vmul.f32 %v4412, 1.6732632
    %v4429 = vmul.f32 %v4413, 1.6732632
    %v4430 = vmul.f32 %v4414, 1.6732632
    %v4431 = vmul.f32 %v4415, 1.6732632
    %v4432 = vmul.f32 %v4416, 1.6732632
    %v4433 = vmul.f32 %v4417, 1.6732632
    %v4434 = vmul.f32 %v4418, 1.6732632
    %v4435 = vmul.f32 %v4419, 1.6732632
    %v4436 = vsel %vm4356, %v4292, %v4420
    %v4437 = vsel %vm4357, %v4333, %v4421
    %v4438 = vsel %vm4358, %v4295, %v4422
    %v4439 = vsel %vm4359, %v4336, %v4423
    %v4440 = vsel %vm4360, %v4298, %v4424
    %v4441 = vsel %vm4361, %v4339, %v4425
    %v4442 = vsel %vm4362, %v4301, %v4426
    %v4443 = vsel %vm4363, %v4342, %v4427
    %v4444 = vsel %vm4364, %v4304, %v4428
    %v4445 = vsel %vm4365, %v4345, %v4429
    %v4446 = vsel %vm4366, %v4307, %v4430
    %v4447 = vsel %vm4367, %v4348, %v4431
    %v4448 = vsel %vm4368, %v4310, %v4432
    %v4449 = vsel %vm4369, %v4351, %v4433
    %v4450 = vsel %vm4370, %v4313, %v4434
    %v4451 = vsel %vm4371, %v4354, %v4435
    %v4452 = vmul.f32 %v4436, 1.050701
    %v4453 = vmul.f32 %v4437, 1.050701
    %v4454 = vmul.f32 %v4438, 1.050701
    %v4455 = vmul.f32 %v4439, 1.050701
    %v4456 = vmul.f32 %v4440, 1.050701
    %v4457 = vmul.f32 %v4441, 1.050701
    %v4458 = vmul.f32 %v4442, 1.050701
    %v4459 = vmul.f32 %v4443, 1.050701
    %v4460 = vmul.f32 %v4444, 1.050701
    %v4461 = vmul.f32 %v4445, 1.050701
    %v4462 = vmul.f32 %v4446, 1.050701
    %v4463 = vmul.f32 %v4447, 1.050701
    %v4464 = vmul.f32 %v4448, 1.050701
    %v4465 = vmul.f32 %v4449, 1.050701
    %v4466 = vmul.f32 %v4450, 1.050701
    %v4467 = vmul.f32 %v4451, 1.050701
    %4468 = vmatpush.msra.mxu0 0.0
    %4469 = vmatpush.msra.mxu0 0.0
    %4470 = vmatpush.msra.mxu0 0.0
    %4471 = vmatpush.msra.mxu0 0.0
    %4472 = vmatpush.msra.mxu0 0.0
    %4473 = vmatpush.msra.mxu0 0.0
    %4474 = vmatpush.msra.mxu0 0.0
    %4475 = vmatpush.msra.mxu0 0.0
    %4476 = vmatpush.msra.mxu0 %v4466
    %4477 = vmatpush.msra.mxu0 %v4464
    %4478 = vmatpush.msra.mxu0 %v4462
    %4479 = vmatpush.msra.mxu0 %v4460
    %4480 = vmatpush.msra.mxu0 %v4458
    %4481 = vmatpush.msra.mxu0 %v4456
    %4482 = vmatpush.msra.mxu0 %v4454
    %4483 = vmatpush.msra.mxu0 %v4452
    %4484 = vmatmul.f32.gmra.mxu0 %v1296
    %v4485 = vpop.f32.mrf.mxu0
    %v4486 = vadd.f32 %v622, %v4485
    %4487 = vdwg.mxu0
    %4488 = vmatpush.msra.mxu0 0.0
    %4489 = vmatpush.msra.mxu0 0.0
    %4490 = vmatpush.msra.mxu0 0.0
    %4491 = vmatpush.msra.mxu0 0.0
    %4492 = vmatpush.msra.mxu0 0.0
    %4493 = vmatpush.msra.mxu0 0.0
    %4494 = vmatpush.msra.mxu0 0.0
    %4495 = vmatpush.msra.mxu0 0.0
    %4496 = vmatpush.msra.mxu0 %v4467
    %4497 = vmatpush.msra.mxu0 %v4465
    %4498 = vmatpush.msra.mxu0 %v4463
    %4499 = vmatpush.msra.mxu0 %v4461
    %4500 = vmatpush.msra.mxu0 %v4459
    %4501 = vmatpush.msra.mxu0 %v4457
    %4502 = vmatpush.msra.mxu0 %v4455
    %4503 = vmatpush.msra.mxu0 %v4453
    %4504 = vmatmul.f32.gmra.mxu0 %v1296
    %v4505 = vpop.f32.mrf.mxu0
    %v4506 = vadd.f32 %v622, %v4505
    %4507 = vdwg.mxu0
    %v4508 = vand.u32 2147483647, %v4486
    %v4509 = vand.u32 2147483647, %v4506
    %v4510 = vmul.f32 %v628, %v4508
    %v4511 = vmul.f32 %v628, %v4509
    %v4512 = vadd.f32 %v3878, %v4510
    %v4513 = vadd.f32 %v3879, %v4511
    %4514 = vst [vmem:[#allocation2] sm:$0x7f] %v4512
    %4515 = vst [vmem:[#allocation2 + $0x8] sm:$0x7f] %v4513
    // Predicated region
    $region78: #{tpu_custom_call.1} parent=1 // pred_check
      _
    $region79: #{tpu_custom_call.1} parent=1 // pred_check_branch
      %4517 = sbr.rel (0) target = $region81
    $region80: #{tpu_custom_call.1} parent=1 // pred_region
      %4519 = vsyncadd [#allocation3], 0
      %s4521 = sshll.u32 [#allocation2], 4
      %s4522 = int_to_ptr.vmem [resolvable:$true] %s4521
      %s4523 = sshll.u32 %s19, 4
      %s4524 = int_to_ptr.hbm [resolvable:$true] %s4523
      %4526 = dma.vmem_to_hbm [thread:$0]  %s4522, 256, %s4524, [#allocation3]
    $region81: #{tpu_custom_call.1} parent=1 // pred_fallthru
      _
    // Predicated region
    $region82: #{tpu_custom_call.1} parent=1 // pred_check
      _
    $region83: #{tpu_custom_call.1} parent=1 // pred_check_branch
      %4528 = sbr.rel (0) target = $region85
    $region84: #{tpu_custom_call.1} parent=1 // pred_region
      %4530 = dma.done [#allocation3], 256
    $region85: #{tpu_custom_call.1} parent=1 // pred_fallthru
      _
    %4531 = vsyncpa [#allocation3], 1

</llo_original>
